<compile_context>
chip_gen: v7x
topology: tpu7x:2x2x1
jax: 0.10.0
libtpu: 0.0.40
codegen_flags: <defaults>
</compile_context>

<pallas_src>
import jax
import jax.numpy as jnp
from jax.experimental import pallas as pl
from jax.experimental.pallas import tpu as pltpu


def _vmem():
    return pl.BlockSpec(memory_space=pltpu.MemorySpace.VMEM)


def _round_up(x, m):
    return (x + m - 1) // m * m


# ----------------------------------------------------------------------------
# Single fused kernel: both GRUs (last hidden state only) + the projection head
# PyTorch GRU equations (gate order r, z, n):
#   gi = x W_ih^T + b_ih ; gh = h W_hh^T + b_hh
#   r = sigmoid(gi_r + gh_r) ; z = sigmoid(gi_z + gh_z)
#   n = tanh(gi_n + r * gh_n) ; h' = (1 - z) * n + z * h
# ----------------------------------------------------------------------------
def fused_vqa_kernel(qx_ref, ax_ref, img_ref, qh0_ref, ah0_ref,
                     q_wie_ref, q_wii_ref, q_wh_ref, q_bi_ref, q_bh_ref,
                     a_wi_ref, a_wh_ref, a_bi_ref, a_bh_ref,
                     wq_ref, bq_ref, wa_ref, ba_ref, wi_ref, bi_ref,
                     wqi_ref, bqi_ref, wqia_ref, bqia_ref, wc_ref, bc_ref,
                     out_ref):
    f32 = jnp.float32
    Bp, H = qh0_ref.shape
    img = img_ref[...]

    def run_gru(gi_all, extra, h0, w_h, b_h):
        # gi_all: (T*Bp, 3H) hoisted input projection, step t = rows [t*Bp,(t+1)*Bp)
        # extra : (1 or Bp, 3H) time-invariant additive term (input bias +
        #         optional image projection)
        T = gi_all.shape[0] // Bp
        h = h0
        for t in range(T):                       # static trip count -> fully unrolled
            gi = gi_all[t * Bp:(t + 1) * Bp, :] + extra
            gh = jnp.dot(h, w_h, preferred_element_type=f32) + b_h
            r = jax.nn.sigmoid(gi[:, :H] + gh[:, :H])
            z = jax.nn.sigmoid(gi[:, H:2 * H] + gh[:, H:2 * H])
            n = jnp.tanh(gi[:, 2 * H:] + r * gh[:, 2 * H:])
            h = (1.0 - z) * n + z * h
        return h

    # ---- question GRU (input = [word_emb | image]) ----
    # word-embedding part of the input projection for ALL steps in one matmul;
    # the image part is identical every step -> projected once and folded into
    # the per-step constant.
    gi_q = jnp.dot(qx_ref[...], q_wie_ref[...], preferred_element_type=f32)
    img_gi = jnp.dot(img, q_wii_ref[...], preferred_element_type=f32)
    q_last = run_gru(gi_q, img_gi + q_bi_ref[...], qh0_ref[...],
                     q_wh_ref[...], q_bh_ref[...])

    # ---- answer GRU ----
    gi_a = jnp.dot(ax_ref[...], a_wi_ref[...], preferred_element_type=f32)
    a_last = run_gru(gi_a, a_bi_ref[...], ah0_ref[...],
                     a_wh_ref[...], a_bh_ref[...])

    # ---- fused head: Q/A/I transforms, bilinear-style fusions, softmax ----
    Q = jnp.dot(q_last, wq_ref[...], preferred_element_type=f32) + bq_ref[...]
    A = jnp.dot(a_last, wa_ref[...], preferred_element_type=f32) + ba_ref[...]
    I = jnp.dot(img, wi_ref[...], preferred_element_type=f32) + bi_ref[...]
    QI = jnp.dot(Q * I, wqi_ref[...], preferred_element_type=f32) + bqi_ref[...]
    QIA = jnp.dot(QI * A, wqia_ref[...], preferred_element_type=f32) + bqia_ref[...]
    logits = jnp.dot(QIA, wc_ref[...], preferred_element_type=f32) + bc_ref[...]
    m = jnp.max(logits, axis=1, keepdims=True)
    e = jnp.exp(logits - m)
    out_ref[...] = e * pl.reciprocal(jnp.sum(e, axis=1, keepdims=True), approx=False)


def fused_forward_call(qx, ax, img_p, qh0, ah0, p, classify_dim):
    Bp = img_p.shape[0]
    args = (qx, ax, img_p, qh0, ah0,
            p["q_w_ie"], p["q_w_ii"], p["q_w_h"], p["q_b_i"], p["q_b_h"],
            p["a_w_i"], p["a_w_h"], p["a_b_i"], p["a_b_h"],
            p["wq"], p["bq"], p["wa"], p["ba"], p["wi"], p["bi"],
            p["wqi"], p["bqi"], p["wqia"], p["bqia"], p["wc"], p["bc"])
    return pl.pallas_call(
        fused_vqa_kernel,
        out_shape=jax.ShapeDtypeStruct((Bp, classify_dim), jnp.float32),
        in_specs=[_vmem()] * len(args),
        out_specs=_vmem(),
    )(*args)


# ----------------------------------------------------------------------------
# Parameter construction (deterministic; matches torch module shapes, with GRU
# weights stored merged/transposed: (D_in, 3H) and (H, 3H), gate order [r|z|n])
# ----------------------------------------------------------------------------
def init_params(key, vocab, rnn_input_dim, image_dim, rnn_emb_dim,
                trans_dim, classify_dim):
    keys = jax.random.split(key, 24)
    mk = lambda k, s: 0.1 * jax.random.normal(k, s, jnp.float32)
    H3 = 3 * rnn_emb_dim
    p = {}
    p["embed"] = mk(keys[0], (vocab, rnn_input_dim))
    # question GRU: input = [word_emb | image]; input weight stored pre-split
    # so the image half can be applied once per sequence instead of per step.
    p["q_w_ie"] = mk(keys[1], (rnn_input_dim, H3))
    p["q_w_ii"] = mk(keys[2], (image_dim, H3))
    p["q_w_h"] = mk(keys[3], (rnn_emb_dim, H3))
    p["q_b_i"] = mk(keys[4], (1, H3))
    p["q_b_h"] = mk(keys[5], (1, H3))
    # answer GRU
    p["a_w_i"] = mk(keys[6], (rnn_input_dim, H3))
    p["a_w_h"] = mk(keys[7], (rnn_emb_dim, H3))
    p["a_b_i"] = mk(keys[8], (1, H3))
    p["a_b_h"] = mk(keys[9], (1, H3))
    # head linears, stored (in, out) so the kernel computes x @ W + b
    def lin(kw, kb, din, dout):
        return mk(kw, (din, dout)), mk(kb, (1, dout))
    p["wq"], p["bq"] = lin(keys[10], keys[11], rnn_emb_dim, trans_dim)
    p["wa"], p["ba"] = lin(keys[12], keys[13], rnn_emb_dim, trans_dim)
    p["wi"], p["bi"] = lin(keys[14], keys[15], image_dim, trans_dim)
    p["wqi"], p["bqi"] = lin(keys[16], keys[17], trans_dim, trans_dim)
    p["wqia"], p["bqia"] = lin(keys[18], keys[19], trans_dim, trans_dim)
    p["wc"], p["bc"] = lin(keys[20], keys[21], trans_dim, classify_dim)
    return p


# ----------------------------------------------------------------------------
# Forward pass: embedding lookup + layout prep in JAX, everything else in one
# Pallas call.
# ----------------------------------------------------------------------------
@jax.jit
def forward(params, img, ques, ans, h0_key):
    emb = params["embed"]
    B = img.shape[0]
    Tq, Ta = ques.shape[1], ans.shape[1]
    E = emb.shape[1]
    H = params["q_w_h"].shape[0]
    C = params["wc"].shape[1]
    Bp = _round_up(B, 8)                     # full sublane tiles inside the kernel

    ques_e = jnp.take(emb, ques, axis=0)     # (B, Tq, E)
    ans_e = jnp.take(emb, ans, axis=0)       # (B, Ta, E)

    kq, ka = jax.random.split(h0_key)
    # original module samples torch.randn h0 every forward; deterministic here.
    qh0 = jax.random.normal(kq, (B, H), jnp.float32)
    ah0 = jax.random.normal(ka, (B, H), jnp.float32)

    def pad_rows(x):
        return jnp.pad(x, ((0, Bp - B),) + ((0, 0),) * (x.ndim - 1))

    ques_e, ans_e = pad_rows(ques_e), pad_rows(ans_e)
    img_p, qh0, ah0 = pad_rows(img), pad_rows(qh0), pad_rows(ah0)

    # time-major, batch-flattened for the kernel: (T*Bp, E)
    qx = jnp.transpose(ques_e, (1, 0, 2)).reshape(Tq * Bp, E)
    ax = jnp.transpose(ans_e, (1, 0, 2)).reshape(Ta * Bp, E)

    confi = fused_forward_call(qx, ax, img_p, qh0, ah0, params, C)
    return confi[:B]


if __name__ == "__main__":
    # small shapes consistent with the module
    B = 2
    Tq, Ta = 8, 6
    VOCAB = 50
    RNN_INPUT_DIM = 32
    IMAGE_DIM = 32
    RNN_EMB_DIM = 32        # == RNN_output_dim
    TRANS_DIM = 32
    CLASSIFY_DIM = 16

    root = jax.random.PRNGKey(0)
    k_params, k_img, k_ques, k_ans, k_h0 = jax.random.split(root, 5)

    params = init_params(k_params, VOCAB, RNN_INPUT_DIM, IMAGE_DIM,
                         RNN_EMB_DIM, TRANS_DIM, CLASSIFY_DIM)

    img = jax.random.normal(k_img, (B, IMAGE_DIM), jnp.float32)
    ques = jax.random.randint(k_ques, (B, Tq), 0, VOCAB, jnp.int32)
    ans = jax.random.randint(k_ans, (B, Ta), 0, VOCAB, jnp.int32)

    confi = forward(params, img, ques, ans, k_h0)
    confi = jax.block_until_ready(confi)

    assert confi.shape == (B, CLASSIFY_DIM)
    assert bool(jnp.all(jnp.isfinite(confi)))
    # rows of softmax sum to 1
    assert bool(jnp.allclose(jnp.sum(confi, axis=1), 1.0, atol=1e-5))
    print("KERNEL_OK")
</pallas_src>

<mosaic_0001>
module attributes {stable_mosaic.version = 11 : i64} {
  func.func @fused_vqa_kernel(%arg0: memref<64x32xf32, #tpu.memory_space<vmem>>, %arg1: memref<48x32xf32, #tpu.memory_space<vmem>>, %arg2: memref<8x32xf32, #tpu.memory_space<vmem>>, %arg3: memref<8x32xf32, #tpu.memory_space<vmem>>, %arg4: memref<8x32xf32, #tpu.memory_space<vmem>>, %arg5: memref<32x96xf32, #tpu.memory_space<vmem>>, %arg6: memref<32x96xf32, #tpu.memory_space<vmem>>, %arg7: memref<32x96xf32, #tpu.memory_space<vmem>>, %arg8: memref<1x96xf32, #tpu.memory_space<vmem>>, %arg9: memref<1x96xf32, #tpu.memory_space<vmem>>, %arg10: memref<32x96xf32, #tpu.memory_space<vmem>>, %arg11: memref<32x96xf32, #tpu.memory_space<vmem>>, %arg12: memref<1x96xf32, #tpu.memory_space<vmem>>, %arg13: memref<1x96xf32, #tpu.memory_space<vmem>>, %arg14: memref<32x32xf32, #tpu.memory_space<vmem>>, %arg15: memref<1x32xf32, #tpu.memory_space<vmem>>, %arg16: memref<32x32xf32, #tpu.memory_space<vmem>>, %arg17: memref<1x32xf32, #tpu.memory_space<vmem>>, %arg18: memref<32x32xf32, #tpu.memory_space<vmem>>, %arg19: memref<1x32xf32, #tpu.memory_space<vmem>>, %arg20: memref<32x32xf32, #tpu.memory_space<vmem>>, %arg21: memref<1x32xf32, #tpu.memory_space<vmem>>, %arg22: memref<32x32xf32, #tpu.memory_space<vmem>>, %arg23: memref<1x32xf32, #tpu.memory_space<vmem>>, %arg24: memref<32x16xf32, #tpu.memory_space<vmem>>, %arg25: memref<1x16xf32, #tpu.memory_space<vmem>>, %arg26: memref<8x16xf32, #tpu.memory_space<vmem>>) attributes {dimension_semantics = [], scalar_prefetch = 0 : i64, scratch_operands = 0 : i64, tpu.core_type = #tpu.core_type<tc>} {
    %c0 = arith.constant 0 : index
    %c0_0 = arith.constant 0 : index
    %0 = vector.load %arg2[%c0, %c0_0] : memref<8x32xf32, #tpu.memory_space<vmem>>, vector<8x32xf32>
    %c0_1 = arith.constant 0 : index
    %c0_2 = arith.constant 0 : index
    %1 = vector.load %arg0[%c0_1, %c0_2] : memref<64x32xf32, #tpu.memory_space<vmem>>, vector<64x32xf32>
    %c0_3 = arith.constant 0 : index
    %c0_4 = arith.constant 0 : index
    %2 = vector.load %arg5[%c0_3, %c0_4] : memref<32x96xf32, #tpu.memory_space<vmem>>, vector<32x96xf32>
    %cst = arith.constant dense<0.000000e+00> : vector<64x96xf32>
    %3 = tpu.matmul %1, %2, %cst {dimension_numbers = #tpu.dot_dimension_numbers<[1], [0], [0], [1], [0, 0, 1, 1], [], []>} : vector<64x32xf32>, vector<32x96xf32>, vector<64x96xf32> -> vector<64x96xf32>
    %c0_5 = arith.constant 0 : index
    %c0_6 = arith.constant 0 : index
    %4 = vector.load %arg6[%c0_5, %c0_6] : memref<32x96xf32, #tpu.memory_space<vmem>>, vector<32x96xf32>
    %cst_7 = arith.constant dense<0.000000e+00> : vector<8x96xf32>
    %5 = tpu.matmul %0, %4, %cst_7 {dimension_numbers = #tpu.dot_dimension_numbers<[1], [0], [0], [1], [0, 0, 1, 1], [], []>} : vector<8x32xf32>, vector<32x96xf32>, vector<8x96xf32> -> vector<8x96xf32>
    %c0_8 = arith.constant 0 : index
    %c0_9 = arith.constant 0 : index
    %6 = vector.load %arg8[%c0_8, %c0_9] : memref<1x96xf32, #tpu.memory_space<vmem>>, vector<1x96xf32>
    %7 = vector.broadcast %6 : vector<1x96xf32> to vector<8x96xf32>
    %8 = arith.addf %5, %7 : vector<8x96xf32>
    %c0_10 = arith.constant 0 : index
    %c0_11 = arith.constant 0 : index
    %9 = vector.load %arg3[%c0_10, %c0_11] : memref<8x32xf32, #tpu.memory_space<vmem>>, vector<8x32xf32>
    %c0_12 = arith.constant 0 : index
    %c0_13 = arith.constant 0 : index
    %10 = vector.load %arg7[%c0_12, %c0_13] : memref<32x96xf32, #tpu.memory_space<vmem>>, vector<32x96xf32>
    %c0_14 = arith.constant 0 : index
    %c0_15 = arith.constant 0 : index
    %11 = vector.load %arg9[%c0_14, %c0_15] : memref<1x96xf32, #tpu.memory_space<vmem>>, vector<1x96xf32>
    %12 = vector.extract_strided_slice %3 {offsets = [0, 0], sizes = [8, 96], strides = [1, 1]} : vector<64x96xf32> to vector<8x96xf32>
    %13 = arith.addf %12, %8 : vector<8x96xf32>
    %cst_16 = arith.constant dense<0.000000e+00> : vector<8x96xf32>
    %14 = tpu.matmul %9, %10, %cst_16 {dimension_numbers = #tpu.dot_dimension_numbers<[1], [0], [0], [1], [0, 0, 1, 1], [], []>} : vector<8x32xf32>, vector<32x96xf32>, vector<8x96xf32> -> vector<8x96xf32>
    %15 = vector.broadcast %11 : vector<1x96xf32> to vector<8x96xf32>
    %16 = arith.addf %14, %15 : vector<8x96xf32>
    %17 = vector.extract_strided_slice %13 {offsets = [0, 0], sizes = [8, 32], strides = [1, 1]} : vector<8x96xf32> to vector<8x32xf32>
    %18 = vector.extract_strided_slice %16 {offsets = [0, 0], sizes = [8, 32], strides = [1, 1]} : vector<8x96xf32> to vector<8x32xf32>
    %19 = arith.addf %17, %18 : vector<8x32xf32>
    %20 = arith.negf %19 : vector<8x32xf32>
    %21 = math.exp %20 : vector<8x32xf32>
    %cst_17 = arith.constant 1.000000e+00 : f32
    %22 = vector.broadcast %cst_17 : f32 to vector<8x32xf32>
    %23 = arith.addf %22, %21 : vector<8x32xf32>
    %24 = arith.divf %22, %23 : vector<8x32xf32>
    %25 = vector.extract_strided_slice %13 {offsets = [0, 32], sizes = [8, 32], strides = [1, 1]} : vector<8x96xf32> to vector<8x32xf32>
    %26 = vector.extract_strided_slice %16 {offsets = [0, 32], sizes = [8, 32], strides = [1, 1]} : vector<8x96xf32> to vector<8x32xf32>
    %27 = arith.addf %25, %26 : vector<8x32xf32>
    %28 = arith.negf %27 : vector<8x32xf32>
    %29 = math.exp %28 : vector<8x32xf32>
    %cst_18 = arith.constant 1.000000e+00 : f32
    %30 = vector.broadcast %cst_18 : f32 to vector<8x32xf32>
    %31 = arith.addf %30, %29 : vector<8x32xf32>
    %32 = arith.divf %30, %31 : vector<8x32xf32>
    %33 = vector.extract_strided_slice %13 {offsets = [0, 64], sizes = [8, 32], strides = [1, 1]} : vector<8x96xf32> to vector<8x32xf32>
    %34 = vector.extract_strided_slice %16 {offsets = [0, 64], sizes = [8, 32], strides = [1, 1]} : vector<8x96xf32> to vector<8x32xf32>
    %35 = arith.mulf %24, %34 : vector<8x32xf32>
    %36 = arith.addf %33, %35 : vector<8x32xf32>
    %37 = math.tanh %36 : vector<8x32xf32>
    %cst_19 = arith.constant 1.000000e+00 : f32
    %38 = vector.broadcast %cst_19 : f32 to vector<8x32xf32>
    %39 = arith.subf %38, %32 : vector<8x32xf32>
    %40 = arith.mulf %39, %37 : vector<8x32xf32>
    %41 = arith.mulf %32, %9 : vector<8x32xf32>
    %42 = arith.addf %40, %41 : vector<8x32xf32>
    %43 = vector.extract_strided_slice %3 {offsets = [8, 0], sizes = [8, 96], strides = [1, 1]} : vector<64x96xf32> to vector<8x96xf32>
    %44 = arith.addf %43, %8 : vector<8x96xf32>
    %cst_20 = arith.constant dense<0.000000e+00> : vector<8x96xf32>
    %45 = tpu.matmul %42, %10, %cst_20 {dimension_numbers = #tpu.dot_dimension_numbers<[1], [0], [0], [1], [0, 0, 1, 1], [], []>} : vector<8x32xf32>, vector<32x96xf32>, vector<8x96xf32> -> vector<8x96xf32>
    %46 = vector.broadcast %11 : vector<1x96xf32> to vector<8x96xf32>
    %47 = arith.addf %45, %46 : vector<8x96xf32>
    %48 = vector.extract_strided_slice %44 {offsets = [0, 0], sizes = [8, 32], strides = [1, 1]} : vector<8x96xf32> to vector<8x32xf32>
    %49 = vector.extract_strided_slice %47 {offsets = [0, 0], sizes = [8, 32], strides = [1, 1]} : vector<8x96xf32> to vector<8x32xf32>
    %50 = arith.addf %48, %49 : vector<8x32xf32>
    %51 = arith.negf %50 : vector<8x32xf32>
    %52 = math.exp %51 : vector<8x32xf32>
    %cst_21 = arith.constant 1.000000e+00 : f32
    %53 = vector.broadcast %cst_21 : f32 to vector<8x32xf32>
    %54 = arith.addf %53, %52 : vector<8x32xf32>
    %55 = arith.divf %53, %54 : vector<8x32xf32>
    %56 = vector.extract_strided_slice %44 {offsets = [0, 32], sizes = [8, 32], strides = [1, 1]} : vector<8x96xf32> to vector<8x32xf32>
    %57 = vector.extract_strided_slice %47 {offsets = [0, 32], sizes = [8, 32], strides = [1, 1]} : vector<8x96xf32> to vector<8x32xf32>
    %58 = arith.addf %56, %57 : vector<8x32xf32>
    %59 = arith.negf %58 : vector<8x32xf32>
    %60 = math.exp %59 : vector<8x32xf32>
    %cst_22 = arith.constant 1.000000e+00 : f32
    %61 = vector.broadcast %cst_22 : f32 to vector<8x32xf32>
    %62 = arith.addf %61, %60 : vector<8x32xf32>
    %63 = arith.divf %61, %62 : vector<8x32xf32>
    %64 = vector.extract_strided_slice %44 {offsets = [0, 64], sizes = [8, 32], strides = [1, 1]} : vector<8x96xf32> to vector<8x32xf32>
    %65 = vector.extract_strided_slice %47 {offsets = [0, 64], sizes = [8, 32], strides = [1, 1]} : vector<8x96xf32> to vector<8x32xf32>
    %66 = arith.mulf %55, %65 : vector<8x32xf32>
    %67 = arith.addf %64, %66 : vector<8x32xf32>
    %68 = math.tanh %67 : vector<8x32xf32>
    %cst_23 = arith.constant 1.000000e+00 : f32
    %69 = vector.broadcast %cst_23 : f32 to vector<8x32xf32>
    %70 = arith.subf %69, %63 : vector<8x32xf32>
    %71 = arith.mulf %70, %68 : vector<8x32xf32>
    %72 = arith.mulf %63, %42 : vector<8x32xf32>
    %73 = arith.addf %71, %72 : vector<8x32xf32>
    %74 = vector.extract_strided_slice %3 {offsets = [16, 0], sizes = [8, 96], strides = [1, 1]} : vector<64x96xf32> to vector<8x96xf32>
    %75 = arith.addf %74, %8 : vector<8x96xf32>
    %cst_24 = arith.constant dense<0.000000e+00> : vector<8x96xf32>
    %76 = tpu.matmul %73, %10, %cst_24 {dimension_numbers = #tpu.dot_dimension_numbers<[1], [0], [0], [1], [0, 0, 1, 1], [], []>} : vector<8x32xf32>, vector<32x96xf32>, vector<8x96xf32> -> vector<8x96xf32>
    %77 = vector.broadcast %11 : vector<1x96xf32> to vector<8x96xf32>
    %78 = arith.addf %76, %77 : vector<8x96xf32>
    %79 = vector.extract_strided_slice %75 {offsets = [0, 0], sizes = [8, 32], strides = [1, 1]} : vector<8x96xf32> to vector<8x32xf32>
    %80 = vector.extract_strided_slice %78 {offsets = [0, 0], sizes = [8, 32], strides = [1, 1]} : vector<8x96xf32> to vector<8x32xf32>
    %81 = arith.addf %79, %80 : vector<8x32xf32>
    %82 = arith.negf %81 : vector<8x32xf32>
    %83 = math.exp %82 : vector<8x32xf32>
    %cst_25 = arith.constant 1.000000e+00 : f32
    %84 = vector.broadcast %cst_25 : f32 to vector<8x32xf32>
    %85 = arith.addf %84, %83 : vector<8x32xf32>
    %86 = arith.divf %84, %85 : vector<8x32xf32>
    %87 = vector.extract_strided_slice %75 {offsets = [0, 32], sizes = [8, 32], strides = [1, 1]} : vector<8x96xf32> to vector<8x32xf32>
    %88 = vector.extract_strided_slice %78 {offsets = [0, 32], sizes = [8, 32], strides = [1, 1]} : vector<8x96xf32> to vector<8x32xf32>
    %89 = arith.addf %87, %88 : vector<8x32xf32>
    %90 = arith.negf %89 : vector<8x32xf32>
    %91 = math.exp %90 : vector<8x32xf32>
    %cst_26 = arith.constant 1.000000e+00 : f32
    %92 = vector.broadcast %cst_26 : f32 to vector<8x32xf32>
    %93 = arith.addf %92, %91 : vector<8x32xf32>
    %94 = arith.divf %92, %93 : vector<8x32xf32>
    %95 = vector.extract_strided_slice %75 {offsets = [0, 64], sizes = [8, 32], strides = [1, 1]} : vector<8x96xf32> to vector<8x32xf32>
    %96 = vector.extract_strided_slice %78 {offsets = [0, 64], sizes = [8, 32], strides = [1, 1]} : vector<8x96xf32> to vector<8x32xf32>
    %97 = arith.mulf %86, %96 : vector<8x32xf32>
    %98 = arith.addf %95, %97 : vector<8x32xf32>
    %99 = math.tanh %98 : vector<8x32xf32>
    %cst_27 = arith.constant 1.000000e+00 : f32
    %100 = vector.broadcast %cst_27 : f32 to vector<8x32xf32>
    %101 = arith.subf %100, %94 : vector<8x32xf32>
    %102 = arith.mulf %101, %99 : vector<8x32xf32>
    %103 = arith.mulf %94, %73 : vector<8x32xf32>
    %104 = arith.addf %102, %103 : vector<8x32xf32>
    %105 = vector.extract_strided_slice %3 {offsets = [24, 0], sizes = [8, 96], strides = [1, 1]} : vector<64x96xf32> to vector<8x96xf32>
    %106 = arith.addf %105, %8 : vector<8x96xf32>
    %cst_28 = arith.constant dense<0.000000e+00> : vector<8x96xf32>
    %107 = tpu.matmul %104, %10, %cst_28 {dimension_numbers = #tpu.dot_dimension_numbers<[1], [0], [0], [1], [0, 0, 1, 1], [], []>} : vector<8x32xf32>, vector<32x96xf32>, vector<8x96xf32> -> vector<8x96xf32>
    %108 = vector.broadcast %11 : vector<1x96xf32> to vector<8x96xf32>
    %109 = arith.addf %107, %108 : vector<8x96xf32>
    %110 = vector.extract_strided_slice %106 {offsets = [0, 0], sizes = [8, 32], strides = [1, 1]} : vector<8x96xf32> to vector<8x32xf32>
    %111 = vector.extract_strided_slice %109 {offsets = [0, 0], sizes = [8, 32], strides = [1, 1]} : vector<8x96xf32> to vector<8x32xf32>
    %112 = arith.addf %110, %111 : vector<8x32xf32>
    %113 = arith.negf %112 : vector<8x32xf32>
    %114 = math.exp %113 : vector<8x32xf32>
    %cst_29 = arith.constant 1.000000e+00 : f32
    %115 = vector.broadcast %cst_29 : f32 to vector<8x32xf32>
    %116 = arith.addf %115, %114 : vector<8x32xf32>
    %117 = arith.divf %115, %116 : vector<8x32xf32>
    %118 = vector.extract_strided_slice %106 {offsets = [0, 32], sizes = [8, 32], strides = [1, 1]} : vector<8x96xf32> to vector<8x32xf32>
    %119 = vector.extract_strided_slice %109 {offsets = [0, 32], sizes = [8, 32], strides = [1, 1]} : vector<8x96xf32> to vector<8x32xf32>
    %120 = arith.addf %118, %119 : vector<8x32xf32>
    %121 = arith.negf %120 : vector<8x32xf32>
    %122 = math.exp %121 : vector<8x32xf32>
    %cst_30 = arith.constant 1.000000e+00 : f32
    %123 = vector.broadcast %cst_30 : f32 to vector<8x32xf32>
    %124 = arith.addf %123, %122 : vector<8x32xf32>
    %125 = arith.divf %123, %124 : vector<8x32xf32>
    %126 = vector.extract_strided_slice %106 {offsets = [0, 64], sizes = [8, 32], strides = [1, 1]} : vector<8x96xf32> to vector<8x32xf32>
    %127 = vector.extract_strided_slice %109 {offsets = [0, 64], sizes = [8, 32], strides = [1, 1]} : vector<8x96xf32> to vector<8x32xf32>
    %128 = arith.mulf %117, %127 : vector<8x32xf32>
    %129 = arith.addf %126, %128 : vector<8x32xf32>
    %130 = math.tanh %129 : vector<8x32xf32>
    %cst_31 = arith.constant 1.000000e+00 : f32
    %131 = vector.broadcast %cst_31 : f32 to vector<8x32xf32>
    %132 = arith.subf %131, %125 : vector<8x32xf32>
    %133 = arith.mulf %132, %130 : vector<8x32xf32>
    %134 = arith.mulf %125, %104 : vector<8x32xf32>
    %135 = arith.addf %133, %134 : vector<8x32xf32>
    %136 = vector.extract_strided_slice %3 {offsets = [32, 0], sizes = [8, 96], strides = [1, 1]} : vector<64x96xf32> to vector<8x96xf32>
    %137 = arith.addf %136, %8 : vector<8x96xf32>
    %cst_32 = arith.constant dense<0.000000e+00> : vector<8x96xf32>
    %138 = tpu.matmul %135, %10, %cst_32 {dimension_numbers = #tpu.dot_dimension_numbers<[1], [0], [0], [1], [0, 0, 1, 1], [], []>} : vector<8x32xf32>, vector<32x96xf32>, vector<8x96xf32> -> vector<8x96xf32>
    %139 = vector.broadcast %11 : vector<1x96xf32> to vector<8x96xf32>
    %140 = arith.addf %138, %139 : vector<8x96xf32>
    %141 = vector.extract_strided_slice %137 {offsets = [0, 0], sizes = [8, 32], strides = [1, 1]} : vector<8x96xf32> to vector<8x32xf32>
    %142 = vector.extract_strided_slice %140 {offsets = [0, 0], sizes = [8, 32], strides = [1, 1]} : vector<8x96xf32> to vector<8x32xf32>
    %143 = arith.addf %141, %142 : vector<8x32xf32>
    %144 = arith.negf %143 : vector<8x32xf32>
    %145 = math.exp %144 : vector<8x32xf32>
    %cst_33 = arith.constant 1.000000e+00 : f32
    %146 = vector.broadcast %cst_33 : f32 to vector<8x32xf32>
    %147 = arith.addf %146, %145 : vector<8x32xf32>
    %148 = arith.divf %146, %147 : vector<8x32xf32>
    %149 = vector.extract_strided_slice %137 {offsets = [0, 32], sizes = [8, 32], strides = [1, 1]} : vector<8x96xf32> to vector<8x32xf32>
    %150 = vector.extract_strided_slice %140 {offsets = [0, 32], sizes = [8, 32], strides = [1, 1]} : vector<8x96xf32> to vector<8x32xf32>
    %151 = arith.addf %149, %150 : vector<8x32xf32>
    %152 = arith.negf %151 : vector<8x32xf32>
    %153 = math.exp %152 : vector<8x32xf32>
    %cst_34 = arith.constant 1.000000e+00 : f32
    %154 = vector.broadcast %cst_34 : f32 to vector<8x32xf32>
    %155 = arith.addf %154, %153 : vector<8x32xf32>
    %156 = arith.divf %154, %155 : vector<8x32xf32>
    %157 = vector.extract_strided_slice %137 {offsets = [0, 64], sizes = [8, 32], strides = [1, 1]} : vector<8x96xf32> to vector<8x32xf32>
    %158 = vector.extract_strided_slice %140 {offsets = [0, 64], sizes = [8, 32], strides = [1, 1]} : vector<8x96xf32> to vector<8x32xf32>
    %159 = arith.mulf %148, %158 : vector<8x32xf32>
    %160 = arith.addf %157, %159 : vector<8x32xf32>
    %161 = math.tanh %160 : vector<8x32xf32>
    %cst_35 = arith.constant 1.000000e+00 : f32
    %162 = vector.broadcast %cst_35 : f32 to vector<8x32xf32>
    %163 = arith.subf %162, %156 : vector<8x32xf32>
    %164 = arith.mulf %163, %161 : vector<8x32xf32>
    %165 = arith.mulf %156, %135 : vector<8x32xf32>
    %166 = arith.addf %164, %165 : vector<8x32xf32>
    %167 = vector.extract_strided_slice %3 {offsets = [40, 0], sizes = [8, 96], strides = [1, 1]} : vector<64x96xf32> to vector<8x96xf32>
    %168 = arith.addf %167, %8 : vector<8x96xf32>
    %cst_36 = arith.constant dense<0.000000e+00> : vector<8x96xf32>
    %169 = tpu.matmul %166, %10, %cst_36 {dimension_numbers = #tpu.dot_dimension_numbers<[1], [0], [0], [1], [0, 0, 1, 1], [], []>} : vector<8x32xf32>, vector<32x96xf32>, vector<8x96xf32> -> vector<8x96xf32>
    %170 = vector.broadcast %11 : vector<1x96xf32> to vector<8x96xf32>
    %171 = arith.addf %169, %170 : vector<8x96xf32>
    %172 = vector.extract_strided_slice %168 {offsets = [0, 0], sizes = [8, 32], strides = [1, 1]} : vector<8x96xf32> to vector<8x32xf32>
    %173 = vector.extract_strided_slice %171 {offsets = [0, 0], sizes = [8, 32], strides = [1, 1]} : vector<8x96xf32> to vector<8x32xf32>
    %174 = arith.addf %172, %173 : vector<8x32xf32>
    %175 = arith.negf %174 : vector<8x32xf32>
    %176 = math.exp %175 : vector<8x32xf32>
    %cst_37 = arith.constant 1.000000e+00 : f32
    %177 = vector.broadcast %cst_37 : f32 to vector<8x32xf32>
    %178 = arith.addf %177, %176 : vector<8x32xf32>
    %179 = arith.divf %177, %178 : vector<8x32xf32>
    %180 = vector.extract_strided_slice %168 {offsets = [0, 32], sizes = [8, 32], strides = [1, 1]} : vector<8x96xf32> to vector<8x32xf32>
    %181 = vector.extract_strided_slice %171 {offsets = [0, 32], sizes = [8, 32], strides = [1, 1]} : vector<8x96xf32> to vector<8x32xf32>
    %182 = arith.addf %180, %181 : vector<8x32xf32>
    %183 = arith.negf %182 : vector<8x32xf32>
    %184 = math.exp %183 : vector<8x32xf32>
    %cst_38 = arith.constant 1.000000e+00 : f32
    %185 = vector.broadcast %cst_38 : f32 to vector<8x32xf32>
    %186 = arith.addf %185, %184 : vector<8x32xf32>
    %187 = arith.divf %185, %186 : vector<8x32xf32>
    %188 = vector.extract_strided_slice %168 {offsets = [0, 64], sizes = [8, 32], strides = [1, 1]} : vector<8x96xf32> to vector<8x32xf32>
    %189 = vector.extract_strided_slice %171 {offsets = [0, 64], sizes = [8, 32], strides = [1, 1]} : vector<8x96xf32> to vector<8x32xf32>
    %190 = arith.mulf %179, %189 : vector<8x32xf32>
    %191 = arith.addf %188, %190 : vector<8x32xf32>
    %192 = math.tanh %191 : vector<8x32xf32>
    %cst_39 = arith.constant 1.000000e+00 : f32
    %193 = vector.broadcast %cst_39 : f32 to vector<8x32xf32>
    %194 = arith.subf %193, %187 : vector<8x32xf32>
    %195 = arith.mulf %194, %192 : vector<8x32xf32>
    %196 = arith.mulf %187, %166 : vector<8x32xf32>
    %197 = arith.addf %195, %196 : vector<8x32xf32>
    %198 = vector.extract_strided_slice %3 {offsets = [48, 0], sizes = [8, 96], strides = [1, 1]} : vector<64x96xf32> to vector<8x96xf32>
    %199 = arith.addf %198, %8 : vector<8x96xf32>
    %cst_40 = arith.constant dense<0.000000e+00> : vector<8x96xf32>
    %200 = tpu.matmul %197, %10, %cst_40 {dimension_numbers = #tpu.dot_dimension_numbers<[1], [0], [0], [1], [0, 0, 1, 1], [], []>} : vector<8x32xf32>, vector<32x96xf32>, vector<8x96xf32> -> vector<8x96xf32>
    %201 = vector.broadcast %11 : vector<1x96xf32> to vector<8x96xf32>
    %202 = arith.addf %200, %201 : vector<8x96xf32>
    %203 = vector.extract_strided_slice %199 {offsets = [0, 0], sizes = [8, 32], strides = [1, 1]} : vector<8x96xf32> to vector<8x32xf32>
    %204 = vector.extract_strided_slice %202 {offsets = [0, 0], sizes = [8, 32], strides = [1, 1]} : vector<8x96xf32> to vector<8x32xf32>
    %205 = arith.addf %203, %204 : vector<8x32xf32>
    %206 = arith.negf %205 : vector<8x32xf32>
    %207 = math.exp %206 : vector<8x32xf32>
    %cst_41 = arith.constant 1.000000e+00 : f32
    %208 = vector.broadcast %cst_41 : f32 to vector<8x32xf32>
    %209 = arith.addf %208, %207 : vector<8x32xf32>
    %210 = arith.divf %208, %209 : vector<8x32xf32>
    %211 = vector.extract_strided_slice %199 {offsets = [0, 32], sizes = [8, 32], strides = [1, 1]} : vector<8x96xf32> to vector<8x32xf32>
    %212 = vector.extract_strided_slice %202 {offsets = [0, 32], sizes = [8, 32], strides = [1, 1]} : vector<8x96xf32> to vector<8x32xf32>
    %213 = arith.addf %211, %212 : vector<8x32xf32>
    %214 = arith.negf %213 : vector<8x32xf32>
    %215 = math.exp %214 : vector<8x32xf32>
    %cst_42 = arith.constant 1.000000e+00 : f32
    %216 = vector.broadcast %cst_42 : f32 to vector<8x32xf32>
    %217 = arith.addf %216, %215 : vector<8x32xf32>
    %218 = arith.divf %216, %217 : vector<8x32xf32>
    %219 = vector.extract_strided_slice %199 {offsets = [0, 64], sizes = [8, 32], strides = [1, 1]} : vector<8x96xf32> to vector<8x32xf32>
    %220 = vector.extract_strided_slice %202 {offsets = [0, 64], sizes = [8, 32], strides = [1, 1]} : vector<8x96xf32> to vector<8x32xf32>
    %221 = arith.mulf %210, %220 : vector<8x32xf32>
    %222 = arith.addf %219, %221 : vector<8x32xf32>
    %223 = math.tanh %222 : vector<8x32xf32>
    %cst_43 = arith.constant 1.000000e+00 : f32
    %224 = vector.broadcast %cst_43 : f32 to vector<8x32xf32>
    %225 = arith.subf %224, %218 : vector<8x32xf32>
    %226 = arith.mulf %225, %223 : vector<8x32xf32>
    %227 = arith.mulf %218, %197 : vector<8x32xf32>
    %228 = arith.addf %226, %227 : vector<8x32xf32>
    %229 = vector.extract_strided_slice %3 {offsets = [56, 0], sizes = [8, 96], strides = [1, 1]} : vector<64x96xf32> to vector<8x96xf32>
    %230 = arith.addf %229, %8 : vector<8x96xf32>
    %cst_44 = arith.constant dense<0.000000e+00> : vector<8x96xf32>
    %231 = tpu.matmul %228, %10, %cst_44 {dimension_numbers = #tpu.dot_dimension_numbers<[1], [0], [0], [1], [0, 0, 1, 1], [], []>} : vector<8x32xf32>, vector<32x96xf32>, vector<8x96xf32> -> vector<8x96xf32>
    %232 = vector.broadcast %11 : vector<1x96xf32> to vector<8x96xf32>
    %233 = arith.addf %231, %232 : vector<8x96xf32>
    %234 = vector.extract_strided_slice %230 {offsets = [0, 0], sizes = [8, 32], strides = [1, 1]} : vector<8x96xf32> to vector<8x32xf32>
    %235 = vector.extract_strided_slice %233 {offsets = [0, 0], sizes = [8, 32], strides = [1, 1]} : vector<8x96xf32> to vector<8x32xf32>
    %236 = arith.addf %234, %235 : vector<8x32xf32>
    %237 = arith.negf %236 : vector<8x32xf32>
    %238 = math.exp %237 : vector<8x32xf32>
    %cst_45 = arith.constant 1.000000e+00 : f32
    %239 = vector.broadcast %cst_45 : f32 to vector<8x32xf32>
    %240 = arith.addf %239, %238 : vector<8x32xf32>
    %241 = arith.divf %239, %240 : vector<8x32xf32>
    %242 = vector.extract_strided_slice %230 {offsets = [0, 32], sizes = [8, 32], strides = [1, 1]} : vector<8x96xf32> to vector<8x32xf32>
    %243 = vector.extract_strided_slice %233 {offsets = [0, 32], sizes = [8, 32], strides = [1, 1]} : vector<8x96xf32> to vector<8x32xf32>
    %244 = arith.addf %242, %243 : vector<8x32xf32>
    %245 = arith.negf %244 : vector<8x32xf32>
    %246 = math.exp %245 : vector<8x32xf32>
    %cst_46 = arith.constant 1.000000e+00 : f32
    %247 = vector.broadcast %cst_46 : f32 to vector<8x32xf32>
    %248 = arith.addf %247, %246 : vector<8x32xf32>
    %249 = arith.divf %247, %248 : vector<8x32xf32>
    %250 = vector.extract_strided_slice %230 {offsets = [0, 64], sizes = [8, 32], strides = [1, 1]} : vector<8x96xf32> to vector<8x32xf32>
    %251 = vector.extract_strided_slice %233 {offsets = [0, 64], sizes = [8, 32], strides = [1, 1]} : vector<8x96xf32> to vector<8x32xf32>
    %252 = arith.mulf %241, %251 : vector<8x32xf32>
    %253 = arith.addf %250, %252 : vector<8x32xf32>
    %254 = math.tanh %253 : vector<8x32xf32>
    %cst_47 = arith.constant 1.000000e+00 : f32
    %255 = vector.broadcast %cst_47 : f32 to vector<8x32xf32>
    %256 = arith.subf %255, %249 : vector<8x32xf32>
    %257 = arith.mulf %256, %254 : vector<8x32xf32>
    %258 = arith.mulf %249, %228 : vector<8x32xf32>
    %259 = arith.addf %257, %258 : vector<8x32xf32>
    %c0_48 = arith.constant 0 : index
    %c0_49 = arith.constant 0 : index
    %260 = vector.load %arg1[%c0_48, %c0_49] : memref<48x32xf32, #tpu.memory_space<vmem>>, vector<48x32xf32>
    %c0_50 = arith.constant 0 : index
    %c0_51 = arith.constant 0 : index
    %261 = vector.load %arg10[%c0_50, %c0_51] : memref<32x96xf32, #tpu.memory_space<vmem>>, vector<32x96xf32>
    %cst_52 = arith.constant dense<0.000000e+00> : vector<48x96xf32>
    %262 = tpu.matmul %260, %261, %cst_52 {dimension_numbers = #tpu.dot_dimension_numbers<[1], [0], [0], [1], [0, 0, 1, 1], [], []>} : vector<48x32xf32>, vector<32x96xf32>, vector<48x96xf32> -> vector<48x96xf32>
    %c0_53 = arith.constant 0 : index
    %c0_54 = arith.constant 0 : index
    %263 = vector.load %arg12[%c0_53, %c0_54] : memref<1x96xf32, #tpu.memory_space<vmem>>, vector<1x96xf32>
    %c0_55 = arith.constant 0 : index
    %c0_56 = arith.constant 0 : index
    %264 = vector.load %arg4[%c0_55, %c0_56] : memref<8x32xf32, #tpu.memory_space<vmem>>, vector<8x32xf32>
    %c0_57 = arith.constant 0 : index
    %c0_58 = arith.constant 0 : index
    %265 = vector.load %arg11[%c0_57, %c0_58] : memref<32x96xf32, #tpu.memory_space<vmem>>, vector<32x96xf32>
    %c0_59 = arith.constant 0 : index
    %c0_60 = arith.constant 0 : index
    %266 = vector.load %arg13[%c0_59, %c0_60] : memref<1x96xf32, #tpu.memory_space<vmem>>, vector<1x96xf32>
    %267 = vector.extract_strided_slice %262 {offsets = [0, 0], sizes = [8, 96], strides = [1, 1]} : vector<48x96xf32> to vector<8x96xf32>
    %268 = vector.broadcast %263 : vector<1x96xf32> to vector<8x96xf32>
    %269 = arith.addf %267, %268 : vector<8x96xf32>
    %cst_61 = arith.constant dense<0.000000e+00> : vector<8x96xf32>
    %270 = tpu.matmul %264, %265, %cst_61 {dimension_numbers = #tpu.dot_dimension_numbers<[1], [0], [0], [1], [0, 0, 1, 1], [], []>} : vector<8x32xf32>, vector<32x96xf32>, vector<8x96xf32> -> vector<8x96xf32>
    %271 = vector.broadcast %266 : vector<1x96xf32> to vector<8x96xf32>
    %272 = arith.addf %270, %271 : vector<8x96xf32>
    %273 = vector.extract_strided_slice %269 {offsets = [0, 0], sizes = [8, 32], strides = [1, 1]} : vector<8x96xf32> to vector<8x32xf32>
    %274 = vector.extract_strided_slice %272 {offsets = [0, 0], sizes = [8, 32], strides = [1, 1]} : vector<8x96xf32> to vector<8x32xf32>
    %275 = arith.addf %273, %274 : vector<8x32xf32>
    %276 = arith.negf %275 : vector<8x32xf32>
    %277 = math.exp %276 : vector<8x32xf32>
    %cst_62 = arith.constant 1.000000e+00 : f32
    %278 = vector.broadcast %cst_62 : f32 to vector<8x32xf32>
    %279 = arith.addf %278, %277 : vector<8x32xf32>
    %280 = arith.divf %278, %279 : vector<8x32xf32>
    %281 = vector.extract_strided_slice %269 {offsets = [0, 32], sizes = [8, 32], strides = [1, 1]} : vector<8x96xf32> to vector<8x32xf32>
    %282 = vector.extract_strided_slice %272 {offsets = [0, 32], sizes = [8, 32], strides = [1, 1]} : vector<8x96xf32> to vector<8x32xf32>
    %283 = arith.addf %281, %282 : vector<8x32xf32>
    %284 = arith.negf %283 : vector<8x32xf32>
    %285 = math.exp %284 : vector<8x32xf32>
    %cst_63 = arith.constant 1.000000e+00 : f32
    %286 = vector.broadcast %cst_63 : f32 to vector<8x32xf32>
    %287 = arith.addf %286, %285 : vector<8x32xf32>
    %288 = arith.divf %286, %287 : vector<8x32xf32>
    %289 = vector.extract_strided_slice %269 {offsets = [0, 64], sizes = [8, 32], strides = [1, 1]} : vector<8x96xf32> to vector<8x32xf32>
    %290 = vector.extract_strided_slice %272 {offsets = [0, 64], sizes = [8, 32], strides = [1, 1]} : vector<8x96xf32> to vector<8x32xf32>
    %291 = arith.mulf %280, %290 : vector<8x32xf32>
    %292 = arith.addf %289, %291 : vector<8x32xf32>
    %293 = math.tanh %292 : vector<8x32xf32>
    %cst_64 = arith.constant 1.000000e+00 : f32
    %294 = vector.broadcast %cst_64 : f32 to vector<8x32xf32>
    %295 = arith.subf %294, %288 : vector<8x32xf32>
    %296 = arith.mulf %295, %293 : vector<8x32xf32>
    %297 = arith.mulf %288, %264 : vector<8x32xf32>
    %298 = arith.addf %296, %297 : vector<8x32xf32>
    %299 = vector.extract_strided_slice %262 {offsets = [8, 0], sizes = [8, 96], strides = [1, 1]} : vector<48x96xf32> to vector<8x96xf32>
    %300 = vector.broadcast %263 : vector<1x96xf32> to vector<8x96xf32>
    %301 = arith.addf %299, %300 : vector<8x96xf32>
    %cst_65 = arith.constant dense<0.000000e+00> : vector<8x96xf32>
    %302 = tpu.matmul %298, %265, %cst_65 {dimension_numbers = #tpu.dot_dimension_numbers<[1], [0], [0], [1], [0, 0, 1, 1], [], []>} : vector<8x32xf32>, vector<32x96xf32>, vector<8x96xf32> -> vector<8x96xf32>
    %303 = vector.broadcast %266 : vector<1x96xf32> to vector<8x96xf32>
    %304 = arith.addf %302, %303 : vector<8x96xf32>
    %305 = vector.extract_strided_slice %301 {offsets = [0, 0], sizes = [8, 32], strides = [1, 1]} : vector<8x96xf32> to vector<8x32xf32>
    %306 = vector.extract_strided_slice %304 {offsets = [0, 0], sizes = [8, 32], strides = [1, 1]} : vector<8x96xf32> to vector<8x32xf32>
    %307 = arith.addf %305, %306 : vector<8x32xf32>
    %308 = arith.negf %307 : vector<8x32xf32>
    %309 = math.exp %308 : vector<8x32xf32>
    %cst_66 = arith.constant 1.000000e+00 : f32
    %310 = vector.broadcast %cst_66 : f32 to vector<8x32xf32>
    %311 = arith.addf %310, %309 : vector<8x32xf32>
    %312 = arith.divf %310, %311 : vector<8x32xf32>
    %313 = vector.extract_strided_slice %301 {offsets = [0, 32], sizes = [8, 32], strides = [1, 1]} : vector<8x96xf32> to vector<8x32xf32>
    %314 = vector.extract_strided_slice %304 {offsets = [0, 32], sizes = [8, 32], strides = [1, 1]} : vector<8x96xf32> to vector<8x32xf32>
    %315 = arith.addf %313, %314 : vector<8x32xf32>
    %316 = arith.negf %315 : vector<8x32xf32>
    %317 = math.exp %316 : vector<8x32xf32>
    %cst_67 = arith.constant 1.000000e+00 : f32
    %318 = vector.broadcast %cst_67 : f32 to vector<8x32xf32>
    %319 = arith.addf %318, %317 : vector<8x32xf32>
    %320 = arith.divf %318, %319 : vector<8x32xf32>
    %321 = vector.extract_strided_slice %301 {offsets = [0, 64], sizes = [8, 32], strides = [1, 1]} : vector<8x96xf32> to vector<8x32xf32>
    %322 = vector.extract_strided_slice %304 {offsets = [0, 64], sizes = [8, 32], strides = [1, 1]} : vector<8x96xf32> to vector<8x32xf32>
    %323 = arith.mulf %312, %322 : vector<8x32xf32>
    %324 = arith.addf %321, %323 : vector<8x32xf32>
    %325 = math.tanh %324 : vector<8x32xf32>
    %cst_68 = arith.constant 1.000000e+00 : f32
    %326 = vector.broadcast %cst_68 : f32 to vector<8x32xf32>
    %327 = arith.subf %326, %320 : vector<8x32xf32>
    %328 = arith.mulf %327, %325 : vector<8x32xf32>
    %329 = arith.mulf %320, %298 : vector<8x32xf32>
    %330 = arith.addf %328, %329 : vector<8x32xf32>
    %331 = vector.extract_strided_slice %262 {offsets = [16, 0], sizes = [8, 96], strides = [1, 1]} : vector<48x96xf32> to vector<8x96xf32>
    %332 = vector.broadcast %263 : vector<1x96xf32> to vector<8x96xf32>
    %333 = arith.addf %331, %332 : vector<8x96xf32>
    %cst_69 = arith.constant dense<0.000000e+00> : vector<8x96xf32>
    %334 = tpu.matmul %330, %265, %cst_69 {dimension_numbers = #tpu.dot_dimension_numbers<[1], [0], [0], [1], [0, 0, 1, 1], [], []>} : vector<8x32xf32>, vector<32x96xf32>, vector<8x96xf32> -> vector<8x96xf32>
    %335 = vector.broadcast %266 : vector<1x96xf32> to vector<8x96xf32>
    %336 = arith.addf %334, %335 : vector<8x96xf32>
    %337 = vector.extract_strided_slice %333 {offsets = [0, 0], sizes = [8, 32], strides = [1, 1]} : vector<8x96xf32> to vector<8x32xf32>
    %338 = vector.extract_strided_slice %336 {offsets = [0, 0], sizes = [8, 32], strides = [1, 1]} : vector<8x96xf32> to vector<8x32xf32>
    %339 = arith.addf %337, %338 : vector<8x32xf32>
    %340 = arith.negf %339 : vector<8x32xf32>
    %341 = math.exp %340 : vector<8x32xf32>
    %cst_70 = arith.constant 1.000000e+00 : f32
    %342 = vector.broadcast %cst_70 : f32 to vector<8x32xf32>
    %343 = arith.addf %342, %341 : vector<8x32xf32>
    %344 = arith.divf %342, %343 : vector<8x32xf32>
    %345 = vector.extract_strided_slice %333 {offsets = [0, 32], sizes = [8, 32], strides = [1, 1]} : vector<8x96xf32> to vector<8x32xf32>
    %346 = vector.extract_strided_slice %336 {offsets = [0, 32], sizes = [8, 32], strides = [1, 1]} : vector<8x96xf32> to vector<8x32xf32>
    %347 = arith.addf %345, %346 : vector<8x32xf32>
    %348 = arith.negf %347 : vector<8x32xf32>
    %349 = math.exp %348 : vector<8x32xf32>
    %cst_71 = arith.constant 1.000000e+00 : f32
    %350 = vector.broadcast %cst_71 : f32 to vector<8x32xf32>
    %351 = arith.addf %350, %349 : vector<8x32xf32>
    %352 = arith.divf %350, %351 : vector<8x32xf32>
    %353 = vector.extract_strided_slice %333 {offsets = [0, 64], sizes = [8, 32], strides = [1, 1]} : vector<8x96xf32> to vector<8x32xf32>
    %354 = vector.extract_strided_slice %336 {offsets = [0, 64], sizes = [8, 32], strides = [1, 1]} : vector<8x96xf32> to vector<8x32xf32>
    %355 = arith.mulf %344, %354 : vector<8x32xf32>
    %356 = arith.addf %353, %355 : vector<8x32xf32>
    %357 = math.tanh %356 : vector<8x32xf32>
    %cst_72 = arith.constant 1.000000e+00 : f32
    %358 = vector.broadcast %cst_72 : f32 to vector<8x32xf32>
    %359 = arith.subf %358, %352 : vector<8x32xf32>
    %360 = arith.mulf %359, %357 : vector<8x32xf32>
    %361 = arith.mulf %352, %330 : vector<8x32xf32>
    %362 = arith.addf %360, %361 : vector<8x32xf32>
    %363 = vector.extract_strided_slice %262 {offsets = [24, 0], sizes = [8, 96], strides = [1, 1]} : vector<48x96xf32> to vector<8x96xf32>
    %364 = vector.broadcast %263 : vector<1x96xf32> to vector<8x96xf32>
    %365 = arith.addf %363, %364 : vector<8x96xf32>
    %cst_73 = arith.constant dense<0.000000e+00> : vector<8x96xf32>
    %366 = tpu.matmul %362, %265, %cst_73 {dimension_numbers = #tpu.dot_dimension_numbers<[1], [0], [0], [1], [0, 0, 1, 1], [], []>} : vector<8x32xf32>, vector<32x96xf32>, vector<8x96xf32> -> vector<8x96xf32>
    %367 = vector.broadcast %266 : vector<1x96xf32> to vector<8x96xf32>
    %368 = arith.addf %366, %367 : vector<8x96xf32>
    %369 = vector.extract_strided_slice %365 {offsets = [0, 0], sizes = [8, 32], strides = [1, 1]} : vector<8x96xf32> to vector<8x32xf32>
    %370 = vector.extract_strided_slice %368 {offsets = [0, 0], sizes = [8, 32], strides = [1, 1]} : vector<8x96xf32> to vector<8x32xf32>
    %371 = arith.addf %369, %370 : vector<8x32xf32>
    %372 = arith.negf %371 : vector<8x32xf32>
    %373 = math.exp %372 : vector<8x32xf32>
    %cst_74 = arith.constant 1.000000e+00 : f32
    %374 = vector.broadcast %cst_74 : f32 to vector<8x32xf32>
    %375 = arith.addf %374, %373 : vector<8x32xf32>
    %376 = arith.divf %374, %375 : vector<8x32xf32>
    %377 = vector.extract_strided_slice %365 {offsets = [0, 32], sizes = [8, 32], strides = [1, 1]} : vector<8x96xf32> to vector<8x32xf32>
    %378 = vector.extract_strided_slice %368 {offsets = [0, 32], sizes = [8, 32], strides = [1, 1]} : vector<8x96xf32> to vector<8x32xf32>
    %379 = arith.addf %377, %378 : vector<8x32xf32>
    %380 = arith.negf %379 : vector<8x32xf32>
    %381 = math.exp %380 : vector<8x32xf32>
    %cst_75 = arith.constant 1.000000e+00 : f32
    %382 = vector.broadcast %cst_75 : f32 to vector<8x32xf32>
    %383 = arith.addf %382, %381 : vector<8x32xf32>
    %384 = arith.divf %382, %383 : vector<8x32xf32>
    %385 = vector.extract_strided_slice %365 {offsets = [0, 64], sizes = [8, 32], strides = [1, 1]} : vector<8x96xf32> to vector<8x32xf32>
    %386 = vector.extract_strided_slice %368 {offsets = [0, 64], sizes = [8, 32], strides = [1, 1]} : vector<8x96xf32> to vector<8x32xf32>
    %387 = arith.mulf %376, %386 : vector<8x32xf32>
    %388 = arith.addf %385, %387 : vector<8x32xf32>
    %389 = math.tanh %388 : vector<8x32xf32>
    %cst_76 = arith.constant 1.000000e+00 : f32
    %390 = vector.broadcast %cst_76 : f32 to vector<8x32xf32>
    %391 = arith.subf %390, %384 : vector<8x32xf32>
    %392 = arith.mulf %391, %389 : vector<8x32xf32>
    %393 = arith.mulf %384, %362 : vector<8x32xf32>
    %394 = arith.addf %392, %393 : vector<8x32xf32>
    %395 = vector.extract_strided_slice %262 {offsets = [32, 0], sizes = [8, 96], strides = [1, 1]} : vector<48x96xf32> to vector<8x96xf32>
    %396 = vector.broadcast %263 : vector<1x96xf32> to vector<8x96xf32>
    %397 = arith.addf %395, %396 : vector<8x96xf32>
    %cst_77 = arith.constant dense<0.000000e+00> : vector<8x96xf32>
    %398 = tpu.matmul %394, %265, %cst_77 {dimension_numbers = #tpu.dot_dimension_numbers<[1], [0], [0], [1], [0, 0, 1, 1], [], []>} : vector<8x32xf32>, vector<32x96xf32>, vector<8x96xf32> -> vector<8x96xf32>
    %399 = vector.broadcast %266 : vector<1x96xf32> to vector<8x96xf32>
    %400 = arith.addf %398, %399 : vector<8x96xf32>
    %401 = vector.extract_strided_slice %397 {offsets = [0, 0], sizes = [8, 32], strides = [1, 1]} : vector<8x96xf32> to vector<8x32xf32>
    %402 = vector.extract_strided_slice %400 {offsets = [0, 0], sizes = [8, 32], strides = [1, 1]} : vector<8x96xf32> to vector<8x32xf32>
    %403 = arith.addf %401, %402 : vector<8x32xf32>
    %404 = arith.negf %403 : vector<8x32xf32>
    %405 = math.exp %404 : vector<8x32xf32>
    %cst_78 = arith.constant 1.000000e+00 : f32
    %406 = vector.broadcast %cst_78 : f32 to vector<8x32xf32>
    %407 = arith.addf %406, %405 : vector<8x32xf32>
    %408 = arith.divf %406, %407 : vector<8x32xf32>
    %409 = vector.extract_strided_slice %397 {offsets = [0, 32], sizes = [8, 32], strides = [1, 1]} : vector<8x96xf32> to vector<8x32xf32>
    %410 = vector.extract_strided_slice %400 {offsets = [0, 32], sizes = [8, 32], strides = [1, 1]} : vector<8x96xf32> to vector<8x32xf32>
    %411 = arith.addf %409, %410 : vector<8x32xf32>
    %412 = arith.negf %411 : vector<8x32xf32>
    %413 = math.exp %412 : vector<8x32xf32>
    %cst_79 = arith.constant 1.000000e+00 : f32
    %414 = vector.broadcast %cst_79 : f32 to vector<8x32xf32>
    %415 = arith.addf %414, %413 : vector<8x32xf32>
    %416 = arith.divf %414, %415 : vector<8x32xf32>
    %417 = vector.extract_strided_slice %397 {offsets = [0, 64], sizes = [8, 32], strides = [1, 1]} : vector<8x96xf32> to vector<8x32xf32>
    %418 = vector.extract_strided_slice %400 {offsets = [0, 64], sizes = [8, 32], strides = [1, 1]} : vector<8x96xf32> to vector<8x32xf32>
    %419 = arith.mulf %408, %418 : vector<8x32xf32>
    %420 = arith.addf %417, %419 : vector<8x32xf32>
    %421 = math.tanh %420 : vector<8x32xf32>
    %cst_80 = arith.constant 1.000000e+00 : f32
    %422 = vector.broadcast %cst_80 : f32 to vector<8x32xf32>
    %423 = arith.subf %422, %416 : vector<8x32xf32>
    %424 = arith.mulf %423, %421 : vector<8x32xf32>
    %425 = arith.mulf %416, %394 : vector<8x32xf32>
    %426 = arith.addf %424, %425 : vector<8x32xf32>
    %427 = vector.extract_strided_slice %262 {offsets = [40, 0], sizes = [8, 96], strides = [1, 1]} : vector<48x96xf32> to vector<8x96xf32>
    %428 = vector.broadcast %263 : vector<1x96xf32> to vector<8x96xf32>
    %429 = arith.addf %427, %428 : vector<8x96xf32>
    %cst_81 = arith.constant dense<0.000000e+00> : vector<8x96xf32>
    %430 = tpu.matmul %426, %265, %cst_81 {dimension_numbers = #tpu.dot_dimension_numbers<[1], [0], [0], [1], [0, 0, 1, 1], [], []>} : vector<8x32xf32>, vector<32x96xf32>, vector<8x96xf32> -> vector<8x96xf32>
    %431 = vector.broadcast %266 : vector<1x96xf32> to vector<8x96xf32>
    %432 = arith.addf %430, %431 : vector<8x96xf32>
    %433 = vector.extract_strided_slice %429 {offsets = [0, 0], sizes = [8, 32], strides = [1, 1]} : vector<8x96xf32> to vector<8x32xf32>
    %434 = vector.extract_strided_slice %432 {offsets = [0, 0], sizes = [8, 32], strides = [1, 1]} : vector<8x96xf32> to vector<8x32xf32>
    %435 = arith.addf %433, %434 : vector<8x32xf32>
    %436 = arith.negf %435 : vector<8x32xf32>
    %437 = math.exp %436 : vector<8x32xf32>
    %cst_82 = arith.constant 1.000000e+00 : f32
    %438 = vector.broadcast %cst_82 : f32 to vector<8x32xf32>
    %439 = arith.addf %438, %437 : vector<8x32xf32>
    %440 = arith.divf %438, %439 : vector<8x32xf32>
    %441 = vector.extract_strided_slice %429 {offsets = [0, 32], sizes = [8, 32], strides = [1, 1]} : vector<8x96xf32> to vector<8x32xf32>
    %442 = vector.extract_strided_slice %432 {offsets = [0, 32], sizes = [8, 32], strides = [1, 1]} : vector<8x96xf32> to vector<8x32xf32>
    %443 = arith.addf %441, %442 : vector<8x32xf32>
    %444 = arith.negf %443 : vector<8x32xf32>
    %445 = math.exp %444 : vector<8x32xf32>
    %cst_83 = arith.constant 1.000000e+00 : f32
    %446 = vector.broadcast %cst_83 : f32 to vector<8x32xf32>
    %447 = arith.addf %446, %445 : vector<8x32xf32>
    %448 = arith.divf %446, %447 : vector<8x32xf32>
    %449 = vector.extract_strided_slice %429 {offsets = [0, 64], sizes = [8, 32], strides = [1, 1]} : vector<8x96xf32> to vector<8x32xf32>
    %450 = vector.extract_strided_slice %432 {offsets = [0, 64], sizes = [8, 32], strides = [1, 1]} : vector<8x96xf32> to vector<8x32xf32>
    %451 = arith.mulf %440, %450 : vector<8x32xf32>
    %452 = arith.addf %449, %451 : vector<8x32xf32>
    %453 = math.tanh %452 : vector<8x32xf32>
    %cst_84 = arith.constant 1.000000e+00 : f32
    %454 = vector.broadcast %cst_84 : f32 to vector<8x32xf32>
    %455 = arith.subf %454, %448 : vector<8x32xf32>
    %456 = arith.mulf %455, %453 : vector<8x32xf32>
    %457 = arith.mulf %448, %426 : vector<8x32xf32>
    %458 = arith.addf %456, %457 : vector<8x32xf32>
    %c0_85 = arith.constant 0 : index
    %c0_86 = arith.constant 0 : index
    %459 = vector.load %arg14[%c0_85, %c0_86] : memref<32x32xf32, #tpu.memory_space<vmem>>, vector<32x32xf32>
    %cst_87 = arith.constant dense<0.000000e+00> : vector<8x32xf32>
    %460 = tpu.matmul %259, %459, %cst_87 {dimension_numbers = #tpu.dot_dimension_numbers<[1], [0], [0], [1], [0, 0, 1, 1], [], []>} : vector<8x32xf32>, vector<32x32xf32>, vector<8x32xf32> -> vector<8x32xf32>
    %c0_88 = arith.constant 0 : index
    %c0_89 = arith.constant 0 : index
    %461 = vector.load %arg15[%c0_88, %c0_89] : memref<1x32xf32, #tpu.memory_space<vmem>>, vector<1x32xf32>
    %462 = vector.broadcast %461 : vector<1x32xf32> to vector<8x32xf32>
    %463 = arith.addf %460, %462 : vector<8x32xf32>
    %c0_90 = arith.constant 0 : index
    %c0_91 = arith.constant 0 : index
    %464 = vector.load %arg16[%c0_90, %c0_91] : memref<32x32xf32, #tpu.memory_space<vmem>>, vector<32x32xf32>
    %cst_92 = arith.constant dense<0.000000e+00> : vector<8x32xf32>
    %465 = tpu.matmul %458, %464, %cst_92 {dimension_numbers = #tpu.dot_dimension_numbers<[1], [0], [0], [1], [0, 0, 1, 1], [], []>} : vector<8x32xf32>, vector<32x32xf32>, vector<8x32xf32> -> vector<8x32xf32>
    %c0_93 = arith.constant 0 : index
    %c0_94 = arith.constant 0 : index
    %466 = vector.load %arg17[%c0_93, %c0_94] : memref<1x32xf32, #tpu.memory_space<vmem>>, vector<1x32xf32>
    %467 = vector.broadcast %466 : vector<1x32xf32> to vector<8x32xf32>
    %468 = arith.addf %465, %467 : vector<8x32xf32>
    %c0_95 = arith.constant 0 : index
    %c0_96 = arith.constant 0 : index
    %469 = vector.load %arg18[%c0_95, %c0_96] : memref<32x32xf32, #tpu.memory_space<vmem>>, vector<32x32xf32>
    %cst_97 = arith.constant dense<0.000000e+00> : vector<8x32xf32>
    %470 = tpu.matmul %0, %469, %cst_97 {dimension_numbers = #tpu.dot_dimension_numbers<[1], [0], [0], [1], [0, 0, 1, 1], [], []>} : vector<8x32xf32>, vector<32x32xf32>, vector<8x32xf32> -> vector<8x32xf32>
    %c0_98 = arith.constant 0 : index
    %c0_99 = arith.constant 0 : index
    %471 = vector.load %arg19[%c0_98, %c0_99] : memref<1x32xf32, #tpu.memory_space<vmem>>, vector<1x32xf32>
    %472 = vector.broadcast %471 : vector<1x32xf32> to vector<8x32xf32>
    %473 = arith.addf %470, %472 : vector<8x32xf32>
    %474 = arith.mulf %463, %473 : vector<8x32xf32>
    %c0_100 = arith.constant 0 : index
    %c0_101 = arith.constant 0 : index
    %475 = vector.load %arg20[%c0_100, %c0_101] : memref<32x32xf32, #tpu.memory_space<vmem>>, vector<32x32xf32>
    %cst_102 = arith.constant dense<0.000000e+00> : vector<8x32xf32>
    %476 = tpu.matmul %474, %475, %cst_102 {dimension_numbers = #tpu.dot_dimension_numbers<[1], [0], [0], [1], [0, 0, 1, 1], [], []>} : vector<8x32xf32>, vector<32x32xf32>, vector<8x32xf32> -> vector<8x32xf32>
    %c0_103 = arith.constant 0 : index
    %c0_104 = arith.constant 0 : index
    %477 = vector.load %arg21[%c0_103, %c0_104] : memref<1x32xf32, #tpu.memory_space<vmem>>, vector<1x32xf32>
    %478 = vector.broadcast %477 : vector<1x32xf32> to vector<8x32xf32>
    %479 = arith.addf %476, %478 : vector<8x32xf32>
    %480 = arith.mulf %479, %468 : vector<8x32xf32>
    %c0_105 = arith.constant 0 : index
    %c0_106 = arith.constant 0 : index
    %481 = vector.load %arg22[%c0_105, %c0_106] : memref<32x32xf32, #tpu.memory_space<vmem>>, vector<32x32xf32>
    %cst_107 = arith.constant dense<0.000000e+00> : vector<8x32xf32>
    %482 = tpu.matmul %480, %481, %cst_107 {dimension_numbers = #tpu.dot_dimension_numbers<[1], [0], [0], [1], [0, 0, 1, 1], [], []>} : vector<8x32xf32>, vector<32x32xf32>, vector<8x32xf32> -> vector<8x32xf32>
    %c0_108 = arith.constant 0 : index
    %c0_109 = arith.constant 0 : index
    %483 = vector.load %arg23[%c0_108, %c0_109] : memref<1x32xf32, #tpu.memory_space<vmem>>, vector<1x32xf32>
    %484 = vector.broadcast %483 : vector<1x32xf32> to vector<8x32xf32>
    %485 = arith.addf %482, %484 : vector<8x32xf32>
    %c0_110 = arith.constant 0 : index
    %c0_111 = arith.constant 0 : index
    %486 = vector.load %arg24[%c0_110, %c0_111] : memref<32x16xf32, #tpu.memory_space<vmem>>, vector<32x16xf32>
    %cst_112 = arith.constant dense<0.000000e+00> : vector<8x16xf32>
    %487 = tpu.matmul %485, %486, %cst_112 {dimension_numbers = #tpu.dot_dimension_numbers<[1], [0], [0], [1], [0, 0, 1, 1], [], []>} : vector<8x32xf32>, vector<32x16xf32>, vector<8x16xf32> -> vector<8x16xf32>
    %c0_113 = arith.constant 0 : index
    %c0_114 = arith.constant 0 : index
    %488 = vector.load %arg25[%c0_113, %c0_114] : memref<1x16xf32, #tpu.memory_space<vmem>>, vector<1x16xf32>
    %489 = vector.broadcast %488 : vector<1x16xf32> to vector<8x16xf32>
    %490 = arith.addf %487, %489 : vector<8x16xf32>
    %cst_115 = arith.constant dense<0xFF800000> : vector<8xf32>
    %491 = vector.multi_reduction <maximumf>, %490, %cst_115 [1] : vector<8x16xf32> to vector<8xf32>
    %492 = vector.shape_cast %491 : vector<8xf32> to vector<8x1xf32>
    %493 = vector.broadcast %492 : vector<8x1xf32> to vector<8x16xf32>
    %494 = arith.subf %490, %493 : vector<8x16xf32>
    %495 = math.exp %494 : vector<8x16xf32>
    %cst_116 = arith.constant dense<0.000000e+00> : vector<8xf32>
    %496 = vector.multi_reduction <add>, %495, %cst_116 [1] : vector<8x16xf32> to vector<8xf32>
    %497 = vector.shape_cast %496 : vector<8xf32> to vector<8x1xf32>
    %498 = tpu.reciprocal %497 : vector<8x1xf32> -> vector<8x1xf32>
    %499 = vector.broadcast %498 : vector<8x1xf32> to vector<8x16xf32>
    %500 = arith.mulf %495, %499 : vector<8x16xf32>
    %c0_117 = arith.constant 0 : index
    %c0_118 = arith.constant 0 : index
    %501 = vector.load %arg26[%c0_117, %c0_118] : memref<8x16xf32, #tpu.memory_space<vmem>>, vector<8x16xf32>
    tpu.vector_store %arg26[%c0_117, %c0_118], %500 {strides = array<i32>} : memref<8x16xf32, #tpu.memory_space<vmem>>, vector<8x16xf32>,
    return
  }
}

</mosaic_0001>

<llo_original>
// kernel: forward.1
$region0: #{forward.1}
  #allocation0 [shape = 'u32[]', space=smem, size = 0x4, offset = 0x4, fixed_abs, tag = 'smem constant byte address 0x4 - core index']
  #allocation1 [shape = 'u32[144,128]{1,0:T(1,128)}', space=vmem, size = 0x12000, scoped, tag = 'internal scratch']
  %s0 = inlined_call_operand.vmem [shape: f32[64,32], index: 0, kind: input, shape index: {}]
  %s1 = inlined_call_operand.vmem [shape: f32[48,32], index: 1, kind: input, shape index: {}]
  %s2 = inlined_call_operand.vmem [shape: f32[8,32], index: 2, kind: input, shape index: {}]
  %s3 = inlined_call_operand.vmem [shape: f32[8,32], index: 3, kind: input, shape index: {}]
  %s4 = inlined_call_operand.vmem [shape: f32[8,32], index: 4, kind: input, shape index: {}]
  %s5 = inlined_call_operand.vmem [shape: f32[32,96], index: 5, kind: input, shape index: {}]
  %s6 = inlined_call_operand.vmem [shape: f32[32,96], index: 6, kind: input, shape index: {}]
  %s7 = inlined_call_operand.vmem [shape: f32[32,96], index: 7, kind: input, shape index: {}]
  %s8 = inlined_call_operand.vmem [shape: f32[1,96], index: 8, kind: input, shape index: {}]
  %s9 = inlined_call_operand.vmem [shape: f32[1,96], index: 9, kind: input, shape index: {}]
  %s10 = inlined_call_operand.vmem [shape: f32[32,96], index: 10, kind: input, shape index: {}]
  %s11 = inlined_call_operand.vmem [shape: f32[32,96], index: 11, kind: input, shape index: {}]
  %s12 = inlined_call_operand.vmem [shape: f32[1,96], index: 12, kind: input, shape index: {}]
  %s13 = inlined_call_operand.vmem [shape: f32[1,96], index: 13, kind: input, shape index: {}]
  %s14 = inlined_call_operand.vmem [shape: f32[32,32], index: 14, kind: input, shape index: {}]
  %s15 = inlined_call_operand.vmem [shape: f32[1,32], index: 15, kind: input, shape index: {}]
  %s16 = inlined_call_operand.vmem [shape: f32[32,32], index: 16, kind: input, shape index: {}]
  %s17 = inlined_call_operand.vmem [shape: f32[1,32], index: 17, kind: input, shape index: {}]
  %s18 = inlined_call_operand.vmem [shape: f32[32,32], index: 18, kind: input, shape index: {}]
  %s19 = inlined_call_operand.vmem [shape: f32[1,32], index: 19, kind: input, shape index: {}]
  %s20 = inlined_call_operand.vmem [shape: f32[32,32], index: 20, kind: input, shape index: {}]
  %s21 = inlined_call_operand.vmem [shape: f32[1,32], index: 21, kind: input, shape index: {}]
  %s22 = inlined_call_operand.vmem [shape: f32[32,32], index: 22, kind: input, shape index: {}]
  %s23 = inlined_call_operand.vmem [shape: f32[1,32], index: 23, kind: input, shape index: {}]
  %s24 = inlined_call_operand.vmem [shape: f32[32,16], index: 24, kind: input, shape index: {}]
  %s25 = inlined_call_operand.vmem [shape: f32[1,16], index: 25, kind: input, shape index: {}]
  %s26 = inlined_call_operand.vmem [shape: f32[8,16], index: 26, kind: output, shape index: {}]
  %s27 = sld [smem:[#allocation0]]
  $region114: #{forward.1} parent=0
    _
  %s29 = ssub.s32 1, %s27
  %s30 = scalar_select 0, %s29, %s27
  // Predicated region
  $region2: #{forward.1} parent=0 // pred_check
    _
  $region3: #{forward.1} parent=0 // pred_check_branch
    %32 = sbr.rel (0) target = $region5
  $region4: #{forward.1} parent=0 // pred_region
    _
  $region5: #{forward.1} parent=0 // pred_fallthru
    _
  // Predicated region
  $region6: #{forward.1} parent=0 // pred_check
    _
  $region7: #{forward.1} parent=0 // pred_check_branch
    %34 = sbr.rel (0) target = $region9
  $region8: #{forward.1} parent=0 // pred_region
    _
  $region9: #{forward.1} parent=0 // pred_fallthru
    _
  // Predicated region
  $region10: #{forward.1} parent=0 // pred_check
    _
  $region11: #{forward.1} parent=0 // pred_check_branch
    %36 = sbr.rel (0) target = $region13
  $region12: #{forward.1} parent=0 // pred_region
    _
  $region13: #{forward.1} parent=0 // pred_fallthru
    _
  // Predicated region
  $region14: #{forward.1} parent=0 // pred_check
    _
  $region15: #{forward.1} parent=0 // pred_check_branch
    %38 = sbr.rel (0) target = $region17
  $region16: #{forward.1} parent=0 // pred_region
    _
  $region17: #{forward.1} parent=0 // pred_fallthru
    _
  // Predicated region
  $region18: #{forward.1} parent=0 // pred_check
    _
  $region19: #{forward.1} parent=0 // pred_check_branch
    %40 = sbr.rel (0) target = $region21
  $region20: #{forward.1} parent=0 // pred_region
    _
  $region21: #{forward.1} parent=0 // pred_fallthru
    _
  // Predicated region
  $region22: #{forward.1} parent=0 // pred_check
    _
  $region23: #{forward.1} parent=0 // pred_check_branch
    %42 = sbr.rel (0) target = $region25
  $region24: #{forward.1} parent=0 // pred_region
    _
  $region25: #{forward.1} parent=0 // pred_fallthru
    _
  // Predicated region
  $region26: #{forward.1} parent=0 // pred_check
    _
  $region27: #{forward.1} parent=0 // pred_check_branch
    %44 = sbr.rel (0) target = $region29
  $region28: #{forward.1} parent=0 // pred_region
    _
  $region29: #{forward.1} parent=0 // pred_fallthru
    _
  // Predicated region
  $region30: #{forward.1} parent=0 // pred_check
    _
  $region31: #{forward.1} parent=0 // pred_check_branch
    %46 = sbr.rel (0) target = $region33
  $region32: #{forward.1} parent=0 // pred_region
    _
  $region33: #{forward.1} parent=0 // pred_fallthru
    _
  // Predicated region
  $region34: #{forward.1} parent=0 // pred_check
    _
  $region35: #{forward.1} parent=0 // pred_check_branch
    %48 = sbr.rel (0) target = $region37
  $region36: #{forward.1} parent=0 // pred_region
    _
  $region37: #{forward.1} parent=0 // pred_fallthru
    _
  // Predicated region
  $region38: #{forward.1} parent=0 // pred_check
    _
  $region39: #{forward.1} parent=0 // pred_check_branch
    %50 = sbr.rel (0) target = $region41
  $region40: #{forward.1} parent=0 // pred_region
    _
  $region41: #{forward.1} parent=0 // pred_fallthru
    _
  // Predicated region
  $region42: #{forward.1} parent=0 // pred_check
    _
  $region43: #{forward.1} parent=0 // pred_check_branch
    %52 = sbr.rel (0) target = $region45
  $region44: #{forward.1} parent=0 // pred_region
    _
  $region45: #{forward.1} parent=0 // pred_fallthru
    _
  // Predicated region
  $region46: #{forward.1} parent=0 // pred_check
    _
  $region47: #{forward.1} parent=0 // pred_check_branch
    %54 = sbr.rel (0) target = $region49
  $region48: #{forward.1} parent=0 // pred_region
    _
  $region49: #{forward.1} parent=0 // pred_fallthru
    _
  // Predicated region
  $region50: #{forward.1} parent=0 // pred_check
    _
  $region51: #{forward.1} parent=0 // pred_check_branch
    %56 = sbr.rel (0) target = $region53
  $region52: #{forward.1} parent=0 // pred_region
    _
  $region53: #{forward.1} parent=0 // pred_fallthru
    _
  // Predicated region
  $region54: #{forward.1} parent=0 // pred_check
    _
  $region55: #{forward.1} parent=0 // pred_check_branch
    %58 = sbr.rel (0) target = $region57
  $region56: #{forward.1} parent=0 // pred_region
    _
  $region57: #{forward.1} parent=0 // pred_fallthru
    _
  // Predicated region
  $region58: #{forward.1} parent=0 // pred_check
    _
  $region59: #{forward.1} parent=0 // pred_check_branch
    %60 = sbr.rel (0) target = $region61
  $region60: #{forward.1} parent=0 // pred_region
    _
  $region61: #{forward.1} parent=0 // pred_fallthru
    _
  // Predicated region
  $region62: #{forward.1} parent=0 // pred_check
    _
  $region63: #{forward.1} parent=0 // pred_check_branch
    %62 = sbr.rel (0) target = $region65
  $region64: #{forward.1} parent=0 // pred_region
    _
  $region65: #{forward.1} parent=0 // pred_fallthru
    _
  // Predicated region
  $region66: #{forward.1} parent=0 // pred_check
    _
  $region67: #{forward.1} parent=0 // pred_check_branch
    %64 = sbr.rel (0) target = $region69
  $region68: #{forward.1} parent=0 // pred_region
    _
  $region69: #{forward.1} parent=0 // pred_fallthru
    _
  // Predicated region
  $region70: #{forward.1} parent=0 // pred_check
    _
  $region71: #{forward.1} parent=0 // pred_check_branch
    %66 = sbr.rel (0) target = $region73
  $region72: #{forward.1} parent=0 // pred_region
    _
  $region73: #{forward.1} parent=0 // pred_fallthru
    _
  // Predicated region
  $region74: #{forward.1} parent=0 // pred_check
    _
  $region75: #{forward.1} parent=0 // pred_check_branch
    %68 = sbr.rel (0) target = $region77
  $region76: #{forward.1} parent=0 // pred_region
    _
  $region77: #{forward.1} parent=0 // pred_fallthru
    _
  // Predicated region
  $region78: #{forward.1} parent=0 // pred_check
    _
  $region79: #{forward.1} parent=0 // pred_check_branch
    %70 = sbr.rel (0) target = $region81
  $region80: #{forward.1} parent=0 // pred_region
    _
  $region81: #{forward.1} parent=0 // pred_fallthru
    _
  // Predicated region
  $region82: #{forward.1} parent=0 // pred_check
    _
  $region83: #{forward.1} parent=0 // pred_check_branch
    %72 = sbr.rel (0) target = $region85
  $region84: #{forward.1} parent=0 // pred_region
    _
  $region85: #{forward.1} parent=0 // pred_fallthru
    _
  // Predicated region
  $region86: #{forward.1} parent=0 // pred_check
    _
  $region87: #{forward.1} parent=0 // pred_check_branch
    %74 = sbr.rel (0) target = $region89
  $region88: #{forward.1} parent=0 // pred_region
    _
  $region89: #{forward.1} parent=0 // pred_fallthru
    _
  // Predicated region
  $region90: #{forward.1} parent=0 // pred_check
    _
  $region91: #{forward.1} parent=0 // pred_check_branch
    %76 = sbr.rel (0) target = $region93
  $region92: #{forward.1} parent=0 // pred_region
    _
  $region93: #{forward.1} parent=0 // pred_fallthru
    _
  // Predicated region
  $region94: #{forward.1} parent=0 // pred_check
    _
  $region95: #{forward.1} parent=0 // pred_check_branch
    %78 = sbr.rel (0) target = $region97
  $region96: #{forward.1} parent=0 // pred_region
    _
  $region97: #{forward.1} parent=0 // pred_fallthru
    _
  // Predicated region
  $region98: #{forward.1} parent=0 // pred_check
    _
  $region99: #{forward.1} parent=0 // pred_check_branch
    %80 = sbr.rel (0) target = $region101
  $region100: #{forward.1} parent=0 // pred_region
    _
  $region101: #{forward.1} parent=0 // pred_fallthru
    _
  // Predicated region
  $region102: #{forward.1} parent=0 // pred_check
    _
  $region103: #{forward.1} parent=0 // pred_check_branch
    %82 = sbr.rel (0) target = $region105
  $region104: #{forward.1} parent=0 // pred_region
    _
  $region105: #{forward.1} parent=0 // pred_fallthru
    _
  %v83 = vld [vmem:[%s2] sm:$0xff]
  %v84 = vld [vmem:[%s0] sm:$0xff]
  %v85 = vld [vmem:[%s0 + $0x8] sm:$0xff]
  %v86 = vld [vmem:[%s0 + $0x10] sm:$0xff]
  %v87 = vld [vmem:[%s0 + $0x18] sm:$0xff]
  %v88 = vld [vmem:[%s0 + $0x20] sm:$0xff]
  %v89 = vld [vmem:[%s0 + $0x28] sm:$0xff]
  %v90 = vld [vmem:[%s0 + $0x30] sm:$0xff]
  %v91 = vld [vmem:[%s0 + $0x38] sm:$0xff]
  %v92 = vld [vmem:[%s5] sm:$0xff]
  %v93 = vld [vmem:[%s5 + $0x8] sm:$0xff]
  %v94 = vld [vmem:[%s5 + $0x10] sm:$0xff]
  %v95 = vld [vmem:[%s5 + $0x18] sm:$0xff]
  %vm96 = vcmask 261120
  %v98 = vsel %vm96, %v84, 0
  %v101 = vsel %vm96, %v85, 0
  %v104 = vsel %vm96, %v86, 0
  %v107 = vsel %vm96, %v87, 0
  %v110 = vsel %vm96, %v88, 0
  %v113 = vsel %vm96, %v89, 0
  %v116 = vsel %vm96, %v90, 0
  %v119 = vsel %vm96, %v91, 0
  %121 = vmatprep.subr.mxu0 0.0
  %122 = vmatpush1.msra.mxu0 %v92
  %123 = vmatprep.subr.mxu0 0.0
  %124 = vmatpush1.msra.mxu0 %v93
  %125 = vmatprep.subr.mxu0 0.0
  %126 = vmatpush1.msra.mxu0 %v94
  %127 = vmatprep.subr.mxu0 0.0
  %128 = vmatpush1.msra.mxu0 %v95
  %129 = vmatprep.subr.mxu0 0.0
  %130 = vmatpush1.msra.mxu0 0.0
  %131 = vmatprep.subr.mxu0 0.0
  %132 = vmatpush1.msra.mxu0 0.0
  %133 = vmatprep.subr.mxu0 0.0
  %134 = vmatpush1.msra.mxu0 0.0
  %135 = vmatprep.subr.mxu0 0.0
  %136 = vmatpush1.msra.mxu0 0.0
  %137 = vmatprep.subr.mxu0 0.0
  %138 = vmatpush1.msra.mxu0 0.0
  %139 = vmatprep.subr.mxu0 0.0
  %140 = vmatpush1.msra.mxu0 0.0
  %141 = vmatprep.subr.mxu0 0.0
  %142 = vmatpush1.msra.mxu0 0.0
  %143 = vmatprep.subr.mxu0 0.0
  %144 = vmatpush1.msra.mxu0 0.0
  %145 = vmatprep.subr.mxu0 0.0
  %146 = vmatpush1.msra.mxu0 0.0
  %147 = vmatprep.subr.mxu0 0.0
  %148 = vmatpush1.msra.mxu0 0.0
  %149 = vmatprep.subr.mxu0 0.0
  %150 = vmatpush1.msra.mxu0 0.0
  %151 = vmatprep.subr.mxu0 0.0
  %152 = vmatpush1.msra.mxu0 0.0
  %153 = vmatprep.subr.mxu0 0.0
  %154 = vmatpush1.msra.mxu0 0.0
  %155 = vmatprep.subr.mxu0 0.0
  %156 = vmatpush1.msra.mxu0 0.0
  %157 = vmatprep.subr.mxu0 0.0
  %158 = vmatpush1.msra.mxu0 0.0
  %159 = vmatprep.subr.mxu0 0.0
  %160 = vmatpush1.msra.mxu0 0.0
  %161 = vmatprep.subr.mxu0 0.0
  %162 = vmatpush1.msra.mxu0 0.0
  %163 = vmatprep.subr.mxu0 0.0
  %164 = vmatpush1.msra.mxu0 0.0
  %165 = vmatprep.subr.mxu0 0.0
  %166 = vmatpush1.msra.mxu0 0.0
  %167 = vmatprep.subr.mxu0 0.0
  %168 = vmatpush1.msra.mxu0 0.0
  %169 = vmatprep.subr.mxu0 0.0
  %170 = vmatpush1.msra.mxu0 0.0
  %171 = vmatprep.subr.mxu0 0.0
  %172 = vmatpush1.msra.mxu0 0.0
  %173 = vmatprep.subr.mxu0 0.0
  %174 = vmatpush1.msra.mxu0 0.0
  %175 = vmatprep.subr.mxu0 0.0
  %176 = vmatpush1.msra.mxu0 0.0
  %177 = vmatprep.subr.mxu0 0.0
  %178 = vmatpush1.msra.mxu0 0.0
  %179 = vmatprep.subr.mxu0 0.0
  %180 = vmatpush1.msra.mxu0 0.0
  %181 = vmatprep.subr.mxu0 0.0
  %182 = vmatpush1.msra.mxu0 0.0
  %183 = vmatprep.subr.mxu0 0.0
  %184 = vmatpush1.msra.mxu0 0.0
  %185 = vmatprep.mubr.f32.mxu0 0.0
  %186 = vmatmul.mubr.f32.gmra.mrb[0].mxu0 %v98
  %v187 = vpop.f32.mrb[0].mxu0
  %v188 = vadd.f32 0.0, %v187
  %v189 = vpop.f32.mrb[0].mxu0
  %190 = vmatprep.mubr.f32.mxu0 0.0
  %191 = vmatmul.mubr.f32.gmra.mrb[0].mxu0 %v101
  %v192 = vpop.f32.mrb[0].mxu0
  %v193 = vadd.f32 0.0, %v192
  %v194 = vpop.f32.mrb[0].mxu0
  %195 = vmatprep.mubr.f32.mxu0 0.0
  %196 = vmatmul.mubr.f32.gmra.mrb[0].mxu0 %v104
  %v197 = vpop.f32.mrb[0].mxu0
  %v198 = vadd.f32 0.0, %v197
  %v199 = vpop.f32.mrb[0].mxu0
  %200 = vmatprep.mubr.f32.mxu0 0.0
  %201 = vmatmul.mubr.f32.gmra.mrb[0].mxu0 %v107
  %v202 = vpop.f32.mrb[0].mxu0
  %v203 = vadd.f32 0.0, %v202
  %v204 = vpop.f32.mrb[0].mxu0
  %205 = vmatprep.mubr.f32.mxu0 0.0
  %206 = vmatmul.mubr.f32.gmra.mrb[0].mxu0 %v110
  %v207 = vpop.f32.mrb[0].mxu0
  %v208 = vadd.f32 0.0, %v207
  %v209 = vpop.f32.mrb[0].mxu0
  %210 = vmatprep.mubr.f32.mxu0 0.0
  %211 = vmatmul.mubr.f32.gmra.mrb[0].mxu0 %v113
  %v212 = vpop.f32.mrb[0].mxu0
  %v213 = vadd.f32 0.0, %v212
  %v214 = vpop.f32.mrb[0].mxu0
  %215 = vmatprep.mubr.f32.mxu0 0.0
  %216 = vmatmul.mubr.f32.gmra.mrb[0].mxu0 %v116
  %v217 = vpop.f32.mrb[0].mxu0
  %v218 = vadd.f32 0.0, %v217
  %v219 = vpop.f32.mrb[0].mxu0
  %220 = vmatprep.mubr.f32.mxu0 0.0
  %221 = vmatmul.mubr.f32.gmra.mrb[0].mxu0 %v119
  %v222 = vpop.f32.mrb[0].mxu0
  %v223 = vadd.f32 0.0, %v222
  %v224 = vpop.f32.mrb[0].mxu0
  %225 = vdwg.mxu0
  %v226 = vld [vmem:[%s6] sm:$0xff]
  %v227 = vld [vmem:[%s6 + $0x8] sm:$0xff]
  %v228 = vld [vmem:[%s6 + $0x10] sm:$0xff]
  %v229 = vld [vmem:[%s6 + $0x18] sm:$0xff]
  %v230 = vld [vmem:[%s8] sm:$0x1]
  %v232 = vlaneseq
  %v233 = vshrl.u32 %v232, 7
  %v234 = vsub.s32 0, %v233
  %v235 = vrot.slane %v230, %v234
  %v238 = vsel %vm96, %v83, 0
  %240 = vmatprep.subr.mxu0 0.0
  %241 = vmatpush1.msra.mxu0 %v226
  %242 = vmatprep.subr.mxu0 0.0
  %243 = vmatpush1.msra.mxu0 %v227
  %244 = vmatprep.subr.mxu0 0.0
  %245 = vmatpush1.msra.mxu0 %v228
  %246 = vmatprep.subr.mxu0 0.0
  %247 = vmatpush1.msra.mxu0 %v229
  %248 = vmatprep.subr.mxu0 0.0
  %249 = vmatpush1.msra.mxu0 0.0
  %250 = vmatprep.subr.mxu0 0.0
  %251 = vmatpush1.msra.mxu0 0.0
  %252 = vmatprep.subr.mxu0 0.0
  %253 = vmatpush1.msra.mxu0 0.0
  %254 = vmatprep.subr.mxu0 0.0
  %255 = vmatpush1.msra.mxu0 0.0
  %256 = vmatprep.subr.mxu0 0.0
  %257 = vmatpush1.msra.mxu0 0.0
  %258 = vmatprep.subr.mxu0 0.0
  %259 = vmatpush1.msra.mxu0 0.0
  %260 = vmatprep.subr.mxu0 0.0
  %261 = vmatpush1.msra.mxu0 0.0
  %262 = vmatprep.subr.mxu0 0.0
  %263 = vmatpush1.msra.mxu0 0.0
  %264 = vmatprep.subr.mxu0 0.0
  %265 = vmatpush1.msra.mxu0 0.0
  %266 = vmatprep.subr.mxu0 0.0
  %267 = vmatpush1.msra.mxu0 0.0
  %268 = vmatprep.subr.mxu0 0.0
  %269 = vmatpush1.msra.mxu0 0.0
  %270 = vmatprep.subr.mxu0 0.0
  %271 = vmatpush1.msra.mxu0 0.0
  %272 = vmatprep.subr.mxu0 0.0
  %273 = vmatpush1.msra.mxu0 0.0
  %274 = vmatprep.subr.mxu0 0.0
  %275 = vmatpush1.msra.mxu0 0.0
  %276 = vmatprep.subr.mxu0 0.0
  %277 = vmatpush1.msra.mxu0 0.0
  %278 = vmatprep.subr.mxu0 0.0
  %279 = vmatpush1.msra.mxu0 0.0
  %280 = vmatprep.subr.mxu0 0.0
  %281 = vmatpush1.msra.mxu0 0.0
  %282 = vmatprep.subr.mxu0 0.0
  %283 = vmatpush1.msra.mxu0 0.0
  %284 = vmatprep.subr.mxu0 0.0
  %285 = vmatpush1.msra.mxu0 0.0
  %286 = vmatprep.subr.mxu0 0.0
  %287 = vmatpush1.msra.mxu0 0.0
  %288 = vmatprep.subr.mxu0 0.0
  %289 = vmatpush1.msra.mxu0 0.0
  %290 = vmatprep.subr.mxu0 0.0
  %291 = vmatpush1.msra.mxu0 0.0
  %292 = vmatprep.subr.mxu0 0.0
  %293 = vmatpush1.msra.mxu0 0.0
  %294 = vmatprep.subr.mxu0 0.0
  %295 = vmatpush1.msra.mxu0 0.0
  %296 = vmatprep.subr.mxu0 0.0
  %297 = vmatpush1.msra.mxu0 0.0
  %298 = vmatprep.subr.mxu0 0.0
  %299 = vmatpush1.msra.mxu0 0.0
  %300 = vmatprep.subr.mxu0 0.0
  %301 = vmatpush1.msra.mxu0 0.0
  %302 = vmatprep.subr.mxu0 0.0
  %303 = vmatpush1.msra.mxu0 0.0
  %304 = vmatprep.mubr.f32.mxu0 0.0
  %305 = vmatmul.mubr.f32.gmra.mrb[0].mxu0 %v238
  %v306 = vpop.f32.mrb[0].mxu0
  %v307 = vadd.f32 %v235, %v306
  %v308 = vpop.f32.mrb[0].mxu0
  %309 = vdwg.mxu0
  %v310 = vld [vmem:[%s3] sm:$0xff]
  %v311 = vld [vmem:[%s7] sm:$0xff]
  %v312 = vld [vmem:[%s7 + $0x8] sm:$0xff]
  %v313 = vld [vmem:[%s7 + $0x10] sm:$0xff]
  %v314 = vld [vmem:[%s7 + $0x18] sm:$0xff]
  %v315 = vld [vmem:[%s9] sm:$0x1]
  %v316 = vadd.f32 %v188, %v307
  %v318 = vlaneseq
  %v319 = vshrl.u32 %v318, 7
  %v320 = vsub.s32 0, %v319
  %v321 = vrot.slane %v315, %v320
  %v324 = vsel %vm96, %v310, 0
  %326 = vmatprep.subr.mxu0 0.0
  %327 = vmatpush1.msra.mxu0 %v311
  %328 = vmatprep.subr.mxu0 0.0
  %329 = vmatpush1.msra.mxu0 %v312
  %330 = vmatprep.subr.mxu0 0.0
  %331 = vmatpush1.msra.mxu0 %v313
  %332 = vmatprep.subr.mxu0 0.0
  %333 = vmatpush1.msra.mxu0 %v314
  %334 = vmatprep.subr.mxu0 0.0
  %335 = vmatpush1.msra.mxu0 0.0
  %336 = vmatprep.subr.mxu0 0.0
  %337 = vmatpush1.msra.mxu0 0.0
  %338 = vmatprep.subr.mxu0 0.0
  %339 = vmatpush1.msra.mxu0 0.0
  %340 = vmatprep.subr.mxu0 0.0
  %341 = vmatpush1.msra.mxu0 0.0
  %342 = vmatprep.subr.mxu0 0.0
  %343 = vmatpush1.msra.mxu0 0.0
  %344 = vmatprep.subr.mxu0 0.0
  %345 = vmatpush1.msra.mxu0 0.0
  %346 = vmatprep.subr.mxu0 0.0
  %347 = vmatpush1.msra.mxu0 0.0
  %348 = vmatprep.subr.mxu0 0.0
  %349 = vmatpush1.msra.mxu0 0.0
  %350 = vmatprep.subr.mxu0 0.0
  %351 = vmatpush1.msra.mxu0 0.0
  %352 = vmatprep.subr.mxu0 0.0
  %353 = vmatpush1.msra.mxu0 0.0
  %354 = vmatprep.subr.mxu0 0.0
  %355 = vmatpush1.msra.mxu0 0.0
  %356 = vmatprep.subr.mxu0 0.0
  %357 = vmatpush1.msra.mxu0 0.0
  %358 = vmatprep.subr.mxu0 0.0
  %359 = vmatpush1.msra.mxu0 0.0
  %360 = vmatprep.subr.mxu0 0.0
  %361 = vmatpush1.msra.mxu0 0.0
  %362 = vmatprep.subr.mxu0 0.0
  %363 = vmatpush1.msra.mxu0 0.0
  %364 = vmatprep.subr.mxu0 0.0
  %365 = vmatpush1.msra.mxu0 0.0
  %366 = vmatprep.subr.mxu0 0.0
  %367 = vmatpush1.msra.mxu0 0.0
  %368 = vmatprep.subr.mxu0 0.0
  %369 = vmatpush1.msra.mxu0 0.0
  %370 = vmatprep.subr.mxu0 0.0
  %371 = vmatpush1.msra.mxu0 0.0
  %372 = vmatprep.subr.mxu0 0.0
  %373 = vmatpush1.msra.mxu0 0.0
  %374 = vmatprep.subr.mxu0 0.0
  %375 = vmatpush1.msra.mxu0 0.0
  %376 = vmatprep.subr.mxu0 0.0
  %377 = vmatpush1.msra.mxu0 0.0
  %378 = vmatprep.subr.mxu0 0.0
  %379 = vmatpush1.msra.mxu0 0.0
  %380 = vmatprep.subr.mxu0 0.0
  %381 = vmatpush1.msra.mxu0 0.0
  %382 = vmatprep.subr.mxu0 0.0
  %383 = vmatpush1.msra.mxu0 0.0
  %384 = vmatprep.subr.mxu0 0.0
  %385 = vmatpush1.msra.mxu0 0.0
  %386 = vmatprep.subr.mxu0 0.0
  %387 = vmatpush1.msra.mxu0 0.0
  %388 = vmatprep.subr.mxu0 0.0
  %389 = vmatpush1.msra.mxu0 0.0
  %390 = vmatprep.mubr.f32.mxu0 0.0
  %391 = vmatmul.mubr.f32.gmra.mrb[0].mxu0 %v324
  %v392 = vpop.f32.mrb[0].mxu0
  %v393 = vadd.f32 %v321, %v392
  %v394 = vpop.f32.mrb[0].mxu0
  %395 = vdwg.mxu0
  %v396 = vadd.f32 %v316, %v393
  %v397 = vxor.u32 %v396, 2147483648
  %v398 = vmul.f32 %v397, 1.442695
  %v399 = vpow.pop %v398
  %v400 = vadd.f32 %v399, 1.0
  %v401 = vrcp.pop %v400
  %v402 = vmul.f32 1.0, %v401
  %404 = vrot.lane.b32.xlu0 %v393, 64
  %v405 = vpop.permute.xlu0 %404
  %v407 = vmul.f32 %v402, %v405
  %409 = vrot.lane.b32.xlu0 %v407, 64
  %v410 = vpop.permute.xlu0 %409
  %v412 = vadd.f32 %v316, %v410
  %v413 = vtanh.pop %v412
  %v414 = vsub.f32 1.0, %v402
  %416 = vrot.lane.b32.xlu0 %v413, 96
  %v417 = vpop.permute.xlu0 %416
  %v419 = vmul.f32 %v414, %v417
  %420 = vrot.lane.b32.xlu0 %v310, 32
  %v421 = vpop.permute.xlu0 %420
  %v423 = vmul.f32 %v402, %v421
  %v424 = vadd.f32 %v419, %v423
  %v425 = vadd.f32 %v193, %v307
  %427 = vrot.lane.b32.xlu0 %v424, 96
  %v428 = vpop.permute.xlu0 %427
  %v429 = vsel %vm96, %v428, 0
  %431 = vmatprep.subr.mxu0 0.0
  %432 = vmatpush1.msra.mxu0 %v311
  %433 = vmatprep.subr.mxu0 0.0
  %434 = vmatpush1.msra.mxu0 %v312
  %435 = vmatprep.subr.mxu0 0.0
  %436 = vmatpush1.msra.mxu0 %v313
  %437 = vmatprep.subr.mxu0 0.0
  %438 = vmatpush1.msra.mxu0 %v314
  %439 = vmatprep.subr.mxu0 0.0
  %440 = vmatpush1.msra.mxu0 0.0
  %441 = vmatprep.subr.mxu0 0.0
  %442 = vmatpush1.msra.mxu0 0.0
  %443 = vmatprep.subr.mxu0 0.0
  %444 = vmatpush1.msra.mxu0 0.0
  %445 = vmatprep.subr.mxu0 0.0
  %446 = vmatpush1.msra.mxu0 0.0
  %447 = vmatprep.subr.mxu0 0.0
  %448 = vmatpush1.msra.mxu0 0.0
  %449 = vmatprep.subr.mxu0 0.0
  %450 = vmatpush1.msra.mxu0 0.0
  %451 = vmatprep.subr.mxu0 0.0
  %452 = vmatpush1.msra.mxu0 0.0
  %453 = vmatprep.subr.mxu0 0.0
  %454 = vmatpush1.msra.mxu0 0.0
  %455 = vmatprep.subr.mxu0 0.0
  %456 = vmatpush1.msra.mxu0 0.0
  %457 = vmatprep.subr.mxu0 0.0
  %458 = vmatpush1.msra.mxu0 0.0
  %459 = vmatprep.subr.mxu0 0.0
  %460 = vmatpush1.msra.mxu0 0.0
  %461 = vmatprep.subr.mxu0 0.0
  %462 = vmatpush1.msra.mxu0 0.0
  %463 = vmatprep.subr.mxu0 0.0
  %464 = vmatpush1.msra.mxu0 0.0
  %465 = vmatprep.subr.mxu0 0.0
  %466 = vmatpush1.msra.mxu0 0.0
  %467 = vmatprep.subr.mxu0 0.0
  %468 = vmatpush1.msra.mxu0 0.0
  %469 = vmatprep.subr.mxu0 0.0
  %470 = vmatpush1.msra.mxu0 0.0
  %471 = vmatprep.subr.mxu0 0.0
  %472 = vmatpush1.msra.mxu0 0.0
  %473 = vmatprep.subr.mxu0 0.0
  %474 = vmatpush1.msra.mxu0 0.0
  %475 = vmatprep.subr.mxu0 0.0
  %476 = vmatpush1.msra.mxu0 0.0
  %477 = vmatprep.subr.mxu0 0.0
  %478 = vmatpush1.msra.mxu0 0.0
  %479 = vmatprep.subr.mxu0 0.0
  %480 = vmatpush1.msra.mxu0 0.0
  %481 = vmatprep.subr.mxu0 0.0
  %482 = vmatpush1.msra.mxu0 0.0
  %483 = vmatprep.subr.mxu0 0.0
  %484 = vmatpush1.msra.mxu0 0.0
  %485 = vmatprep.subr.mxu0 0.0
  %486 = vmatpush1.msra.mxu0 0.0
  %487 = vmatprep.subr.mxu0 0.0
  %488 = vmatpush1.msra.mxu0 0.0
  %489 = vmatprep.subr.mxu0 0.0
  %490 = vmatpush1.msra.mxu0 0.0
  %491 = vmatprep.subr.mxu0 0.0
  %492 = vmatpush1.msra.mxu0 0.0
  %493 = vmatprep.subr.mxu0 0.0
  %494 = vmatpush1.msra.mxu0 0.0
  %495 = vmatprep.mubr.f32.mxu0 0.0
  %496 = vmatmul.mubr.f32.gmra.mrb[0].mxu0 %v429
  %v497 = vpop.f32.mrb[0].mxu0
  %v498 = vadd.f32 %v321, %v497
  %v499 = vpop.f32.mrb[0].mxu0
  %500 = vdwg.mxu0
  %v501 = vadd.f32 %v425, %v498
  %v502 = vxor.u32 %v501, 2147483648
  %v503 = vmul.f32 %v502, 1.442695
  %v504 = vpow.pop %v503
  %v505 = vadd.f32 %v504, 1.0
  %v506 = vrcp.pop %v505
  %v507 = vmul.f32 1.0, %v506
  %509 = vrot.lane.b32.xlu0 %v498, 64
  %v510 = vpop.permute.xlu0 %509
  %v512 = vmul.f32 %v507, %v510
  %514 = vrot.lane.b32.xlu0 %v512, 64
  %v515 = vpop.permute.xlu0 %514
  %v517 = vadd.f32 %v425, %v515
  %v518 = vtanh.pop %v517
  %v519 = vsub.f32 1.0, %v507
  %521 = vrot.lane.b32.xlu0 %v518, 96
  %v522 = vpop.permute.xlu0 %521
  %v524 = vmul.f32 %v519, %v522
  %v525 = vmul.f32 %v507, %v424
  %v526 = vadd.f32 %v524, %v525
  %v527 = vadd.f32 %v198, %v307
  %529 = vrot.lane.b32.xlu0 %v526, 96
  %v530 = vpop.permute.xlu0 %529
  %v531 = vsel %vm96, %v530, 0
  %533 = vmatprep.subr.mxu0 0.0
  %534 = vmatpush1.msra.mxu0 %v311
  %535 = vmatprep.subr.mxu0 0.0
  %536 = vmatpush1.msra.mxu0 %v312
  %537 = vmatprep.subr.mxu0 0.0
  %538 = vmatpush1.msra.mxu0 %v313
  %539 = vmatprep.subr.mxu0 0.0
  %540 = vmatpush1.msra.mxu0 %v314
  %541 = vmatprep.subr.mxu0 0.0
  %542 = vmatpush1.msra.mxu0 0.0
  %543 = vmatprep.subr.mxu0 0.0
  %544 = vmatpush1.msra.mxu0 0.0
  %545 = vmatprep.subr.mxu0 0.0
  %546 = vmatpush1.msra.mxu0 0.0
  %547 = vmatprep.subr.mxu0 0.0
  %548 = vmatpush1.msra.mxu0 0.0
  %549 = vmatprep.subr.mxu0 0.0
  %550 = vmatpush1.msra.mxu0 0.0
  %551 = vmatprep.subr.mxu0 0.0
  %552 = vmatpush1.msra.mxu0 0.0
  %553 = vmatprep.subr.mxu0 0.0
  %554 = vmatpush1.msra.mxu0 0.0
  %555 = vmatprep.subr.mxu0 0.0
  %556 = vmatpush1.msra.mxu0 0.0
  %557 = vmatprep.subr.mxu0 0.0
  %558 = vmatpush1.msra.mxu0 0.0
  %559 = vmatprep.subr.mxu0 0.0
  %560 = vmatpush1.msra.mxu0 0.0
  %561 = vmatprep.subr.mxu0 0.0
  %562 = vmatpush1.msra.mxu0 0.0
  %563 = vmatprep.subr.mxu0 0.0
  %564 = vmatpush1.msra.mxu0 0.0
  %565 = vmatprep.subr.mxu0 0.0
  %566 = vmatpush1.msra.mxu0 0.0
  %567 = vmatprep.subr.mxu0 0.0
  %568 = vmatpush1.msra.mxu0 0.0
  %569 = vmatprep.subr.mxu0 0.0
  %570 = vmatpush1.msra.mxu0 0.0
  %571 = vmatprep.subr.mxu0 0.0
  %572 = vmatpush1.msra.mxu0 0.0
  %573 = vmatprep.subr.mxu0 0.0
  %574 = vmatpush1.msra.mxu0 0.0
  %575 = vmatprep.subr.mxu0 0.0
  %576 = vmatpush1.msra.mxu0 0.0
  %577 = vmatprep.subr.mxu0 0.0
  %578 = vmatpush1.msra.mxu0 0.0
  %579 = vmatprep.subr.mxu0 0.0
  %580 = vmatpush1.msra.mxu0 0.0
  %581 = vmatprep.subr.mxu0 0.0
  %582 = vmatpush1.msra.mxu0 0.0
  %583 = vmatprep.subr.mxu0 0.0
  %584 = vmatpush1.msra.mxu0 0.0
  %585 = vmatprep.subr.mxu0 0.0
  %586 = vmatpush1.msra.mxu0 0.0
  %587 = vmatprep.subr.mxu0 0.0
  %588 = vmatpush1.msra.mxu0 0.0
  %589 = vmatprep.subr.mxu0 0.0
  %590 = vmatpush1.msra.mxu0 0.0
  %591 = vmatprep.subr.mxu0 0.0
  %592 = vmatpush1.msra.mxu0 0.0
  %593 = vmatprep.subr.mxu0 0.0
  %594 = vmatpush1.msra.mxu0 0.0
  %595 = vmatprep.subr.mxu0 0.0
  %596 = vmatpush1.msra.mxu0 0.0
  %597 = vmatprep.mubr.f32.mxu0 0.0
  %598 = vmatmul.mubr.f32.gmra.mrb[0].mxu0 %v531
  %v599 = vpop.f32.mrb[0].mxu0
  %v600 = vadd.f32 %v321, %v599
  %v601 = vpop.f32.mrb[0].mxu0
  %602 = vdwg.mxu0
  %v603 = vadd.f32 %v527, %v600
  %v604 = vxor.u32 %v603, 2147483648
  %v605 = vmul.f32 %v604, 1.442695
  %v606 = vpow.pop %v605
  %v607 = vadd.f32 %v606, 1.0
  %v608 = vrcp.pop %v607
  %v609 = vmul.f32 1.0, %v608
  %611 = vrot.lane.b32.xlu0 %v600, 64
  %v612 = vpop.permute.xlu0 %611
  %v614 = vmul.f32 %v609, %v612
  %616 = vrot.lane.b32.xlu0 %v614, 64
  %v617 = vpop.permute.xlu0 %616
  %v619 = vadd.f32 %v527, %v617
  %v620 = vtanh.pop %v619
  %v621 = vsub.f32 1.0, %v609
  %623 = vrot.lane.b32.xlu0 %v620, 96
  %v624 = vpop.permute.xlu0 %623
  %v626 = vmul.f32 %v621, %v624
  %v627 = vmul.f32 %v609, %v526
  %v628 = vadd.f32 %v626, %v627
  %v629 = vadd.f32 %v203, %v307
  %631 = vrot.lane.b32.xlu0 %v628, 96
  %v632 = vpop.permute.xlu0 %631
  %v633 = vsel %vm96, %v632, 0
  %635 = vmatprep.subr.mxu0 0.0
  %636 = vmatpush1.msra.mxu0 %v311
  %637 = vmatprep.subr.mxu0 0.0
  %638 = vmatpush1.msra.mxu0 %v312
  %639 = vmatprep.subr.mxu0 0.0
  %640 = vmatpush1.msra.mxu0 %v313
  %641 = vmatprep.subr.mxu0 0.0
  %642 = vmatpush1.msra.mxu0 %v314
  %643 = vmatprep.subr.mxu0 0.0
  %644 = vmatpush1.msra.mxu0 0.0
  %645 = vmatprep.subr.mxu0 0.0
  %646 = vmatpush1.msra.mxu0 0.0
  %647 = vmatprep.subr.mxu0 0.0
  %648 = vmatpush1.msra.mxu0 0.0
  %649 = vmatprep.subr.mxu0 0.0
  %650 = vmatpush1.msra.mxu0 0.0
  %651 = vmatprep.subr.mxu0 0.0
  %652 = vmatpush1.msra.mxu0 0.0
  %653 = vmatprep.subr.mxu0 0.0
  %654 = vmatpush1.msra.mxu0 0.0
  %655 = vmatprep.subr.mxu0 0.0
  %656 = vmatpush1.msra.mxu0 0.0
  %657 = vmatprep.subr.mxu0 0.0
  %658 = vmatpush1.msra.mxu0 0.0
  %659 = vmatprep.subr.mxu0 0.0
  %660 = vmatpush1.msra.mxu0 0.0
  %661 = vmatprep.subr.mxu0 0.0
  %662 = vmatpush1.msra.mxu0 0.0
  %663 = vmatprep.subr.mxu0 0.0
  %664 = vmatpush1.msra.mxu0 0.0
  %665 = vmatprep.subr.mxu0 0.0
  %666 = vmatpush1.msra.mxu0 0.0
  %667 = vmatprep.subr.mxu0 0.0
  %668 = vmatpush1.msra.mxu0 0.0
  %669 = vmatprep.subr.mxu0 0.0
  %670 = vmatpush1.msra.mxu0 0.0
  %671 = vmatprep.subr.mxu0 0.0
  %672 = vmatpush1.msra.mxu0 0.0
  %673 = vmatprep.subr.mxu0 0.0
  %674 = vmatpush1.msra.mxu0 0.0
  %675 = vmatprep.subr.mxu0 0.0
  %676 = vmatpush1.msra.mxu0 0.0
  %677 = vmatprep.subr.mxu0 0.0
  %678 = vmatpush1.msra.mxu0 0.0
  %679 = vmatprep.subr.mxu0 0.0
  %680 = vmatpush1.msra.mxu0 0.0
  %681 = vmatprep.subr.mxu0 0.0
  %682 = vmatpush1.msra.mxu0 0.0
  %683 = vmatprep.subr.mxu0 0.0
  %684 = vmatpush1.msra.mxu0 0.0
  %685 = vmatprep.subr.mxu0 0.0
  %686 = vmatpush1.msra.mxu0 0.0
  %687 = vmatprep.subr.mxu0 0.0
  %688 = vmatpush1.msra.mxu0 0.0
  %689 = vmatprep.subr.mxu0 0.0
  %690 = vmatpush1.msra.mxu0 0.0
  %691 = vmatprep.subr.mxu0 0.0
  %692 = vmatpush1.msra.mxu0 0.0
  %693 = vmatprep.subr.mxu0 0.0
  %694 = vmatpush1.msra.mxu0 0.0
  %695 = vmatprep.subr.mxu0 0.0
  %696 = vmatpush1.msra.mxu0 0.0
  %697 = vmatprep.subr.mxu0 0.0
  %698 = vmatpush1.msra.mxu0 0.0
  %699 = vmatprep.mubr.f32.mxu0 0.0
  %700 = vmatmul.mubr.f32.gmra.mrb[0].mxu0 %v633
  %v701 = vpop.f32.mrb[0].mxu0
  %v702 = vadd.f32 %v321, %v701
  %v703 = vpop.f32.mrb[0].mxu0
  %704 = vdwg.mxu0
  %v705 = vadd.f32 %v629, %v702
  %v706 = vxor.u32 %v705, 2147483648
  %v707 = vmul.f32 %v706, 1.442695
  %v708 = vpow.pop %v707
  %v709 = vadd.f32 %v708, 1.0
  %v710 = vrcp.pop %v709
  %v711 = vmul.f32 1.0, %v710
  %713 = vrot.lane.b32.xlu0 %v702, 64
  %v714 = vpop.permute.xlu0 %713
  %v716 = vmul.f32 %v711, %v714
  %718 = vrot.lane.b32.xlu0 %v716, 64
  %v719 = vpop.permute.xlu0 %718
  %v721 = vadd.f32 %v629, %v719
  %v722 = vtanh.pop %v721
  %v723 = vsub.f32 1.0, %v711
  %725 = vrot.lane.b32.xlu0 %v722, 96
  %v726 = vpop.permute.xlu0 %725
  %v728 = vmul.f32 %v723, %v726
  %v729 = vmul.f32 %v711, %v628
  %v730 = vadd.f32 %v728, %v729
  %v731 = vadd.f32 %v208, %v307
  %733 = vrot.lane.b32.xlu0 %v730, 96
  %v734 = vpop.permute.xlu0 %733
  %v735 = vsel %vm96, %v734, 0
  %737 = vmatprep.subr.mxu0 0.0
  %738 = vmatpush1.msra.mxu0 %v311
  %739 = vmatprep.subr.mxu0 0.0
  %740 = vmatpush1.msra.mxu0 %v312
  %741 = vmatprep.subr.mxu0 0.0
  %742 = vmatpush1.msra.mxu0 %v313
  %743 = vmatprep.subr.mxu0 0.0
  %744 = vmatpush1.msra.mxu0 %v314
  %745 = vmatprep.subr.mxu0 0.0
  %746 = vmatpush1.msra.mxu0 0.0
  %747 = vmatprep.subr.mxu0 0.0
  %748 = vmatpush1.msra.mxu0 0.0
  %749 = vmatprep.subr.mxu0 0.0
  %750 = vmatpush1.msra.mxu0 0.0
  %751 = vmatprep.subr.mxu0 0.0
  %752 = vmatpush1.msra.mxu0 0.0
  %753 = vmatprep.subr.mxu0 0.0
  %754 = vmatpush1.msra.mxu0 0.0
  %755 = vmatprep.subr.mxu0 0.0
  %756 = vmatpush1.msra.mxu0 0.0
  %757 = vmatprep.subr.mxu0 0.0
  %758 = vmatpush1.msra.mxu0 0.0
  %759 = vmatprep.subr.mxu0 0.0
  %760 = vmatpush1.msra.mxu0 0.0
  %761 = vmatprep.subr.mxu0 0.0
  %762 = vmatpush1.msra.mxu0 0.0
  %763 = vmatprep.subr.mxu0 0.0
  %764 = vmatpush1.msra.mxu0 0.0
  %765 = vmatprep.subr.mxu0 0.0
  %766 = vmatpush1.msra.mxu0 0.0
  %767 = vmatprep.subr.mxu0 0.0
  %768 = vmatpush1.msra.mxu0 0.0
  %769 = vmatprep.subr.mxu0 0.0
  %770 = vmatpush1.msra.mxu0 0.0
  %771 = vmatprep.subr.mxu0 0.0
  %772 = vmatpush1.msra.mxu0 0.0
  %773 = vmatprep.subr.mxu0 0.0
  %774 = vmatpush1.msra.mxu0 0.0
  %775 = vmatprep.subr.mxu0 0.0
  %776 = vmatpush1.msra.mxu0 0.0
  %777 = vmatprep.subr.mxu0 0.0
  %778 = vmatpush1.msra.mxu0 0.0
  %779 = vmatprep.subr.mxu0 0.0
  %780 = vmatpush1.msra.mxu0 0.0
  %781 = vmatprep.subr.mxu0 0.0
  %782 = vmatpush1.msra.mxu0 0.0
  %783 = vmatprep.subr.mxu0 0.0
  %784 = vmatpush1.msra.mxu0 0.0
  %785 = vmatprep.subr.mxu0 0.0
  %786 = vmatpush1.msra.mxu0 0.0
  %787 = vmatprep.subr.mxu0 0.0
  %788 = vmatpush1.msra.mxu0 0.0
  %789 = vmatprep.subr.mxu0 0.0
  %790 = vmatpush1.msra.mxu0 0.0
  %791 = vmatprep.subr.mxu0 0.0
  %792 = vmatpush1.msra.mxu0 0.0
  %793 = vmatprep.subr.mxu0 0.0
  %794 = vmatpush1.msra.mxu0 0.0
  %795 = vmatprep.subr.mxu0 0.0
  %796 = vmatpush1.msra.mxu0 0.0
  %797 = vmatprep.subr.mxu0 0.0
  %798 = vmatpush1.msra.mxu0 0.0
  %799 = vmatprep.subr.mxu0 0.0
  %800 = vmatpush1.msra.mxu0 0.0
  %801 = vmatprep.mubr.f32.mxu0 0.0
  %802 = vmatmul.mubr.f32.gmra.mrb[0].mxu0 %v735
  %v803 = vpop.f32.mrb[0].mxu0
  %v804 = vadd.f32 %v321, %v803
  %v805 = vpop.f32.mrb[0].mxu0
  %806 = vdwg.mxu0
  %v807 = vadd.f32 %v731, %v804
  %v808 = vxor.u32 %v807, 2147483648
  %v809 = vmul.f32 %v808, 1.442695
  %v810 = vpow.pop %v809
  %v811 = vadd.f32 %v810, 1.0
  %v812 = vrcp.pop %v811
  %v813 = vmul.f32 1.0, %v812
  %815 = vrot.lane.b32.xlu0 %v804, 64
  %v816 = vpop.permute.xlu0 %815
  %v818 = vmul.f32 %v813, %v816
  %820 = vrot.lane.b32.xlu0 %v818, 64
  %v821 = vpop.permute.xlu0 %820
  %v823 = vadd.f32 %v731, %v821
  %v824 = vtanh.pop %v823
  %v825 = vsub.f32 1.0, %v813
  %827 = vrot.lane.b32.xlu0 %v824, 96
  %v828 = vpop.permute.xlu0 %827
  %v830 = vmul.f32 %v825, %v828
  %v831 = vmul.f32 %v813, %v730
  %v832 = vadd.f32 %v830, %v831
  %v833 = vadd.f32 %v213, %v307
  %835 = vrot.lane.b32.xlu0 %v832, 96
  %v836 = vpop.permute.xlu0 %835
  %v837 = vsel %vm96, %v836, 0
  %839 = vmatprep.subr.mxu0 0.0
  %840 = vmatpush1.msra.mxu0 %v311
  %841 = vmatprep.subr.mxu0 0.0
  %842 = vmatpush1.msra.mxu0 %v312
  %843 = vmatprep.subr.mxu0 0.0
  %844 = vmatpush1.msra.mxu0 %v313
  %845 = vmatprep.subr.mxu0 0.0
  %846 = vmatpush1.msra.mxu0 %v314
  %847 = vmatprep.subr.mxu0 0.0
  %848 = vmatpush1.msra.mxu0 0.0
  %849 = vmatprep.subr.mxu0 0.0
  %850 = vmatpush1.msra.mxu0 0.0
  %851 = vmatprep.subr.mxu0 0.0
  %852 = vmatpush1.msra.mxu0 0.0
  %853 = vmatprep.subr.mxu0 0.0
  %854 = vmatpush1.msra.mxu0 0.0
  %855 = vmatprep.subr.mxu0 0.0
  %856 = vmatpush1.msra.mxu0 0.0
  %857 = vmatprep.subr.mxu0 0.0
  %858 = vmatpush1.msra.mxu0 0.0
  %859 = vmatprep.subr.mxu0 0.0
  %860 = vmatpush1.msra.mxu0 0.0
  %861 = vmatprep.subr.mxu0 0.0
  %862 = vmatpush1.msra.mxu0 0.0
  %863 = vmatprep.subr.mxu0 0.0
  %864 = vmatpush1.msra.mxu0 0.0
  %865 = vmatprep.subr.mxu0 0.0
  %866 = vmatpush1.msra.mxu0 0.0
  %867 = vmatprep.subr.mxu0 0.0
  %868 = vmatpush1.msra.mxu0 0.0
  %869 = vmatprep.subr.mxu0 0.0
  %870 = vmatpush1.msra.mxu0 0.0
  %871 = vmatprep.subr.mxu0 0.0
  %872 = vmatpush1.msra.mxu0 0.0
  %873 = vmatprep.subr.mxu0 0.0
  %874 = vmatpush1.msra.mxu0 0.0
  %875 = vmatprep.subr.mxu0 0.0
  %876 = vmatpush1.msra.mxu0 0.0
  %877 = vmatprep.subr.mxu0 0.0
  %878 = vmatpush1.msra.mxu0 0.0
  %879 = vmatprep.subr.mxu0 0.0
  %880 = vmatpush1.msra.mxu0 0.0
  %881 = vmatprep.subr.mxu0 0.0
  %882 = vmatpush1.msra.mxu0 0.0
  %883 = vmatprep.subr.mxu0 0.0
  %884 = vmatpush1.msra.mxu0 0.0
  %885 = vmatprep.subr.mxu0 0.0
  %886 = vmatpush1.msra.mxu0 0.0
  %887 = vmatprep.subr.mxu0 0.0
  %888 = vmatpush1.msra.mxu0 0.0
  %889 = vmatprep.subr.mxu0 0.0
  %890 = vmatpush1.msra.mxu0 0.0
  %891 = vmatprep.subr.mxu0 0.0
  %892 = vmatpush1.msra.mxu0 0.0
  %893 = vmatprep.subr.mxu0 0.0
  %894 = vmatpush1.msra.mxu0 0.0
  %895 = vmatprep.subr.mxu0 0.0
  %896 = vmatpush1.msra.mxu0 0.0
  %897 = vmatprep.subr.mxu0 0.0
  %898 = vmatpush1.msra.mxu0 0.0
  %899 = vmatprep.subr.mxu0 0.0
  %900 = vmatpush1.msra.mxu0 0.0
  %901 = vmatprep.subr.mxu0 0.0
  %902 = vmatpush1.msra.mxu0 0.0
  %903 = vmatprep.mubr.f32.mxu0 0.0
  %904 = vmatmul.mubr.f32.gmra.mrb[0].mxu0 %v837
  %v905 = vpop.f32.mrb[0].mxu0
  %v906 = vadd.f32 %v321, %v905
  %v907 = vpop.f32.mrb[0].mxu0
  %908 = vdwg.mxu0
  %v909 = vadd.f32 %v833, %v906
  %v910 = vxor.u32 %v909, 2147483648
  %v911 = vmul.f32 %v910, 1.442695
  %v912 = vpow.pop %v911
  %v913 = vadd.f32 %v912, 1.0
  %v914 = vrcp.pop %v913
  %v915 = vmul.f32 1.0, %v914
  %917 = vrot.lane.b32.xlu0 %v906, 64
  %v918 = vpop.permute.xlu0 %917
  %v920 = vmul.f32 %v915, %v918
  %922 = vrot.lane.b32.xlu0 %v920, 64
  %v923 = vpop.permute.xlu0 %922
  %v925 = vadd.f32 %v833, %v923
  %v926 = vtanh.pop %v925
  %v927 = vsub.f32 1.0, %v915
  %929 = vrot.lane.b32.xlu0 %v926, 96
  %v930 = vpop.permute.xlu0 %929
  %v932 = vmul.f32 %v927, %v930
  %v933 = vmul.f32 %v915, %v832
  %v934 = vadd.f32 %v932, %v933
  %v935 = vadd.f32 %v218, %v307
  %937 = vrot.lane.b32.xlu0 %v934, 96
  %v938 = vpop.permute.xlu0 %937
  %v939 = vsel %vm96, %v938, 0
  %941 = vmatprep.subr.mxu0 0.0
  %942 = vmatpush1.msra.mxu0 %v311
  %943 = vmatprep.subr.mxu0 0.0
  %944 = vmatpush1.msra.mxu0 %v312
  %945 = vmatprep.subr.mxu0 0.0
  %946 = vmatpush1.msra.mxu0 %v313
  %947 = vmatprep.subr.mxu0 0.0
  %948 = vmatpush1.msra.mxu0 %v314
  %949 = vmatprep.subr.mxu0 0.0
  %950 = vmatpush1.msra.mxu0 0.0
  %951 = vmatprep.subr.mxu0 0.0
  %952 = vmatpush1.msra.mxu0 0.0
  %953 = vmatprep.subr.mxu0 0.0
  %954 = vmatpush1.msra.mxu0 0.0
  %955 = vmatprep.subr.mxu0 0.0
  %956 = vmatpush1.msra.mxu0 0.0
  %957 = vmatprep.subr.mxu0 0.0
  %958 = vmatpush1.msra.mxu0 0.0
  %959 = vmatprep.subr.mxu0 0.0
  %960 = vmatpush1.msra.mxu0 0.0
  %961 = vmatprep.subr.mxu0 0.0
  %962 = vmatpush1.msra.mxu0 0.0
  %963 = vmatprep.subr.mxu0 0.0
  %964 = vmatpush1.msra.mxu0 0.0
  %965 = vmatprep.subr.mxu0 0.0
  %966 = vmatpush1.msra.mxu0 0.0
  %967 = vmatprep.subr.mxu0 0.0
  %968 = vmatpush1.msra.mxu0 0.0
  %969 = vmatprep.subr.mxu0 0.0
  %970 = vmatpush1.msra.mxu0 0.0
  %971 = vmatprep.subr.mxu0 0.0
  %972 = vmatpush1.msra.mxu0 0.0
  %973 = vmatprep.subr.mxu0 0.0
  %974 = vmatpush1.msra.mxu0 0.0
  %975 = vmatprep.subr.mxu0 0.0
  %976 = vmatpush1.msra.mxu0 0.0
  %977 = vmatprep.subr.mxu0 0.0
  %978 = vmatpush1.msra.mxu0 0.0
  %979 = vmatprep.subr.mxu0 0.0
  %980 = vmatpush1.msra.mxu0 0.0
  %981 = vmatprep.subr.mxu0 0.0
  %982 = vmatpush1.msra.mxu0 0.0
  %983 = vmatprep.subr.mxu0 0.0
  %984 = vmatpush1.msra.mxu0 0.0
  %985 = vmatprep.subr.mxu0 0.0
  %986 = vmatpush1.msra.mxu0 0.0
  %987 = vmatprep.subr.mxu0 0.0
  %988 = vmatpush1.msra.mxu0 0.0
  %989 = vmatprep.subr.mxu0 0.0
  %990 = vmatpush1.msra.mxu0 0.0
  %991 = vmatprep.subr.mxu0 0.0
  %992 = vmatpush1.msra.mxu0 0.0
  %993 = vmatprep.subr.mxu0 0.0
  %994 = vmatpush1.msra.mxu0 0.0
  %995 = vmatprep.subr.mxu0 0.0
  %996 = vmatpush1.msra.mxu0 0.0
  %997 = vmatprep.subr.mxu0 0.0
  %998 = vmatpush1.msra.mxu0 0.0
  %999 = vmatprep.subr.mxu0 0.0
  %1000 = vmatpush1.msra.mxu0 0.0
  %1001 = vmatprep.subr.mxu0 0.0
  %1002 = vmatpush1.msra.mxu0 0.0
  %1003 = vmatprep.subr.mxu0 0.0
  %1004 = vmatpush1.msra.mxu0 0.0
  %1005 = vmatprep.mubr.f32.mxu0 0.0
  %1006 = vmatmul.mubr.f32.gmra.mrb[0].mxu0 %v939
  %v1007 = vpop.f32.mrb[0].mxu0
  %v1008 = vadd.f32 %v321, %v1007
  %v1009 = vpop.f32.mrb[0].mxu0
  %1010 = vdwg.mxu0
  %v1011 = vadd.f32 %v935, %v1008
  %v1012 = vxor.u32 %v1011, 2147483648
  %v1013 = vmul.f32 %v1012, 1.442695
  %v1014 = vpow.pop %v1013
  %v1015 = vadd.f32 %v1014, 1.0
  %v1016 = vrcp.pop %v1015
  %v1017 = vmul.f32 1.0, %v1016
  %1019 = vrot.lane.b32.xlu0 %v1008, 64
  %v1020 = vpop.permute.xlu0 %1019
  %v1022 = vmul.f32 %v1017, %v1020
  %1024 = vrot.lane.b32.xlu0 %v1022, 64
  %v1025 = vpop.permute.xlu0 %1024
  %v1027 = vadd.f32 %v935, %v1025
  %v1028 = vtanh.pop %v1027
  %v1029 = vsub.f32 1.0, %v1017
  %1031 = vrot.lane.b32.xlu0 %v1028, 96
  %v1032 = vpop.permute.xlu0 %1031
  %v1034 = vmul.f32 %v1029, %v1032
  %v1035 = vmul.f32 %v1017, %v934
  %v1036 = vadd.f32 %v1034, %v1035
  %v1037 = vadd.f32 %v223, %v307
  %1039 = vrot.lane.b32.xlu0 %v1036, 96
  %v1040 = vpop.permute.xlu0 %1039
  %v1041 = vsel %vm96, %v1040, 0
  %1043 = vmatprep.subr.mxu0 0.0
  %1044 = vmatpush1.msra.mxu0 %v311
  %1045 = vmatprep.subr.mxu0 0.0
  %1046 = vmatpush1.msra.mxu0 %v312
  %1047 = vmatprep.subr.mxu0 0.0
  %1048 = vmatpush1.msra.mxu0 %v313
  %1049 = vmatprep.subr.mxu0 0.0
  %1050 = vmatpush1.msra.mxu0 %v314
  %1051 = vmatprep.subr.mxu0 0.0
  %1052 = vmatpush1.msra.mxu0 0.0
  %1053 = vmatprep.subr.mxu0 0.0
  %1054 = vmatpush1.msra.mxu0 0.0
  %1055 = vmatprep.subr.mxu0 0.0
  %1056 = vmatpush1.msra.mxu0 0.0
  %1057 = vmatprep.subr.mxu0 0.0
  %1058 = vmatpush1.msra.mxu0 0.0
  %1059 = vmatprep.subr.mxu0 0.0
  %1060 = vmatpush1.msra.mxu0 0.0
  %1061 = vmatprep.subr.mxu0 0.0
  %1062 = vmatpush1.msra.mxu0 0.0
  %1063 = vmatprep.subr.mxu0 0.0
  %1064 = vmatpush1.msra.mxu0 0.0
  %1065 = vmatprep.subr.mxu0 0.0
  %1066 = vmatpush1.msra.mxu0 0.0
  %1067 = vmatprep.subr.mxu0 0.0
  %1068 = vmatpush1.msra.mxu0 0.0
  %1069 = vmatprep.subr.mxu0 0.0
  %1070 = vmatpush1.msra.mxu0 0.0
  %1071 = vmatprep.subr.mxu0 0.0
  %1072 = vmatpush1.msra.mxu0 0.0
  %1073 = vmatprep.subr.mxu0 0.0
  %1074 = vmatpush1.msra.mxu0 0.0
  %1075 = vmatprep.subr.mxu0 0.0
  %1076 = vmatpush1.msra.mxu0 0.0
  %1077 = vmatprep.subr.mxu0 0.0
  %1078 = vmatpush1.msra.mxu0 0.0
  %1079 = vmatprep.subr.mxu0 0.0
  %1080 = vmatpush1.msra.mxu0 0.0
  %1081 = vmatprep.subr.mxu0 0.0
  %1082 = vmatpush1.msra.mxu0 0.0
  %1083 = vmatprep.subr.mxu0 0.0
  %1084 = vmatpush1.msra.mxu0 0.0
  %1085 = vmatprep.subr.mxu0 0.0
  %1086 = vmatpush1.msra.mxu0 0.0
  %1087 = vmatprep.subr.mxu0 0.0
  %1088 = vmatpush1.msra.mxu0 0.0
  %1089 = vmatprep.subr.mxu0 0.0
  %1090 = vmatpush1.msra.mxu0 0.0
  %1091 = vmatprep.subr.mxu0 0.0
  %1092 = vmatpush1.msra.mxu0 0.0
  %1093 = vmatprep.subr.mxu0 0.0
  %1094 = vmatpush1.msra.mxu0 0.0
  %1095 = vmatprep.subr.mxu0 0.0
  %1096 = vmatpush1.msra.mxu0 0.0
  %1097 = vmatprep.subr.mxu0 0.0
  %1098 = vmatpush1.msra.mxu0 0.0
  %1099 = vmatprep.subr.mxu0 0.0
  %1100 = vmatpush1.msra.mxu0 0.0
  %1101 = vmatprep.subr.mxu0 0.0
  %1102 = vmatpush1.msra.mxu0 0.0
  %1103 = vmatprep.subr.mxu0 0.0
  %1104 = vmatpush1.msra.mxu0 0.0
  %1105 = vmatprep.subr.mxu0 0.0
  %1106 = vmatpush1.msra.mxu0 0.0
  %1107 = vmatprep.mubr.f32.mxu0 0.0
  %1108 = vmatmul.mubr.f32.gmra.mrb[0].mxu0 %v1041
  %v1109 = vpop.f32.mrb[0].mxu0
  %v1110 = vadd.f32 %v321, %v1109
  %v1111 = vpop.f32.mrb[0].mxu0
  %1112 = vdwg.mxu0
  %v1113 = vadd.f32 %v1037, %v1110
  %v1114 = vxor.u32 %v1113, 2147483648
  %v1115 = vmul.f32 %v1114, 1.442695
  %v1116 = vpow.pop %v1115
  %v1117 = vadd.f32 %v1116, 1.0
  %v1118 = vrcp.pop %v1117
  %v1119 = vmul.f32 1.0, %v1118
  %1121 = vrot.lane.b32.xlu0 %v1110, 64
  %v1122 = vpop.permute.xlu0 %1121
  %v1124 = vmul.f32 %v1119, %v1122
  %1126 = vrot.lane.b32.xlu0 %v1124, 64
  %v1127 = vpop.permute.xlu0 %1126
  %v1129 = vadd.f32 %v1037, %v1127
  %v1130 = vtanh.pop %v1129
  %v1131 = vsub.f32 1.0, %v1119
  %1133 = vrot.lane.b32.xlu0 %v1130, 96
  %v1134 = vpop.permute.xlu0 %1133
  %v1136 = vmul.f32 %v1131, %v1134
  %v1137 = vmul.f32 %v1119, %v1036
  %v1138 = vadd.f32 %v1136, %v1137
  %v1139 = vld [vmem:[%s1] sm:$0xff]
  %v1140 = vld [vmem:[%s1 + $0x8] sm:$0xff]
  %v1141 = vld [vmem:[%s1 + $0x10] sm:$0xff]
  %v1142 = vld [vmem:[%s1 + $0x18] sm:$0xff]
  %v1143 = vld [vmem:[%s1 + $0x20] sm:$0xff]
  %v1144 = vld [vmem:[%s1 + $0x28] sm:$0xff]
  %v1145 = vld [vmem:[%s10] sm:$0xff]
  %v1146 = vld [vmem:[%s10 + $0x8] sm:$0xff]
  %v1147 = vld [vmem:[%s10 + $0x10] sm:$0xff]
  %v1148 = vld [vmem:[%s10 + $0x18] sm:$0xff]
  %v1150 = vsel %vm96, %v1139, 0
  %v1153 = vsel %vm96, %v1140, 0
  %v1156 = vsel %vm96, %v1141, 0
  %v1159 = vsel %vm96, %v1142, 0
  %v1162 = vsel %vm96, %v1143, 0
  %v1165 = vsel %vm96, %v1144, 0
  %1167 = vmatprep.subr.mxu0 0.0
  %1168 = vmatpush1.msra.mxu0 %v1145
  %1169 = vmatprep.subr.mxu0 0.0
  %1170 = vmatpush1.msra.mxu0 %v1146
  %1171 = vmatprep.subr.mxu0 0.0
  %1172 = vmatpush1.msra.mxu0 %v1147
  %1173 = vmatprep.subr.mxu0 0.0
  %1174 = vmatpush1.msra.mxu0 %v1148
  %1175 = vmatprep.subr.mxu0 0.0
  %1176 = vmatpush1.msra.mxu0 0.0
  %1177 = vmatprep.subr.mxu0 0.0
  %1178 = vmatpush1.msra.mxu0 0.0
  %1179 = vmatprep.subr.mxu0 0.0
  %1180 = vmatpush1.msra.mxu0 0.0
  %1181 = vmatprep.subr.mxu0 0.0
  %1182 = vmatpush1.msra.mxu0 0.0
  %1183 = vmatprep.subr.mxu0 0.0
  %1184 = vmatpush1.msra.mxu0 0.0
  %1185 = vmatprep.subr.mxu0 0.0
  %1186 = vmatpush1.msra.mxu0 0.0
  %1187 = vmatprep.subr.mxu0 0.0
  %1188 = vmatpush1.msra.mxu0 0.0
  %1189 = vmatprep.subr.mxu0 0.0
  %1190 = vmatpush1.msra.mxu0 0.0
  %1191 = vmatprep.subr.mxu0 0.0
  %1192 = vmatpush1.msra.mxu0 0.0
  %1193 = vmatprep.subr.mxu0 0.0
  %1194 = vmatpush1.msra.mxu0 0.0
  %1195 = vmatprep.subr.mxu0 0.0
  %1196 = vmatpush1.msra.mxu0 0.0
  %1197 = vmatprep.subr.mxu0 0.0
  %1198 = vmatpush1.msra.mxu0 0.0
  %1199 = vmatprep.subr.mxu0 0.0
  %1200 = vmatpush1.msra.mxu0 0.0
  %1201 = vmatprep.subr.mxu0 0.0
  %1202 = vmatpush1.msra.mxu0 0.0
  %1203 = vmatprep.subr.mxu0 0.0
  %1204 = vmatpush1.msra.mxu0 0.0
  %1205 = vmatprep.subr.mxu0 0.0
  %1206 = vmatpush1.msra.mxu0 0.0
  %1207 = vmatprep.subr.mxu0 0.0
  %1208 = vmatpush1.msra.mxu0 0.0
  %1209 = vmatprep.subr.mxu0 0.0
  %1210 = vmatpush1.msra.mxu0 0.0
  %1211 = vmatprep.subr.mxu0 0.0
  %1212 = vmatpush1.msra.mxu0 0.0
  %1213 = vmatprep.subr.mxu0 0.0
  %1214 = vmatpush1.msra.mxu0 0.0
  %1215 = vmatprep.subr.mxu0 0.0
  %1216 = vmatpush1.msra.mxu0 0.0
  %1217 = vmatprep.subr.mxu0 0.0
  %1218 = vmatpush1.msra.mxu0 0.0
  %1219 = vmatprep.subr.mxu0 0.0
  %1220 = vmatpush1.msra.mxu0 0.0
  %1221 = vmatprep.subr.mxu0 0.0
  %1222 = vmatpush1.msra.mxu0 0.0
  %1223 = vmatprep.subr.mxu0 0.0
  %1224 = vmatpush1.msra.mxu0 0.0
  %1225 = vmatprep.subr.mxu0 0.0
  %1226 = vmatpush1.msra.mxu0 0.0
  %1227 = vmatprep.subr.mxu0 0.0
  %1228 = vmatpush1.msra.mxu0 0.0
  %1229 = vmatprep.subr.mxu0 0.0
  %1230 = vmatpush1.msra.mxu0 0.0
  %1231 = vmatprep.mubr.f32.mxu0 0.0
  %1232 = vmatmul.mubr.f32.gmra.mrb[0].mxu0 %v1150
  %v1233 = vpop.f32.mrb[0].mxu0
  %v1234 = vadd.f32 0.0, %v1233
  %v1235 = vpop.f32.mrb[0].mxu0
  %1236 = vmatprep.mubr.f32.mxu0 0.0
  %1237 = vmatmul.mubr.f32.gmra.mrb[0].mxu0 %v1153
  %v1238 = vpop.f32.mrb[0].mxu0
  %v1239 = vadd.f32 0.0, %v1238
  %v1240 = vpop.f32.mrb[0].mxu0
  %1241 = vmatprep.mubr.f32.mxu0 0.0
  %1242 = vmatmul.mubr.f32.gmra.mrb[0].mxu0 %v1156
  %v1243 = vpop.f32.mrb[0].mxu0
  %v1244 = vadd.f32 0.0, %v1243
  %v1245 = vpop.f32.mrb[0].mxu0
  %1246 = vmatprep.mubr.f32.mxu0 0.0
  %1247 = vmatmul.mubr.f32.gmra.mrb[0].mxu0 %v1159
  %v1248 = vpop.f32.mrb[0].mxu0
  %v1249 = vadd.f32 0.0, %v1248
  %v1250 = vpop.f32.mrb[0].mxu0
  %1251 = vmatprep.mubr.f32.mxu0 0.0
  %1252 = vmatmul.mubr.f32.gmra.mrb[0].mxu0 %v1162
  %v1253 = vpop.f32.mrb[0].mxu0
  %v1254 = vadd.f32 0.0, %v1253
  %v1255 = vpop.f32.mrb[0].mxu0
  %1256 = vmatprep.mubr.f32.mxu0 0.0
  %1257 = vmatmul.mubr.f32.gmra.mrb[0].mxu0 %v1165
  %v1258 = vpop.f32.mrb[0].mxu0
  %v1259 = vadd.f32 0.0, %v1258
  %v1260 = vpop.f32.mrb[0].mxu0
  %1261 = vdwg.mxu0
  %v1262 = vld [vmem:[%s12] sm:$0x1]
  %v1263 = vld [vmem:[%s4] sm:$0xff]
  %v1264 = vld [vmem:[%s11] sm:$0xff]
  %v1265 = vld [vmem:[%s11 + $0x8] sm:$0xff]
  %v1266 = vld [vmem:[%s11 + $0x10] sm:$0xff]
  %v1267 = vld [vmem:[%s11 + $0x18] sm:$0xff]
  %v1268 = vld [vmem:[%s13] sm:$0x1]
  %v1270 = vlaneseq
  %v1271 = vshrl.u32 %v1270, 7
  %v1272 = vsub.s32 0, %v1271
  %v1273 = vrot.slane %v1262, %v1272
  %v1275 = vadd.f32 %v1234, %v1273
  %v1277 = vlaneseq
  %v1278 = vshrl.u32 %v1277, 7
  %v1279 = vsub.s32 0, %v1278
  %v1280 = vrot.slane %v1268, %v1279
  %v1283 = vsel %vm96, %v1263, 0
  %1285 = vmatprep.subr.mxu0 0.0
  %1286 = vmatpush1.msra.mxu0 %v1264
  %1287 = vmatprep.subr.mxu0 0.0
  %1288 = vmatpush1.msra.mxu0 %v1265
  %1289 = vmatprep.subr.mxu0 0.0
  %1290 = vmatpush1.msra.mxu0 %v1266
  %1291 = vmatprep.subr.mxu0 0.0
  %1292 = vmatpush1.msra.mxu0 %v1267
  %1293 = vmatprep.subr.mxu0 0.0
  %1294 = vmatpush1.msra.mxu0 0.0
  %1295 = vmatprep.subr.mxu0 0.0
  %1296 = vmatpush1.msra.mxu0 0.0
  %1297 = vmatprep.subr.mxu0 0.0
  %1298 = vmatpush1.msra.mxu0 0.0
  %1299 = vmatprep.subr.mxu0 0.0
  %1300 = vmatpush1.msra.mxu0 0.0
  %1301 = vmatprep.subr.mxu0 0.0
  %1302 = vmatpush1.msra.mxu0 0.0
  %1303 = vmatprep.subr.mxu0 0.0
  %1304 = vmatpush1.msra.mxu0 0.0
  %1305 = vmatprep.subr.mxu0 0.0
  %1306 = vmatpush1.msra.mxu0 0.0
  %1307 = vmatprep.subr.mxu0 0.0
  %1308 = vmatpush1.msra.mxu0 0.0
  %1309 = vmatprep.subr.mxu0 0.0
  %1310 = vmatpush1.msra.mxu0 0.0
  %1311 = vmatprep.subr.mxu0 0.0
  %1312 = vmatpush1.msra.mxu0 0.0
  %1313 = vmatprep.subr.mxu0 0.0
  %1314 = vmatpush1.msra.mxu0 0.0
  %1315 = vmatprep.subr.mxu0 0.0
  %1316 = vmatpush1.msra.mxu0 0.0
  %1317 = vmatprep.subr.mxu0 0.0
  %1318 = vmatpush1.msra.mxu0 0.0
  %1319 = vmatprep.subr.mxu0 0.0
  %1320 = vmatpush1.msra.mxu0 0.0
  %1321 = vmatprep.subr.mxu0 0.0
  %1322 = vmatpush1.msra.mxu0 0.0
  %1323 = vmatprep.subr.mxu0 0.0
  %1324 = vmatpush1.msra.mxu0 0.0
  %1325 = vmatprep.subr.mxu0 0.0
  %1326 = vmatpush1.msra.mxu0 0.0
  %1327 = vmatprep.subr.mxu0 0.0
  %1328 = vmatpush1.msra.mxu0 0.0
  %1329 = vmatprep.subr.mxu0 0.0
  %1330 = vmatpush1.msra.mxu0 0.0
  %1331 = vmatprep.subr.mxu0 0.0
  %1332 = vmatpush1.msra.mxu0 0.0
  %1333 = vmatprep.subr.mxu0 0.0
  %1334 = vmatpush1.msra.mxu0 0.0
  %1335 = vmatprep.subr.mxu0 0.0
  %1336 = vmatpush1.msra.mxu0 0.0
  %1337 = vmatprep.subr.mxu0 0.0
  %1338 = vmatpush1.msra.mxu0 0.0
  %1339 = vmatprep.subr.mxu0 0.0
  %1340 = vmatpush1.msra.mxu0 0.0
  %1341 = vmatprep.subr.mxu0 0.0
  %1342 = vmatpush1.msra.mxu0 0.0
  %1343 = vmatprep.subr.mxu0 0.0
  %1344 = vmatpush1.msra.mxu0 0.0
  %1345 = vmatprep.subr.mxu0 0.0
  %1346 = vmatpush1.msra.mxu0 0.0
  %1347 = vmatprep.subr.mxu0 0.0
  %1348 = vmatpush1.msra.mxu0 0.0
  %1349 = vmatprep.mubr.f32.mxu0 0.0
  %1350 = vmatmul.mubr.f32.gmra.mrb[0].mxu0 %v1283
  %v1351 = vpop.f32.mrb[0].mxu0
  %v1352 = vadd.f32 %v1280, %v1351
  %v1353 = vpop.f32.mrb[0].mxu0
  %1354 = vdwg.mxu0
  %v1355 = vadd.f32 %v1275, %v1352
  %v1356 = vxor.u32 %v1355, 2147483648
  %v1357 = vmul.f32 %v1356, 1.442695
  %v1358 = vpow.pop %v1357
  %v1359 = vadd.f32 %v1358, 1.0
  %v1360 = vrcp.pop %v1359
  %v1361 = vmul.f32 1.0, %v1360
  %1363 = vrot.lane.b32.xlu0 %v1352, 64
  %v1364 = vpop.permute.xlu0 %1363
  %v1366 = vmul.f32 %v1361, %v1364
  %1368 = vrot.lane.b32.xlu0 %v1366, 64
  %v1369 = vpop.permute.xlu0 %1368
  %v1371 = vadd.f32 %v1275, %v1369
  %v1372 = vtanh.pop %v1371
  %v1373 = vsub.f32 1.0, %v1361
  %1375 = vrot.lane.b32.xlu0 %v1372, 96
  %v1376 = vpop.permute.xlu0 %1375
  %v1378 = vmul.f32 %v1373, %v1376
  %1379 = vrot.lane.b32.xlu0 %v1263, 32
  %v1380 = vpop.permute.xlu0 %1379
  %v1382 = vmul.f32 %v1361, %v1380
  %v1383 = vadd.f32 %v1378, %v1382
  %v1384 = vadd.f32 %v1239, %v1273
  %1386 = vrot.lane.b32.xlu0 %v1383, 96
  %v1387 = vpop.permute.xlu0 %1386
  %v1388 = vsel %vm96, %v1387, 0
  %1390 = vmatprep.subr.mxu0 0.0
  %1391 = vmatpush1.msra.mxu0 %v1264
  %1392 = vmatprep.subr.mxu0 0.0
  %1393 = vmatpush1.msra.mxu0 %v1265
  %1394 = vmatprep.subr.mxu0 0.0
  %1395 = vmatpush1.msra.mxu0 %v1266
  %1396 = vmatprep.subr.mxu0 0.0
  %1397 = vmatpush1.msra.mxu0 %v1267
  %1398 = vmatprep.subr.mxu0 0.0
  %1399 = vmatpush1.msra.mxu0 0.0
  %1400 = vmatprep.subr.mxu0 0.0
  %1401 = vmatpush1.msra.mxu0 0.0
  %1402 = vmatprep.subr.mxu0 0.0
  %1403 = vmatpush1.msra.mxu0 0.0
  %1404 = vmatprep.subr.mxu0 0.0
  %1405 = vmatpush1.msra.mxu0 0.0
  %1406 = vmatprep.subr.mxu0 0.0
  %1407 = vmatpush1.msra.mxu0 0.0
  %1408 = vmatprep.subr.mxu0 0.0
  %1409 = vmatpush1.msra.mxu0 0.0
  %1410 = vmatprep.subr.mxu0 0.0
  %1411 = vmatpush1.msra.mxu0 0.0
  %1412 = vmatprep.subr.mxu0 0.0
  %1413 = vmatpush1.msra.mxu0 0.0
  %1414 = vmatprep.subr.mxu0 0.0
  %1415 = vmatpush1.msra.mxu0 0.0
  %1416 = vmatprep.subr.mxu0 0.0
  %1417 = vmatpush1.msra.mxu0 0.0
  %1418 = vmatprep.subr.mxu0 0.0
  %1419 = vmatpush1.msra.mxu0 0.0
  %1420 = vmatprep.subr.mxu0 0.0
  %1421 = vmatpush1.msra.mxu0 0.0
  %1422 = vmatprep.subr.mxu0 0.0
  %1423 = vmatpush1.msra.mxu0 0.0
  %1424 = vmatprep.subr.mxu0 0.0
  %1425 = vmatpush1.msra.mxu0 0.0
  %1426 = vmatprep.subr.mxu0 0.0
  %1427 = vmatpush1.msra.mxu0 0.0
  %1428 = vmatprep.subr.mxu0 0.0
  %1429 = vmatpush1.msra.mxu0 0.0
  %1430 = vmatprep.subr.mxu0 0.0
  %1431 = vmatpush1.msra.mxu0 0.0
  %1432 = vmatprep.subr.mxu0 0.0
  %1433 = vmatpush1.msra.mxu0 0.0
  %1434 = vmatprep.subr.mxu0 0.0
  %1435 = vmatpush1.msra.mxu0 0.0
  %1436 = vmatprep.subr.mxu0 0.0
  %1437 = vmatpush1.msra.mxu0 0.0
  %1438 = vmatprep.subr.mxu0 0.0
  %1439 = vmatpush1.msra.mxu0 0.0
  %1440 = vmatprep.subr.mxu0 0.0
  %1441 = vmatpush1.msra.mxu0 0.0
  %1442 = vmatprep.subr.mxu0 0.0
  %1443 = vmatpush1.msra.mxu0 0.0
  %1444 = vmatprep.subr.mxu0 0.0
  %1445 = vmatpush1.msra.mxu0 0.0
  %1446 = vmatprep.subr.mxu0 0.0
  %1447 = vmatpush1.msra.mxu0 0.0
  %1448 = vmatprep.subr.mxu0 0.0
  %1449 = vmatpush1.msra.mxu0 0.0
  %1450 = vmatprep.subr.mxu0 0.0
  %1451 = vmatpush1.msra.mxu0 0.0
  %1452 = vmatprep.subr.mxu0 0.0
  %1453 = vmatpush1.msra.mxu0 0.0
  %1454 = vmatprep.mubr.f32.mxu0 0.0
  %1455 = vmatmul.mubr.f32.gmra.mrb[0].mxu0 %v1388
  %v1456 = vpop.f32.mrb[0].mxu0
  %v1457 = vadd.f32 %v1280, %v1456
  %v1458 = vpop.f32.mrb[0].mxu0
  %1459 = vdwg.mxu0
  %v1460 = vadd.f32 %v1384, %v1457
  %v1461 = vxor.u32 %v1460, 2147483648
  %v1462 = vmul.f32 %v1461, 1.442695
  %v1463 = vpow.pop %v1462
  %v1464 = vadd.f32 %v1463, 1.0
  %v1465 = vrcp.pop %v1464
  %v1466 = vmul.f32 1.0, %v1465
  %1468 = vrot.lane.b32.xlu0 %v1457, 64
  %v1469 = vpop.permute.xlu0 %1468
  %v1471 = vmul.f32 %v1466, %v1469
  %1473 = vrot.lane.b32.xlu0 %v1471, 64
  %v1474 = vpop.permute.xlu0 %1473
  %v1476 = vadd.f32 %v1384, %v1474
  %v1477 = vtanh.pop %v1476
  %v1478 = vsub.f32 1.0, %v1466
  %1480 = vrot.lane.b32.xlu0 %v1477, 96
  %v1481 = vpop.permute.xlu0 %1480
  %v1483 = vmul.f32 %v1478, %v1481
  %v1484 = vmul.f32 %v1466, %v1383
  %v1485 = vadd.f32 %v1483, %v1484
  %v1486 = vadd.f32 %v1244, %v1273
  %1488 = vrot.lane.b32.xlu0 %v1485, 96
  %v1489 = vpop.permute.xlu0 %1488
  %v1490 = vsel %vm96, %v1489, 0
  %1492 = vmatprep.subr.mxu0 0.0
  %1493 = vmatpush1.msra.mxu0 %v1264
  %1494 = vmatprep.subr.mxu0 0.0
  %1495 = vmatpush1.msra.mxu0 %v1265
  %1496 = vmatprep.subr.mxu0 0.0
  %1497 = vmatpush1.msra.mxu0 %v1266
  %1498 = vmatprep.subr.mxu0 0.0
  %1499 = vmatpush1.msra.mxu0 %v1267
  %1500 = vmatprep.subr.mxu0 0.0
  %1501 = vmatpush1.msra.mxu0 0.0
  %1502 = vmatprep.subr.mxu0 0.0
  %1503 = vmatpush1.msra.mxu0 0.0
  %1504 = vmatprep.subr.mxu0 0.0
  %1505 = vmatpush1.msra.mxu0 0.0
  %1506 = vmatprep.subr.mxu0 0.0
  %1507 = vmatpush1.msra.mxu0 0.0
  %1508 = vmatprep.subr.mxu0 0.0
  %1509 = vmatpush1.msra.mxu0 0.0
  %1510 = vmatprep.subr.mxu0 0.0
  %1511 = vmatpush1.msra.mxu0 0.0
  %1512 = vmatprep.subr.mxu0 0.0
  %1513 = vmatpush1.msra.mxu0 0.0
  %1514 = vmatprep.subr.mxu0 0.0
  %1515 = vmatpush1.msra.mxu0 0.0
  %1516 = vmatprep.subr.mxu0 0.0
  %1517 = vmatpush1.msra.mxu0 0.0
  %1518 = vmatprep.subr.mxu0 0.0
  %1519 = vmatpush1.msra.mxu0 0.0
  %1520 = vmatprep.subr.mxu0 0.0
  %1521 = vmatpush1.msra.mxu0 0.0
  %1522 = vmatprep.subr.mxu0 0.0
  %1523 = vmatpush1.msra.mxu0 0.0
  %1524 = vmatprep.subr.mxu0 0.0
  %1525 = vmatpush1.msra.mxu0 0.0
  %1526 = vmatprep.subr.mxu0 0.0
  %1527 = vmatpush1.msra.mxu0 0.0
  %1528 = vmatprep.subr.mxu0 0.0
  %1529 = vmatpush1.msra.mxu0 0.0
  %1530 = vmatprep.subr.mxu0 0.0
  %1531 = vmatpush1.msra.mxu0 0.0
  %1532 = vmatprep.subr.mxu0 0.0
  %1533 = vmatpush1.msra.mxu0 0.0
  %1534 = vmatprep.subr.mxu0 0.0
  %1535 = vmatpush1.msra.mxu0 0.0
  %1536 = vmatprep.subr.mxu0 0.0
  %1537 = vmatpush1.msra.mxu0 0.0
  %1538 = vmatprep.subr.mxu0 0.0
  %1539 = vmatpush1.msra.mxu0 0.0
  %1540 = vmatprep.subr.mxu0 0.0
  %1541 = vmatpush1.msra.mxu0 0.0
  %1542 = vmatprep.subr.mxu0 0.0
  %1543 = vmatpush1.msra.mxu0 0.0
  %1544 = vmatprep.subr.mxu0 0.0
  %1545 = vmatpush1.msra.mxu0 0.0
  %1546 = vmatprep.subr.mxu0 0.0
  %1547 = vmatpush1.msra.mxu0 0.0
  %1548 = vmatprep.subr.mxu0 0.0
  %1549 = vmatpush1.msra.mxu0 0.0
  %1550 = vmatprep.subr.mxu0 0.0
  %1551 = vmatpush1.msra.mxu0 0.0
  %1552 = vmatprep.subr.mxu0 0.0
  %1553 = vmatpush1.msra.mxu0 0.0
  %1554 = vmatprep.subr.mxu0 0.0
  %1555 = vmatpush1.msra.mxu0 0.0
  %1556 = vmatprep.mubr.f32.mxu0 0.0
  %1557 = vmatmul.mubr.f32.gmra.mrb[0].mxu0 %v1490
  %v1558 = vpop.f32.mrb[0].mxu0
  %v1559 = vadd.f32 %v1280, %v1558
  %v1560 = vpop.f32.mrb[0].mxu0
  %1561 = vdwg.mxu0
  %v1562 = vadd.f32 %v1486, %v1559
  %v1563 = vxor.u32 %v1562, 2147483648
  %v1564 = vmul.f32 %v1563, 1.442695
  %v1565 = vpow.pop %v1564
  %v1566 = vadd.f32 %v1565, 1.0
  %v1567 = vrcp.pop %v1566
  %v1568 = vmul.f32 1.0, %v1567
  %1570 = vrot.lane.b32.xlu0 %v1559, 64
  %v1571 = vpop.permute.xlu0 %1570
  %v1573 = vmul.f32 %v1568, %v1571
  %1575 = vrot.lane.b32.xlu0 %v1573, 64
  %v1576 = vpop.permute.xlu0 %1575
  %v1578 = vadd.f32 %v1486, %v1576
  %v1579 = vtanh.pop %v1578
  %v1580 = vsub.f32 1.0, %v1568
  %1582 = vrot.lane.b32.xlu0 %v1579, 96
  %v1583 = vpop.permute.xlu0 %1582
  %v1585 = vmul.f32 %v1580, %v1583
  %v1586 = vmul.f32 %v1568, %v1485
  %v1587 = vadd.f32 %v1585, %v1586
  %v1588 = vadd.f32 %v1249, %v1273
  %1590 = vrot.lane.b32.xlu0 %v1587, 96
  %v1591 = vpop.permute.xlu0 %1590
  %v1592 = vsel %vm96, %v1591, 0
  %1594 = vmatprep.subr.mxu0 0.0
  %1595 = vmatpush1.msra.mxu0 %v1264
  %1596 = vmatprep.subr.mxu0 0.0
  %1597 = vmatpush1.msra.mxu0 %v1265
  %1598 = vmatprep.subr.mxu0 0.0
  %1599 = vmatpush1.msra.mxu0 %v1266
  %1600 = vmatprep.subr.mxu0 0.0
  %1601 = vmatpush1.msra.mxu0 %v1267
  %1602 = vmatprep.subr.mxu0 0.0
  %1603 = vmatpush1.msra.mxu0 0.0
  %1604 = vmatprep.subr.mxu0 0.0
  %1605 = vmatpush1.msra.mxu0 0.0
  %1606 = vmatprep.subr.mxu0 0.0
  %1607 = vmatpush1.msra.mxu0 0.0
  %1608 = vmatprep.subr.mxu0 0.0
  %1609 = vmatpush1.msra.mxu0 0.0
  %1610 = vmatprep.subr.mxu0 0.0
  %1611 = vmatpush1.msra.mxu0 0.0
  %1612 = vmatprep.subr.mxu0 0.0
  %1613 = vmatpush1.msra.mxu0 0.0
  %1614 = vmatprep.subr.mxu0 0.0
  %1615 = vmatpush1.msra.mxu0 0.0
  %1616 = vmatprep.subr.mxu0 0.0
  %1617 = vmatpush1.msra.mxu0 0.0
  %1618 = vmatprep.subr.mxu0 0.0
  %1619 = vmatpush1.msra.mxu0 0.0
  %1620 = vmatprep.subr.mxu0 0.0
  %1621 = vmatpush1.msra.mxu0 0.0
  %1622 = vmatprep.subr.mxu0 0.0
  %1623 = vmatpush1.msra.mxu0 0.0
  %1624 = vmatprep.subr.mxu0 0.0
  %1625 = vmatpush1.msra.mxu0 0.0
  %1626 = vmatprep.subr.mxu0 0.0
  %1627 = vmatpush1.msra.mxu0 0.0
  %1628 = vmatprep.subr.mxu0 0.0
  %1629 = vmatpush1.msra.mxu0 0.0
  %1630 = vmatprep.subr.mxu0 0.0
  %1631 = vmatpush1.msra.mxu0 0.0
  %1632 = vmatprep.subr.mxu0 0.0
  %1633 = vmatpush1.msra.mxu0 0.0
  %1634 = vmatprep.subr.mxu0 0.0
  %1635 = vmatpush1.msra.mxu0 0.0
  %1636 = vmatprep.subr.mxu0 0.0
  %1637 = vmatpush1.msra.mxu0 0.0
  %1638 = vmatprep.subr.mxu0 0.0
  %1639 = vmatpush1.msra.mxu0 0.0
  %1640 = vmatprep.subr.mxu0 0.0
  %1641 = vmatpush1.msra.mxu0 0.0
  %1642 = vmatprep.subr.mxu0 0.0
  %1643 = vmatpush1.msra.mxu0 0.0
  %1644 = vmatprep.subr.mxu0 0.0
  %1645 = vmatpush1.msra.mxu0 0.0
  %1646 = vmatprep.subr.mxu0 0.0
  %1647 = vmatpush1.msra.mxu0 0.0
  %1648 = vmatprep.subr.mxu0 0.0
  %1649 = vmatpush1.msra.mxu0 0.0
  %1650 = vmatprep.subr.mxu0 0.0
  %1651 = vmatpush1.msra.mxu0 0.0
  %1652 = vmatprep.subr.mxu0 0.0
  %1653 = vmatpush1.msra.mxu0 0.0
  %1654 = vmatprep.subr.mxu0 0.0
  %1655 = vmatpush1.msra.mxu0 0.0
  %1656 = vmatprep.subr.mxu0 0.0
  %1657 = vmatpush1.msra.mxu0 0.0
  %1658 = vmatprep.mubr.f32.mxu0 0.0
  %1659 = vmatmul.mubr.f32.gmra.mrb[0].mxu0 %v1592
  %v1660 = vpop.f32.mrb[0].mxu0
  %v1661 = vadd.f32 %v1280, %v1660
  %v1662 = vpop.f32.mrb[0].mxu0
  %1663 = vdwg.mxu0
  %v1664 = vadd.f32 %v1588, %v1661
  %v1665 = vxor.u32 %v1664, 2147483648
  %v1666 = vmul.f32 %v1665, 1.442695
  %v1667 = vpow.pop %v1666
  %v1668 = vadd.f32 %v1667, 1.0
  %v1669 = vrcp.pop %v1668
  %v1670 = vmul.f32 1.0, %v1669
  %1672 = vrot.lane.b32.xlu0 %v1661, 64
  %v1673 = vpop.permute.xlu0 %1672
  %v1675 = vmul.f32 %v1670, %v1673
  %1677 = vrot.lane.b32.xlu0 %v1675, 64
  %v1678 = vpop.permute.xlu0 %1677
  %v1680 = vadd.f32 %v1588, %v1678
  %v1681 = vtanh.pop %v1680
  %v1682 = vsub.f32 1.0, %v1670
  %1684 = vrot.lane.b32.xlu0 %v1681, 96
  %v1685 = vpop.permute.xlu0 %1684
  %v1687 = vmul.f32 %v1682, %v1685
  %v1688 = vmul.f32 %v1670, %v1587
  %v1689 = vadd.f32 %v1687, %v1688
  %v1690 = vadd.f32 %v1254, %v1273
  %1692 = vrot.lane.b32.xlu0 %v1689, 96
  %v1693 = vpop.permute.xlu0 %1692
  %v1694 = vsel %vm96, %v1693, 0
  %1696 = vmatprep.subr.mxu0 0.0
  %1697 = vmatpush1.msra.mxu0 %v1264
  %1698 = vmatprep.subr.mxu0 0.0
  %1699 = vmatpush1.msra.mxu0 %v1265
  %1700 = vmatprep.subr.mxu0 0.0
  %1701 = vmatpush1.msra.mxu0 %v1266
  %1702 = vmatprep.subr.mxu0 0.0
  %1703 = vmatpush1.msra.mxu0 %v1267
  %1704 = vmatprep.subr.mxu0 0.0
  %1705 = vmatpush1.msra.mxu0 0.0
  %1706 = vmatprep.subr.mxu0 0.0
  %1707 = vmatpush1.msra.mxu0 0.0
  %1708 = vmatprep.subr.mxu0 0.0
  %1709 = vmatpush1.msra.mxu0 0.0
  %1710 = vmatprep.subr.mxu0 0.0
  %1711 = vmatpush1.msra.mxu0 0.0
  %1712 = vmatprep.subr.mxu0 0.0
  %1713 = vmatpush1.msra.mxu0 0.0
  %1714 = vmatprep.subr.mxu0 0.0
  %1715 = vmatpush1.msra.mxu0 0.0
  %1716 = vmatprep.subr.mxu0 0.0
  %1717 = vmatpush1.msra.mxu0 0.0
  %1718 = vmatprep.subr.mxu0 0.0
  %1719 = vmatpush1.msra.mxu0 0.0
  %1720 = vmatprep.subr.mxu0 0.0
  %1721 = vmatpush1.msra.mxu0 0.0
  %1722 = vmatprep.subr.mxu0 0.0
  %1723 = vmatpush1.msra.mxu0 0.0
  %1724 = vmatprep.subr.mxu0 0.0
  %1725 = vmatpush1.msra.mxu0 0.0
  %1726 = vmatprep.subr.mxu0 0.0
  %1727 = vmatpush1.msra.mxu0 0.0
  %1728 = vmatprep.subr.mxu0 0.0
  %1729 = vmatpush1.msra.mxu0 0.0
  %1730 = vmatprep.subr.mxu0 0.0
  %1731 = vmatpush1.msra.mxu0 0.0
  %1732 = vmatprep.subr.mxu0 0.0
  %1733 = vmatpush1.msra.mxu0 0.0
  %1734 = vmatprep.subr.mxu0 0.0
  %1735 = vmatpush1.msra.mxu0 0.0
  %1736 = vmatprep.subr.mxu0 0.0
  %1737 = vmatpush1.msra.mxu0 0.0
  %1738 = vmatprep.subr.mxu0 0.0
  %1739 = vmatpush1.msra.mxu0 0.0
  %1740 = vmatprep.subr.mxu0 0.0
  %1741 = vmatpush1.msra.mxu0 0.0
  %1742 = vmatprep.subr.mxu0 0.0
  %1743 = vmatpush1.msra.mxu0 0.0
  %1744 = vmatprep.subr.mxu0 0.0
  %1745 = vmatpush1.msra.mxu0 0.0
  %1746 = vmatprep.subr.mxu0 0.0
  %1747 = vmatpush1.msra.mxu0 0.0
  %1748 = vmatprep.subr.mxu0 0.0
  %1749 = vmatpush1.msra.mxu0 0.0
  %1750 = vmatprep.subr.mxu0 0.0
  %1751 = vmatpush1.msra.mxu0 0.0
  %1752 = vmatprep.subr.mxu0 0.0
  %1753 = vmatpush1.msra.mxu0 0.0
  %1754 = vmatprep.subr.mxu0 0.0
  %1755 = vmatpush1.msra.mxu0 0.0
  %1756 = vmatprep.subr.mxu0 0.0
  %1757 = vmatpush1.msra.mxu0 0.0
  %1758 = vmatprep.subr.mxu0 0.0
  %1759 = vmatpush1.msra.mxu0 0.0
  %1760 = vmatprep.mubr.f32.mxu0 0.0
  %1761 = vmatmul.mubr.f32.gmra.mrb[0].mxu0 %v1694
  %v1762 = vpop.f32.mrb[0].mxu0
  %v1763 = vadd.f32 %v1280, %v1762
  %v1764 = vpop.f32.mrb[0].mxu0
  %1765 = vdwg.mxu0
  %v1766 = vadd.f32 %v1690, %v1763
  %v1767 = vxor.u32 %v1766, 2147483648
  %v1768 = vmul.f32 %v1767, 1.442695
  %v1769 = vpow.pop %v1768
  %v1770 = vadd.f32 %v1769, 1.0
  %v1771 = vrcp.pop %v1770
  %v1772 = vmul.f32 1.0, %v1771
  %1774 = vrot.lane.b32.xlu0 %v1763, 64
  %v1775 = vpop.permute.xlu0 %1774
  %v1777 = vmul.f32 %v1772, %v1775
  %1779 = vrot.lane.b32.xlu0 %v1777, 64
  %v1780 = vpop.permute.xlu0 %1779
  %v1782 = vadd.f32 %v1690, %v1780
  %v1783 = vtanh.pop %v1782
  %v1784 = vsub.f32 1.0, %v1772
  %1786 = vrot.lane.b32.xlu0 %v1783, 96
  %v1787 = vpop.permute.xlu0 %1786
  %v1789 = vmul.f32 %v1784, %v1787
  %v1790 = vmul.f32 %v1772, %v1689
  %v1791 = vadd.f32 %v1789, %v1790
  %v1792 = vadd.f32 %v1259, %v1273
  %1794 = vrot.lane.b32.xlu0 %v1791, 96
  %v1795 = vpop.permute.xlu0 %1794
  %v1796 = vsel %vm96, %v1795, 0
  %1798 = vmatprep.subr.mxu0 0.0
  %1799 = vmatpush1.msra.mxu0 %v1264
  %1800 = vmatprep.subr.mxu0 0.0
  %1801 = vmatpush1.msra.mxu0 %v1265
  %1802 = vmatprep.subr.mxu0 0.0
  %1803 = vmatpush1.msra.mxu0 %v1266
  %1804 = vmatprep.subr.mxu0 0.0
  %1805 = vmatpush1.msra.mxu0 %v1267
  %1806 = vmatprep.subr.mxu0 0.0
  %1807 = vmatpush1.msra.mxu0 0.0
  %1808 = vmatprep.subr.mxu0 0.0
  %1809 = vmatpush1.msra.mxu0 0.0
  %1810 = vmatprep.subr.mxu0 0.0
  %1811 = vmatpush1.msra.mxu0 0.0
  %1812 = vmatprep.subr.mxu0 0.0
  %1813 = vmatpush1.msra.mxu0 0.0
  %1814 = vmatprep.subr.mxu0 0.0
  %1815 = vmatpush1.msra.mxu0 0.0
  %1816 = vmatprep.subr.mxu0 0.0
  %1817 = vmatpush1.msra.mxu0 0.0
  %1818 = vmatprep.subr.mxu0 0.0
  %1819 = vmatpush1.msra.mxu0 0.0
  %1820 = vmatprep.subr.mxu0 0.0
  %1821 = vmatpush1.msra.mxu0 0.0
  %1822 = vmatprep.subr.mxu0 0.0
  %1823 = vmatpush1.msra.mxu0 0.0
  %1824 = vmatprep.subr.mxu0 0.0
  %1825 = vmatpush1.msra.mxu0 0.0
  %1826 = vmatprep.subr.mxu0 0.0
  %1827 = vmatpush1.msra.mxu0 0.0
  %1828 = vmatprep.subr.mxu0 0.0
  %1829 = vmatpush1.msra.mxu0 0.0
  %1830 = vmatprep.subr.mxu0 0.0
  %1831 = vmatpush1.msra.mxu0 0.0
  %1832 = vmatprep.subr.mxu0 0.0
  %1833 = vmatpush1.msra.mxu0 0.0
  %1834 = vmatprep.subr.mxu0 0.0
  %1835 = vmatpush1.msra.mxu0 0.0
  %1836 = vmatprep.subr.mxu0 0.0
  %1837 = vmatpush1.msra.mxu0 0.0
  %1838 = vmatprep.subr.mxu0 0.0
  %1839 = vmatpush1.msra.mxu0 0.0
  %1840 = vmatprep.subr.mxu0 0.0
  %1841 = vmatpush1.msra.mxu0 0.0
  %1842 = vmatprep.subr.mxu0 0.0
  %1843 = vmatpush1.msra.mxu0 0.0
  %1844 = vmatprep.subr.mxu0 0.0
  %1845 = vmatpush1.msra.mxu0 0.0
  %1846 = vmatprep.subr.mxu0 0.0
  %1847 = vmatpush1.msra.mxu0 0.0
  %1848 = vmatprep.subr.mxu0 0.0
  %1849 = vmatpush1.msra.mxu0 0.0
  %1850 = vmatprep.subr.mxu0 0.0
  %1851 = vmatpush1.msra.mxu0 0.0
  %1852 = vmatprep.subr.mxu0 0.0
  %1853 = vmatpush1.msra.mxu0 0.0
  %1854 = vmatprep.subr.mxu0 0.0
  %1855 = vmatpush1.msra.mxu0 0.0
  %1856 = vmatprep.subr.mxu0 0.0
  %1857 = vmatpush1.msra.mxu0 0.0
  %1858 = vmatprep.subr.mxu0 0.0
  %1859 = vmatpush1.msra.mxu0 0.0
  %1860 = vmatprep.subr.mxu0 0.0
  %1861 = vmatpush1.msra.mxu0 0.0
  %1862 = vmatprep.mubr.f32.mxu0 0.0
  %1863 = vmatmul.mubr.f32.gmra.mrb[0].mxu0 %v1796
  %v1864 = vpop.f32.mrb[0].mxu0
  %v1865 = vadd.f32 %v1280, %v1864
  %v1866 = vpop.f32.mrb[0].mxu0
  %1867 = vdwg.mxu0
  %v1868 = vadd.f32 %v1792, %v1865
  %v1869 = vxor.u32 %v1868, 2147483648
  %v1870 = vmul.f32 %v1869, 1.442695
  %v1871 = vpow.pop %v1870
  %v1872 = vadd.f32 %v1871, 1.0
  %v1873 = vrcp.pop %v1872
  %v1874 = vmul.f32 1.0, %v1873
  %1876 = vrot.lane.b32.xlu0 %v1865, 64
  %v1877 = vpop.permute.xlu0 %1876
  %v1879 = vmul.f32 %v1874, %v1877
  %1881 = vrot.lane.b32.xlu0 %v1879, 64
  %v1882 = vpop.permute.xlu0 %1881
  %v1884 = vadd.f32 %v1792, %v1882
  %v1885 = vtanh.pop %v1884
  %v1886 = vsub.f32 1.0, %v1874
  %1888 = vrot.lane.b32.xlu0 %v1885, 96
  %v1889 = vpop.permute.xlu0 %1888
  %v1891 = vmul.f32 %v1886, %v1889
  %v1892 = vmul.f32 %v1874, %v1791
  %v1893 = vadd.f32 %v1891, %v1892
  %v1894 = vld [vmem:[%s14] sm:$0xff]
  %v1895 = vld [vmem:[%s14 + $0x8] sm:$0xff]
  %v1896 = vld [vmem:[%s14 + $0x10] sm:$0xff]
  %v1897 = vld [vmem:[%s14 + $0x18] sm:$0xff]
  %v1898 = vld [vmem:[%s15] sm:$0x1]
  %v1900 = vlaneseq
  %v1901 = vshrl.u32 %v1900, 7
  %v1902 = vsub.s32 0, %v1901
  %v1903 = vrot.slane %v1898, %v1902
  %1906 = vrot.lane.b32.xlu0 %v1138, 96
  %v1907 = vpop.permute.xlu0 %1906
  %v1908 = vsel %vm96, %v1907, 0
  %1910 = vmatprep.subr.mxu0 0.0
  %1911 = vmatpush1.msra.mxu0 %v1894
  %1912 = vmatprep.subr.mxu0 0.0
  %1913 = vmatpush1.msra.mxu0 %v1895
  %1914 = vmatprep.subr.mxu0 0.0
  %1915 = vmatpush1.msra.mxu0 %v1896
  %1916 = vmatprep.subr.mxu0 0.0
  %1917 = vmatpush1.msra.mxu0 %v1897
  %1918 = vmatprep.subr.mxu0 0.0
  %1919 = vmatpush1.msra.mxu0 0.0
  %1920 = vmatprep.subr.mxu0 0.0
  %1921 = vmatpush1.msra.mxu0 0.0
  %1922 = vmatprep.subr.mxu0 0.0
  %1923 = vmatpush1.msra.mxu0 0.0
  %1924 = vmatprep.subr.mxu0 0.0
  %1925 = vmatpush1.msra.mxu0 0.0
  %1926 = vmatprep.subr.mxu0 0.0
  %1927 = vmatpush1.msra.mxu0 0.0
  %1928 = vmatprep.subr.mxu0 0.0
  %1929 = vmatpush1.msra.mxu0 0.0
  %1930 = vmatprep.subr.mxu0 0.0
  %1931 = vmatpush1.msra.mxu0 0.0
  %1932 = vmatprep.subr.mxu0 0.0
  %1933 = vmatpush1.msra.mxu0 0.0
  %1934 = vmatprep.subr.mxu0 0.0
  %1935 = vmatpush1.msra.mxu0 0.0
  %1936 = vmatprep.subr.mxu0 0.0
  %1937 = vmatpush1.msra.mxu0 0.0
  %1938 = vmatprep.subr.mxu0 0.0
  %1939 = vmatpush1.msra.mxu0 0.0
  %1940 = vmatprep.subr.mxu0 0.0
  %1941 = vmatpush1.msra.mxu0 0.0
  %1942 = vmatprep.subr.mxu0 0.0
  %1943 = vmatpush1.msra.mxu0 0.0
  %1944 = vmatprep.subr.mxu0 0.0
  %1945 = vmatpush1.msra.mxu0 0.0
  %1946 = vmatprep.subr.mxu0 0.0
  %1947 = vmatpush1.msra.mxu0 0.0
  %1948 = vmatprep.subr.mxu0 0.0
  %1949 = vmatpush1.msra.mxu0 0.0
  %1950 = vmatprep.subr.mxu0 0.0
  %1951 = vmatpush1.msra.mxu0 0.0
  %1952 = vmatprep.subr.mxu0 0.0
  %1953 = vmatpush1.msra.mxu0 0.0
  %1954 = vmatprep.subr.mxu0 0.0
  %1955 = vmatpush1.msra.mxu0 0.0
  %1956 = vmatprep.subr.mxu0 0.0
  %1957 = vmatpush1.msra.mxu0 0.0
  %1958 = vmatprep.subr.mxu0 0.0
  %1959 = vmatpush1.msra.mxu0 0.0
  %1960 = vmatprep.subr.mxu0 0.0
  %1961 = vmatpush1.msra.mxu0 0.0
  %1962 = vmatprep.subr.mxu0 0.0
  %1963 = vmatpush1.msra.mxu0 0.0
  %1964 = vmatprep.subr.mxu0 0.0
  %1965 = vmatpush1.msra.mxu0 0.0
  %1966 = vmatprep.subr.mxu0 0.0
  %1967 = vmatpush1.msra.mxu0 0.0
  %1968 = vmatprep.subr.mxu0 0.0
  %1969 = vmatpush1.msra.mxu0 0.0
  %1970 = vmatprep.subr.mxu0 0.0
  %1971 = vmatpush1.msra.mxu0 0.0
  %1972 = vmatprep.subr.mxu0 0.0
  %1973 = vmatpush1.msra.mxu0 0.0
  %1974 = vmatprep.mubr.f32.mxu0 0.0
  %1975 = vmatmul.mubr.f32.gmra.mrb[0].mxu0 %v1908
  %v1976 = vpop.f32.mrb[0].mxu0
  %v1977 = vadd.f32 %v1903, %v1976
  %v1978 = vpop.f32.mrb[0].mxu0
  %1979 = vdwg.mxu0
  %v1980 = vld [vmem:[%s16] sm:$0xff]
  %v1981 = vld [vmem:[%s16 + $0x8] sm:$0xff]
  %v1982 = vld [vmem:[%s16 + $0x10] sm:$0xff]
  %v1983 = vld [vmem:[%s16 + $0x18] sm:$0xff]
  %v1984 = vld [vmem:[%s17] sm:$0x1]
  %v1986 = vlaneseq
  %v1987 = vshrl.u32 %v1986, 7
  %v1988 = vsub.s32 0, %v1987
  %v1989 = vrot.slane %v1984, %v1988
  %1992 = vrot.lane.b32.xlu0 %v1893, 96
  %v1993 = vpop.permute.xlu0 %1992
  %v1994 = vsel %vm96, %v1993, 0
  %1996 = vmatprep.subr.mxu0 0.0
  %1997 = vmatpush1.msra.mxu0 %v1980
  %1998 = vmatprep.subr.mxu0 0.0
  %1999 = vmatpush1.msra.mxu0 %v1981
  %2000 = vmatprep.subr.mxu0 0.0
  %2001 = vmatpush1.msra.mxu0 %v1982
  %2002 = vmatprep.subr.mxu0 0.0
  %2003 = vmatpush1.msra.mxu0 %v1983
  %2004 = vmatprep.subr.mxu0 0.0
  %2005 = vmatpush1.msra.mxu0 0.0
  %2006 = vmatprep.subr.mxu0 0.0
  %2007 = vmatpush1.msra.mxu0 0.0
  %2008 = vmatprep.subr.mxu0 0.0
  %2009 = vmatpush1.msra.mxu0 0.0
  %2010 = vmatprep.subr.mxu0 0.0
  %2011 = vmatpush1.msra.mxu0 0.0
  %2012 = vmatprep.subr.mxu0 0.0
  %2013 = vmatpush1.msra.mxu0 0.0
  %2014 = vmatprep.subr.mxu0 0.0
  %2015 = vmatpush1.msra.mxu0 0.0
  %2016 = vmatprep.subr.mxu0 0.0
  %2017 = vmatpush1.msra.mxu0 0.0
  %2018 = vmatprep.subr.mxu0 0.0
  %2019 = vmatpush1.msra.mxu0 0.0
  %2020 = vmatprep.subr.mxu0 0.0
  %2021 = vmatpush1.msra.mxu0 0.0
  %2022 = vmatprep.subr.mxu0 0.0
  %2023 = vmatpush1.msra.mxu0 0.0
  %2024 = vmatprep.subr.mxu0 0.0
  %2025 = vmatpush1.msra.mxu0 0.0
  %2026 = vmatprep.subr.mxu0 0.0
  %2027 = vmatpush1.msra.mxu0 0.0
  %2028 = vmatprep.subr.mxu0 0.0
  %2029 = vmatpush1.msra.mxu0 0.0
  %2030 = vmatprep.subr.mxu0 0.0
  %2031 = vmatpush1.msra.mxu0 0.0
  %2032 = vmatprep.subr.mxu0 0.0
  %2033 = vmatpush1.msra.mxu0 0.0
  %2034 = vmatprep.subr.mxu0 0.0
  %2035 = vmatpush1.msra.mxu0 0.0
  %2036 = vmatprep.subr.mxu0 0.0
  %2037 = vmatpush1.msra.mxu0 0.0
  %2038 = vmatprep.subr.mxu0 0.0
  %2039 = vmatpush1.msra.mxu0 0.0
  %2040 = vmatprep.subr.mxu0 0.0
  %2041 = vmatpush1.msra.mxu0 0.0
  %2042 = vmatprep.subr.mxu0 0.0
  %2043 = vmatpush1.msra.mxu0 0.0
  %2044 = vmatprep.subr.mxu0 0.0
  %2045 = vmatpush1.msra.mxu0 0.0
  %2046 = vmatprep.subr.mxu0 0.0
  %2047 = vmatpush1.msra.mxu0 0.0
  %2048 = vmatprep.subr.mxu0 0.0
  %2049 = vmatpush1.msra.mxu0 0.0
  %2050 = vmatprep.subr.mxu0 0.0
  %2051 = vmatpush1.msra.mxu0 0.0
  %2052 = vmatprep.subr.mxu0 0.0
  %2053 = vmatpush1.msra.mxu0 0.0
  %2054 = vmatprep.subr.mxu0 0.0
  %2055 = vmatpush1.msra.mxu0 0.0
  %2056 = vmatprep.subr.mxu0 0.0
  %2057 = vmatpush1.msra.mxu0 0.0
  %2058 = vmatprep.subr.mxu0 0.0
  %2059 = vmatpush1.msra.mxu0 0.0
  %2060 = vmatprep.mubr.f32.mxu0 0.0
  %2061 = vmatmul.mubr.f32.gmra.mrb[0].mxu0 %v1994
  %v2062 = vpop.f32.mrb[0].mxu0
  %v2063 = vadd.f32 %v1989, %v2062
  %v2064 = vpop.f32.mrb[0].mxu0
  %2065 = vdwg.mxu0
  %v2066 = vld [vmem:[%s18] sm:$0xff]
  %v2067 = vld [vmem:[%s18 + $0x8] sm:$0xff]
  %v2068 = vld [vmem:[%s18 + $0x10] sm:$0xff]
  %v2069 = vld [vmem:[%s18 + $0x18] sm:$0xff]
  %v2070 = vld [vmem:[%s19] sm:$0x1]
  %v2072 = vlaneseq
  %v2073 = vshrl.u32 %v2072, 7
  %v2074 = vsub.s32 0, %v2073
  %v2075 = vrot.slane %v2070, %v2074
  %2077 = vmatprep.subr.mxu0 0.0
  %2078 = vmatpush1.msra.mxu0 %v2066
  %2079 = vmatprep.subr.mxu0 0.0
  %2080 = vmatpush1.msra.mxu0 %v2067
  %2081 = vmatprep.subr.mxu0 0.0
  %2082 = vmatpush1.msra.mxu0 %v2068
  %2083 = vmatprep.subr.mxu0 0.0
  %2084 = vmatpush1.msra.mxu0 %v2069
  %2085 = vmatprep.subr.mxu0 0.0
  %2086 = vmatpush1.msra.mxu0 0.0
  %2087 = vmatprep.subr.mxu0 0.0
  %2088 = vmatpush1.msra.mxu0 0.0
  %2089 = vmatprep.subr.mxu0 0.0
  %2090 = vmatpush1.msra.mxu0 0.0
  %2091 = vmatprep.subr.mxu0 0.0
  %2092 = vmatpush1.msra.mxu0 0.0
  %2093 = vmatprep.subr.mxu0 0.0
  %2094 = vmatpush1.msra.mxu0 0.0
  %2095 = vmatprep.subr.mxu0 0.0
  %2096 = vmatpush1.msra.mxu0 0.0
  %2097 = vmatprep.subr.mxu0 0.0
  %2098 = vmatpush1.msra.mxu0 0.0
  %2099 = vmatprep.subr.mxu0 0.0
  %2100 = vmatpush1.msra.mxu0 0.0
  %2101 = vmatprep.subr.mxu0 0.0
  %2102 = vmatpush1.msra.mxu0 0.0
  %2103 = vmatprep.subr.mxu0 0.0
  %2104 = vmatpush1.msra.mxu0 0.0
  %2105 = vmatprep.subr.mxu0 0.0
  %2106 = vmatpush1.msra.mxu0 0.0
  %2107 = vmatprep.subr.mxu0 0.0
  %2108 = vmatpush1.msra.mxu0 0.0
  %2109 = vmatprep.subr.mxu0 0.0
  %2110 = vmatpush1.msra.mxu0 0.0
  %2111 = vmatprep.subr.mxu0 0.0
  %2112 = vmatpush1.msra.mxu0 0.0
  %2113 = vmatprep.subr.mxu0 0.0
  %2114 = vmatpush1.msra.mxu0 0.0
  %2115 = vmatprep.subr.mxu0 0.0
  %2116 = vmatpush1.msra.mxu0 0.0
  %2117 = vmatprep.subr.mxu0 0.0
  %2118 = vmatpush1.msra.mxu0 0.0
  %2119 = vmatprep.subr.mxu0 0.0
  %2120 = vmatpush1.msra.mxu0 0.0
  %2121 = vmatprep.subr.mxu0 0.0
  %2122 = vmatpush1.msra.mxu0 0.0
  %2123 = vmatprep.subr.mxu0 0.0
  %2124 = vmatpush1.msra.mxu0 0.0
  %2125 = vmatprep.subr.mxu0 0.0
  %2126 = vmatpush1.msra.mxu0 0.0
  %2127 = vmatprep.subr.mxu0 0.0
  %2128 = vmatpush1.msra.mxu0 0.0
  %2129 = vmatprep.subr.mxu0 0.0
  %2130 = vmatpush1.msra.mxu0 0.0
  %2131 = vmatprep.subr.mxu0 0.0
  %2132 = vmatpush1.msra.mxu0 0.0
  %2133 = vmatprep.subr.mxu0 0.0
  %2134 = vmatpush1.msra.mxu0 0.0
  %2135 = vmatprep.subr.mxu0 0.0
  %2136 = vmatpush1.msra.mxu0 0.0
  %2137 = vmatprep.subr.mxu0 0.0
  %2138 = vmatpush1.msra.mxu0 0.0
  %2139 = vmatprep.subr.mxu0 0.0
  %2140 = vmatpush1.msra.mxu0 0.0
  %2141 = vmatprep.mubr.f32.mxu0 0.0
  %2142 = vmatmul.mubr.f32.gmra.mrb[0].mxu0 %v238
  %v2143 = vpop.f32.mrb[0].mxu0
  %v2144 = vadd.f32 %v2075, %v2143
  %v2145 = vpop.f32.mrb[0].mxu0
  %2146 = vdwg.mxu0
  %v2147 = vmul.f32 %v1977, %v2144
  %v2148 = vld [vmem:[%s20] sm:$0xff]
  %v2149 = vld [vmem:[%s20 + $0x8] sm:$0xff]
  %v2150 = vld [vmem:[%s20 + $0x10] sm:$0xff]
  %v2151 = vld [vmem:[%s20 + $0x18] sm:$0xff]
  %v2152 = vld [vmem:[%s21] sm:$0x1]
  %v2154 = vlaneseq
  %v2155 = vshrl.u32 %v2154, 7
  %v2156 = vsub.s32 0, %v2155
  %v2157 = vrot.slane %v2152, %v2156
  %v2160 = vsel %vm96, %v2147, 0
  %2162 = vmatprep.subr.mxu0 0.0
  %2163 = vmatpush1.msra.mxu0 %v2148
  %2164 = vmatprep.subr.mxu0 0.0
  %2165 = vmatpush1.msra.mxu0 %v2149
  %2166 = vmatprep.subr.mxu0 0.0
  %2167 = vmatpush1.msra.mxu0 %v2150
  %2168 = vmatprep.subr.mxu0 0.0
  %2169 = vmatpush1.msra.mxu0 %v2151
  %2170 = vmatprep.subr.mxu0 0.0
  %2171 = vmatpush1.msra.mxu0 0.0
  %2172 = vmatprep.subr.mxu0 0.0
  %2173 = vmatpush1.msra.mxu0 0.0
  %2174 = vmatprep.subr.mxu0 0.0
  %2175 = vmatpush1.msra.mxu0 0.0
  %2176 = vmatprep.subr.mxu0 0.0
  %2177 = vmatpush1.msra.mxu0 0.0
  %2178 = vmatprep.subr.mxu0 0.0
  %2179 = vmatpush1.msra.mxu0 0.0
  %2180 = vmatprep.subr.mxu0 0.0
  %2181 = vmatpush1.msra.mxu0 0.0
  %2182 = vmatprep.subr.mxu0 0.0
  %2183 = vmatpush1.msra.mxu0 0.0
  %2184 = vmatprep.subr.mxu0 0.0
  %2185 = vmatpush1.msra.mxu0 0.0
  %2186 = vmatprep.subr.mxu0 0.0
  %2187 = vmatpush1.msra.mxu0 0.0
  %2188 = vmatprep.subr.mxu0 0.0
  %2189 = vmatpush1.msra.mxu0 0.0
  %2190 = vmatprep.subr.mxu0 0.0
  %2191 = vmatpush1.msra.mxu0 0.0
  %2192 = vmatprep.subr.mxu0 0.0
  %2193 = vmatpush1.msra.mxu0 0.0
  %2194 = vmatprep.subr.mxu0 0.0
  %2195 = vmatpush1.msra.mxu0 0.0
  %2196 = vmatprep.subr.mxu0 0.0
  %2197 = vmatpush1.msra.mxu0 0.0
  %2198 = vmatprep.subr.mxu0 0.0
  %2199 = vmatpush1.msra.mxu0 0.0
  %2200 = vmatprep.subr.mxu0 0.0
  %2201 = vmatpush1.msra.mxu0 0.0
  %2202 = vmatprep.subr.mxu0 0.0
  %2203 = vmatpush1.msra.mxu0 0.0
  %2204 = vmatprep.subr.mxu0 0.0
  %2205 = vmatpush1.msra.mxu0 0.0
  %2206 = vmatprep.subr.mxu0 0.0
  %2207 = vmatpush1.msra.mxu0 0.0
  %2208 = vmatprep.subr.mxu0 0.0
  %2209 = vmatpush1.msra.mxu0 0.0
  %2210 = vmatprep.subr.mxu0 0.0
  %2211 = vmatpush1.msra.mxu0 0.0
  %2212 = vmatprep.subr.mxu0 0.0
  %2213 = vmatpush1.msra.mxu0 0.0
  %2214 = vmatprep.subr.mxu0 0.0
  %2215 = vmatpush1.msra.mxu0 0.0
  %2216 = vmatprep.subr.mxu0 0.0
  %2217 = vmatpush1.msra.mxu0 0.0
  %2218 = vmatprep.subr.mxu0 0.0
  %2219 = vmatpush1.msra.mxu0 0.0
  %2220 = vmatprep.subr.mxu0 0.0
  %2221 = vmatpush1.msra.mxu0 0.0
  %2222 = vmatprep.subr.mxu0 0.0
  %2223 = vmatpush1.msra.mxu0 0.0
  %2224 = vmatprep.subr.mxu0 0.0
  %2225 = vmatpush1.msra.mxu0 0.0
  %2226 = vmatprep.mubr.f32.mxu0 0.0
  %2227 = vmatmul.mubr.f32.gmra.mrb[0].mxu0 %v2160
  %v2228 = vpop.f32.mrb[0].mxu0
  %v2229 = vadd.f32 %v2157, %v2228
  %v2230 = vpop.f32.mrb[0].mxu0
  %2231 = vdwg.mxu0
  %v2232 = vmul.f32 %v2229, %v2063
  %v2233 = vld [vmem:[%s22] sm:$0xff]
  %v2234 = vld [vmem:[%s22 + $0x8] sm:$0xff]
  %v2235 = vld [vmem:[%s22 + $0x10] sm:$0xff]
  %v2236 = vld [vmem:[%s22 + $0x18] sm:$0xff]
  %v2237 = vld [vmem:[%s23] sm:$0x1]
  %v2239 = vlaneseq
  %v2240 = vshrl.u32 %v2239, 7
  %v2241 = vsub.s32 0, %v2240
  %v2242 = vrot.slane %v2237, %v2241
  %v2245 = vsel %vm96, %v2232, 0
  %2247 = vmatprep.subr.mxu0 0.0
  %2248 = vmatpush1.msra.mxu0 %v2233
  %2249 = vmatprep.subr.mxu0 0.0
  %2250 = vmatpush1.msra.mxu0 %v2234
  %2251 = vmatprep.subr.mxu0 0.0
  %2252 = vmatpush1.msra.mxu0 %v2235
  %2253 = vmatprep.subr.mxu0 0.0
  %2254 = vmatpush1.msra.mxu0 %v2236
  %2255 = vmatprep.subr.mxu0 0.0
  %2256 = vmatpush1.msra.mxu0 0.0
  %2257 = vmatprep.subr.mxu0 0.0
  %2258 = vmatpush1.msra.mxu0 0.0
  %2259 = vmatprep.subr.mxu0 0.0
  %2260 = vmatpush1.msra.mxu0 0.0
  %2261 = vmatprep.subr.mxu0 0.0
  %2262 = vmatpush1.msra.mxu0 0.0
  %2263 = vmatprep.subr.mxu0 0.0
  %2264 = vmatpush1.msra.mxu0 0.0
  %2265 = vmatprep.subr.mxu0 0.0
  %2266 = vmatpush1.msra.mxu0 0.0
  %2267 = vmatprep.subr.mxu0 0.0
  %2268 = vmatpush1.msra.mxu0 0.0
  %2269 = vmatprep.subr.mxu0 0.0
  %2270 = vmatpush1.msra.mxu0 0.0
  %2271 = vmatprep.subr.mxu0 0.0
  %2272 = vmatpush1.msra.mxu0 0.0
  %2273 = vmatprep.subr.mxu0 0.0
  %2274 = vmatpush1.msra.mxu0 0.0
  %2275 = vmatprep.subr.mxu0 0.0
  %2276 = vmatpush1.msra.mxu0 0.0
  %2277 = vmatprep.subr.mxu0 0.0
  %2278 = vmatpush1.msra.mxu0 0.0
  %2279 = vmatprep.subr.mxu0 0.0
  %2280 = vmatpush1.msra.mxu0 0.0
  %2281 = vmatprep.subr.mxu0 0.0
  %2282 = vmatpush1.msra.mxu0 0.0
  %2283 = vmatprep.subr.mxu0 0.0
  %2284 = vmatpush1.msra.mxu0 0.0
  %2285 = vmatprep.subr.mxu0 0.0
  %2286 = vmatpush1.msra.mxu0 0.0
  %2287 = vmatprep.subr.mxu0 0.0
  %2288 = vmatpush1.msra.mxu0 0.0
  %2289 = vmatprep.subr.mxu0 0.0
  %2290 = vmatpush1.msra.mxu0 0.0
  %2291 = vmatprep.subr.mxu0 0.0
  %2292 = vmatpush1.msra.mxu0 0.0
  %2293 = vmatprep.subr.mxu0 0.0
  %2294 = vmatpush1.msra.mxu0 0.0
  %2295 = vmatprep.subr.mxu0 0.0
  %2296 = vmatpush1.msra.mxu0 0.0
  %2297 = vmatprep.subr.mxu0 0.0
  %2298 = vmatpush1.msra.mxu0 0.0
  %2299 = vmatprep.subr.mxu0 0.0
  %2300 = vmatpush1.msra.mxu0 0.0
  %2301 = vmatprep.subr.mxu0 0.0
  %2302 = vmatpush1.msra.mxu0 0.0
  %2303 = vmatprep.subr.mxu0 0.0
  %2304 = vmatpush1.msra.mxu0 0.0
  %2305 = vmatprep.subr.mxu0 0.0
  %2306 = vmatpush1.msra.mxu0 0.0
  %2307 = vmatprep.subr.mxu0 0.0
  %2308 = vmatpush1.msra.mxu0 0.0
  %2309 = vmatprep.subr.mxu0 0.0
  %2310 = vmatpush1.msra.mxu0 0.0
  %2311 = vmatprep.mubr.f32.mxu0 0.0
  %2312 = vmatmul.mubr.f32.gmra.mrb[0].mxu0 %v2245
  %v2313 = vpop.f32.mrb[0].mxu0
  %v2314 = vadd.f32 %v2242, %v2313
  %v2315 = vpop.f32.mrb[0].mxu0
  %2316 = vdwg.mxu0
  %v2317 = vld [vmem:[%s24] sm:$0xff]
  %v2318 = vld [vmem:[%s24 + $0x8] sm:$0xff]
  %v2319 = vld [vmem:[%s24 + $0x10] sm:$0xff]
  %v2320 = vld [vmem:[%s24 + $0x18] sm:$0xff]
  %v2321 = vld [vmem:[%s25] sm:$0x1]
  %v2323 = vlaneseq
  %v2324 = vshrl.u32 %v2323, 7
  %v2325 = vsub.s32 0, %v2324
  %v2326 = vrot.slane %v2321, %v2325
  %v2329 = vsel %vm96, %v2314, 0
  %2331 = vmatprep.subr.mxu0 0.0
  %2332 = vmatpush1.msra.mxu0 %v2317
  %2333 = vmatprep.subr.mxu0 0.0
  %2334 = vmatpush1.msra.mxu0 %v2318
  %2335 = vmatprep.subr.mxu0 0.0
  %2336 = vmatpush1.msra.mxu0 %v2319
  %2337 = vmatprep.subr.mxu0 0.0
  %2338 = vmatpush1.msra.mxu0 %v2320
  %2339 = vmatprep.subr.mxu0 0.0
  %2340 = vmatpush1.msra.mxu0 0.0
  %2341 = vmatprep.subr.mxu0 0.0
  %2342 = vmatpush1.msra.mxu0 0.0
  %2343 = vmatprep.subr.mxu0 0.0
  %2344 = vmatpush1.msra.mxu0 0.0
  %2345 = vmatprep.subr.mxu0 0.0
  %2346 = vmatpush1.msra.mxu0 0.0
  %2347 = vmatprep.subr.mxu0 0.0
  %2348 = vmatpush1.msra.mxu0 0.0
  %2349 = vmatprep.subr.mxu0 0.0
  %2350 = vmatpush1.msra.mxu0 0.0
  %2351 = vmatprep.subr.mxu0 0.0
  %2352 = vmatpush1.msra.mxu0 0.0
  %2353 = vmatprep.subr.mxu0 0.0
  %2354 = vmatpush1.msra.mxu0 0.0
  %2355 = vmatprep.subr.mxu0 0.0
  %2356 = vmatpush1.msra.mxu0 0.0
  %2357 = vmatprep.subr.mxu0 0.0
  %2358 = vmatpush1.msra.mxu0 0.0
  %2359 = vmatprep.subr.mxu0 0.0
  %2360 = vmatpush1.msra.mxu0 0.0
  %2361 = vmatprep.subr.mxu0 0.0
  %2362 = vmatpush1.msra.mxu0 0.0
  %2363 = vmatprep.subr.mxu0 0.0
  %2364 = vmatpush1.msra.mxu0 0.0
  %2365 = vmatprep.subr.mxu0 0.0
  %2366 = vmatpush1.msra.mxu0 0.0
  %2367 = vmatprep.subr.mxu0 0.0
  %2368 = vmatpush1.msra.mxu0 0.0
  %2369 = vmatprep.subr.mxu0 0.0
  %2370 = vmatpush1.msra.mxu0 0.0
  %2371 = vmatprep.subr.mxu0 0.0
  %2372 = vmatpush1.msra.mxu0 0.0
  %2373 = vmatprep.subr.mxu0 0.0
  %2374 = vmatpush1.msra.mxu0 0.0
  %2375 = vmatprep.subr.mxu0 0.0
  %2376 = vmatpush1.msra.mxu0 0.0
  %2377 = vmatprep.subr.mxu0 0.0
  %2378 = vmatpush1.msra.mxu0 0.0
  %2379 = vmatprep.subr.mxu0 0.0
  %2380 = vmatpush1.msra.mxu0 0.0
  %2381 = vmatprep.subr.mxu0 0.0
  %2382 = vmatpush1.msra.mxu0 0.0
  %2383 = vmatprep.subr.mxu0 0.0
  %2384 = vmatpush1.msra.mxu0 0.0
  %2385 = vmatprep.subr.mxu0 0.0
  %2386 = vmatpush1.msra.mxu0 0.0
  %2387 = vmatprep.subr.mxu0 0.0
  %2388 = vmatpush1.msra.mxu0 0.0
  %2389 = vmatprep.subr.mxu0 0.0
  %2390 = vmatpush1.msra.mxu0 0.0
  %2391 = vmatprep.subr.mxu0 0.0
  %2392 = vmatpush1.msra.mxu0 0.0
  %2393 = vmatprep.subr.mxu0 0.0
  %2394 = vmatpush1.msra.mxu0 0.0
  %2395 = vmatprep.mubr.f32.mxu0 0.0
  %2396 = vmatmul.mubr.f32.gmra.mrb[0].mxu0 %v2329
  %v2397 = vpop.f32.mrb[0].mxu0
  %v2398 = vadd.f32 %v2326, %v2397
  %v2399 = vpop.f32.mrb[0].mxu0
  %2400 = vdwg.mxu0
  %vm2401 = vcmask 130048
  %v2402 = vsel %vm2401, %v2398, -inf
  %2403 = vmax.xlane.f32.xlu0 %v2402
  %v2404 = vpop.xlane.xlu0 %2403
  %v2405 = vsub.f32 %v2398, %v2404
  %v2406 = vmul.f32 %v2405, 1.442695
  %v2407 = vpow.pop %v2406
  %v2408 = vsel %vm2401, %v2407, 0.0
  %2409 = vadd.xlane.f32.xlu0 %v2408
  %v2410 = vpop.xlane.xlu0 %2409
  %v2411 = vrcp.pop %v2410
  %v2412 = vmul.f32 %v2407, %v2411
  %2413 = vst.msk [vmem:[%s26] sm:$0xff] %vm2401, %v2412
  // Predicated region
  $region106: #{forward.1} parent=0 // pred_check
    _
  $region107: #{forward.1} parent=0 // pred_check_branch
    %2415 = sbr.rel (0) target = $region109
  $region108: #{forward.1} parent=0 // pred_region
    _
  $region109: #{forward.1} parent=0 // pred_fallthru
    _
  // Predicated region
  $region110: #{forward.1} parent=0 // pred_check
    _
  $region111: #{forward.1} parent=0 // pred_check_branch
    %2417 = sbr.rel (0) target = $region113
  $region112: #{forward.1} parent=0 // pred_region
    _
  $region113: #{forward.1} parent=0 // pred_fallthru
    _

</llo_original>
